<compile_context>
chip_gen: v6e
topology: v6e:2x2x1
jax: 0.10.0
libtpu: 0.0.40
codegen_flags: <defaults>
</compile_context>

<pallas_src>
import functools

import numpy as np
import jax
import jax.numpy as jnp
from jax.experimental import pallas as pl
from jax.experimental.pallas import tpu as pltpu


# ----------------------------------------------------------------------------
# Fused whole-network kernel.
# Activation layout inside the kernel: 2D (H, C*W)  [rows = spatial H, cols = (c, w)].
# ----------------------------------------------------------------------------
def _cnn_kernel(x_ref,
                s1_ref, g1_ref, bc1_ref,
                s2_ref, g2_ref, bc2_ref,
                s3_ref, g3_ref, bc3_ref,
                w1_ref, b1_ref, w2_ref, b2_ref,
                o_ref):
    def conv(x, s_ref, g_ref, b_ref):
        # x: (H, Cin*W) bf16 ; s_ref: (KH, OH, H) bf16 ; g_ref: (KH, Cin*W, Cout*OW) bf16
        # b_ref: (1, Cout*OW) f32  ->  returns (OH, Cout*OW) bf16
        kh_taps = s_ref.shape[0]
        oh = s_ref.shape[1]
        acc = jnp.zeros((oh, g_ref.shape[2]), jnp.float32)
        for kh in range(kh_taps):                       # static unroll (<= 8 taps)
            rows = jnp.dot(s_ref[kh], x,                # row selection h = s*oh + kh
                           preferred_element_type=jnp.float32).astype(jnp.bfloat16)
            acc = acc + jnp.dot(rows, g_ref[kh],        # kw taps + W-stride folded in G
                                preferred_element_type=jnp.float32)
        return jnp.maximum(acc + b_ref[...], 0.0).astype(jnp.bfloat16)

    x = x_ref[0]                                        # (H0, C0*W0) bf16
    h = conv(x, s1_ref, g1_ref, bc1_ref)                # (OH1, 32*OW1)
    h = conv(h, s2_ref, g2_ref, bc2_ref)                # (OH2, 64*OW2)
    h = conv(h, s3_ref, g3_ref, bc3_ref)                # (OH3, 64*OW3)

    # Head: hidden[j] = sum_oh h[oh, :] @ W1'[oh] ; flatten-order permutation is
    # already folded into W1' at prepare time (no transpose needed here).
    oh3 = w1_ref.shape[0]
    hid = jnp.zeros((1, w1_ref.shape[2]), jnp.float32)
    for oh in range(oh3):                               # static unroll (OH3 small)
        hid = hid + jnp.dot(h[oh:oh + 1, :], w1_ref[oh],
                            preferred_element_type=jnp.float32)
    hid = jnp.maximum(hid + b1_ref[...], 0.0).astype(jnp.bfloat16)
    logits = jnp.dot(hid, w2_ref[...],
                     preferred_element_type=jnp.float32) + b2_ref[...]
    o_ref[0] = logits.astype(o_ref.dtype)               # (1, A)


# ----------------------------------------------------------------------------
# One-time (host) parameter preparation: selection / Toeplitz matrices from
# PyTorch-layout weights.  Done ONCE, outside the jitted forward.
# ----------------------------------------------------------------------------
def _conv_selection_mats(w, b, H, W, stride):
    """w: (Cout, Cin, KH, KW) torch layout, b: (Cout,)."""
    Cout, Cin, KH, KW = w.shape
    OH = (H - KH) // stride + 1
    OW = (W - KW) // stride + 1
    assert OH > 0 and OW > 0, "input too small for conv stack"
    w_np = np.asarray(w, np.float32)

    # Sh_kh[oh, h] = 1 iff h == stride*oh + kh   (exact in bf16)
    sh = np.zeros((KH, OH, H), np.float32)
    for kh in range(KH):
        sh[kh, np.arange(OH), stride * np.arange(OH) + kh] = 1.0

    # G_kh[(cin, w), (cout, ow)] = w[cout, cin, kh, kw]  iff  w == stride*ow + kw
    g = np.zeros((KH, Cin, W, Cout, OW), np.float32)
    for kh in range(KH):
        for kw in range(KW):
            for ow in range(OW):
                g[kh, :, stride * ow + kw, :, ow] = w_np[:, :, kh, kw].T
    g = g.reshape(KH, Cin * W, Cout * OW)

    bias_row = np.repeat(np.asarray(b, np.float32), OW)[None, :]   # (1, Cout*OW)
    return (jnp.asarray(sh, jnp.bfloat16), jnp.asarray(g, jnp.bfloat16),
            jnp.asarray(bias_row, jnp.float32), OH, OW)


def prepare_params(params, input_shape):
    C0, H0, W0 = input_shape
    s1, g1, bc1, H1, W1 = _conv_selection_mats(params["c1_w"], params["c1_b"], H0, W0, 4)
    s2, g2, bc2, H2, W2 = _conv_selection_mats(params["c2_w"], params["c2_b"], H1, W1, 2)
    s3, g3, bc3, H3, W3 = _conv_selection_mats(params["c3_w"], params["c3_b"], H2, W2, 1)
    C3 = params["c3_w"].shape[0]

    # Head: PyTorch flatten order is f = c*OH3*OW3 + oh*OW3 + ow;  W1 is (512, F).
    # Fold the permutation into W1' so the kernel never transposes activations:
    #   W1'[oh, (c, ow), j] = W1[j, f]
    w1 = np.asarray(params["h1_w"], np.float32)
    hdim, F = w1.shape
    assert F == C3 * H3 * W3
    w1p = (w1.reshape(hdim, C3, H3, W3)
             .transpose(2, 1, 3, 0)               # (OH3, C3, OW3, 512)
             .reshape(H3, C3 * W3, hdim))
    w2 = np.asarray(params["h2_w"], np.float32)   # (A, 512) torch layout

    return {
        "s1": s1, "g1": g1, "bc1": bc1,
        "s2": s2, "g2": g2, "bc2": bc2,
        "s3": s3, "g3": g3, "bc3": bc3,
        "w1": jnp.asarray(w1p, jnp.bfloat16),
        "b1": jnp.asarray(np.asarray(params["h1_b"], np.float32)[None, :]),
        "w2": jnp.asarray(w2.T, jnp.bfloat16),    # (512, A)
        "b2": jnp.asarray(np.asarray(params["h2_b"], np.float32)[None, :]),
    }


# ----------------------------------------------------------------------------
# Forward pass: one transpose+reshape of the input, one fused pallas_call.
# ----------------------------------------------------------------------------
def cnn_forward(prep, x):
    """x: (N, C, H, W) float32 -> (N, n_actions) float32."""
    N, C, H, W = x.shape
    A = prep["b2"].shape[1]
    # Layout (N, H, C*W): rows = spatial H, cols = (channel, W).
    x3d = jnp.transpose(x, (0, 2, 1, 3)).reshape(N, H, C * W).astype(jnp.bfloat16)

    operands = [x3d,
                prep["s1"], prep["g1"], prep["bc1"],
                prep["s2"], prep["g2"], prep["bc2"],
                prep["s3"], prep["g3"], prep["bc3"],
                prep["w1"], prep["b1"], prep["w2"], prep["b2"]]

    in_specs = [pl.BlockSpec((1, H, C * W), lambda n: (n, 0, 0))]
    for t in operands[1:]:
        in_specs.append(pl.BlockSpec(t.shape, lambda n, _nd=t.ndim: (0,) * _nd))

    # Advisory cost estimate (2 dots per conv tap + head).
    flops = 0
    for s_key, g_key in (("s1", "g1"), ("s2", "g2"), ("s3", "g3")):
        kh_, oh_, h_ = prep[s_key].shape
        kdim, mdim = prep[g_key].shape[1], prep[g_key].shape[2]
        flops += kh_ * (2 * oh_ * h_ * kdim + 2 * oh_ * kdim * mdim)
    oh3, fdim, hdim = prep["w1"].shape
    flops += 2 * oh3 * fdim * hdim + 2 * hdim * A
    flops *= N
    bytes_accessed = sum(int(np.prod(t.shape)) * t.dtype.itemsize for t in operands)
    bytes_accessed += N * A * 4

    out = pl.pallas_call(
        _cnn_kernel,
        out_shape=jax.ShapeDtypeStruct((N, 1, A), jnp.float32),
        grid=(N,),
        in_specs=in_specs,
        out_specs=pl.BlockSpec((1, 1, A), lambda n: (n, 0, 0)),
        compiler_params=pltpu.CompilerParams(
            dimension_semantics=("parallel",),          # v7x: batch across both TCs
            vmem_limit_bytes=32 * 1024 * 1024),
        cost_estimate=pl.CostEstimate(flops=int(flops), transcendentals=0,
                                      bytes_accessed=int(bytes_accessed)),
    )(*operands)
    return out.reshape(N, A)


# ----------------------------------------------------------------------------
# Parameters (PyTorch layouts: conv (Cout,Cin,KH,KW), linear (out,in)) + reference.
# ----------------------------------------------------------------------------
def init_params(key, in_channels, n_actions, input_shape):
    C0, H0, W0 = input_shape
    assert C0 == in_channels
    o = lambda h, k, s: (h - k) // s + 1
    H1, W1 = o(H0, 8, 4), o(W0, 8, 4)
    H2, W2 = o(H1, 4, 2), o(W1, 4, 2)
    H3, W3 = o(H2, 3, 1), o(W2, 3, 1)
    conv_out_size = 64 * H3 * W3

    ks = jax.random.split(key, 10)

    def u(k, shape, fan_in):
        bound = 1.0 / np.sqrt(fan_in)
        return jax.random.uniform(k, shape, jnp.float32, -bound, bound)

    return {
        "c1_w": u(ks[0], (32, in_channels, 8, 8), in_channels * 64),
        "c1_b": u(ks[1], (32,), in_channels * 64),
        "c2_w": u(ks[2], (64, 32, 4, 4), 32 * 16),
        "c2_b": u(ks[3], (64,), 32 * 16),
        "c3_w": u(ks[4], (64, 64, 3, 3), 64 * 9),
        "c3_b": u(ks[5], (64,), 64 * 9),
        "h1_w": u(ks[6], (512, conv_out_size), conv_out_size),
        "h1_b": u(ks[7], (512,), conv_out_size),
        "h2_w": u(ks[8], (n_actions, 512), 512),
        "h2_b": u(ks[9], (n_actions,), 512),
    }


def cnn_reference(params, x):
    """Pure-JAX f32 reference with the exact PyTorch semantics."""
    def conv(h, w, b, stride):
        out = jax.lax.conv_general_dilated(
            h, w, window_strides=(stride, stride), padding="VALID",
            dimension_numbers=("NCHW", "OIHW", "NCHW"))
        return jax.nn.relu(out + b[None, :, None, None])

    h = conv(x, params["c1_w"], params["c1_b"], 4)
    h = conv(h, params["c2_w"], params["c2_b"], 2)
    h = conv(h, params["c3_w"], params["c3_b"], 1)
    flat = h.reshape(x.shape[0], -1)
    hid = jax.nn.relu(flat @ params["h1_w"].T + params["h1_b"])
    return hid @ params["h2_w"].T + params["h2_b"]


if __name__ == "__main__":
    key = jax.random.PRNGKey(0)
    kx, kp = jax.random.split(key)

    # Smallest spatial size valid for the 8/4 -> 4/2 -> 3/1 conv stack is 36.
    batch, channels, spatial, n_actions = 2, 4, 36, 6
    input_shape = (channels, spatial, spatial)
    x = jax.random.normal(kx, (batch,) + input_shape, jnp.float32)

    params = init_params(kp, channels, n_actions, input_shape)
    prep = prepare_params(params, input_shape)          # one-time weight prep

    out = jax.jit(cnn_forward)(prep, x)
    out = jax.block_until_ready(out)
    assert out.shape == (batch, n_actions), out.shape
    assert out.dtype == jnp.float32

    # Loose check vs f32 reference (kernel uses bf16 operands / f32 accumulation).
    ref = jax.block_until_ready(jax.jit(cnn_reference)(params, x))
    err = float(jnp.max(jnp.abs(out - ref)))
    scale = float(jnp.max(jnp.abs(ref))) + 1e-6
    assert err <= 0.1 * scale + 0.05, (err, scale)

    print("KERNEL_OK")
</pallas_src>

<mosaic_0001>
module attributes {stable_mosaic.version = 11 : i64} {
  func.func @_cnn_kernel(%arg0: i32, %arg1: memref<1x36x144xbf16, #tpu.memory_space<vmem>>, %arg2: memref<8x8x36xbf16, #tpu.memory_space<vmem>>, %arg3: memref<8x144x256xbf16, #tpu.memory_space<vmem>>, %arg4: memref<1x256xf32, #tpu.memory_space<vmem>>, %arg5: memref<4x3x8xbf16, #tpu.memory_space<vmem>>, %arg6: memref<4x256x192xbf16, #tpu.memory_space<vmem>>, %arg7: memref<1x192xf32, #tpu.memory_space<vmem>>, %arg8: memref<3x1x3xbf16, #tpu.memory_space<vmem>>, %arg9: memref<3x192x64xbf16, #tpu.memory_space<vmem>>, %arg10: memref<1x64xf32, #tpu.memory_space<vmem>>, %arg11: memref<1x64x512xbf16, #tpu.memory_space<vmem>>, %arg12: memref<1x512xf32, #tpu.memory_space<vmem>>, %arg13: memref<512x6xbf16, #tpu.memory_space<vmem>>, %arg14: memref<1x6xf32, #tpu.memory_space<vmem>>, %arg15: memref<1x1x6xf32, #tpu.memory_space<vmem>>) attributes {dimension_semantics = [#tpu.dimension_semantics<parallel>], iteration_bounds = array<i64: 2>, scalar_prefetch = 0 : i64, scratch_operands = 0 : i64, tpu.core_type = #tpu.core_type<tc>, window_params = [{transform_indices = @transform_0, window_bounds = array<i64: 1, 36, 144>}, {pipeline_mode = #tpu.pipeline_mode<synchronous>, transform_indices = @transform_1, window_bounds = array<i64: 8, 8, 36>}, {pipeline_mode = #tpu.pipeline_mode<synchronous>, transform_indices = @transform_2, window_bounds = array<i64: 8, 144, 256>}, {pipeline_mode = #tpu.pipeline_mode<synchronous>, transform_indices = @transform_3, window_bounds = array<i64: 1, 256>}, {pipeline_mode = #tpu.pipeline_mode<synchronous>, transform_indices = @transform_4, window_bounds = array<i64: 4, 3, 8>}, {pipeline_mode = #tpu.pipeline_mode<synchronous>, transform_indices = @transform_5, window_bounds = array<i64: 4, 256, 192>}, {pipeline_mode = #tpu.pipeline_mode<synchronous>, transform_indices = @transform_6, window_bounds = array<i64: 1, 192>}, {pipeline_mode = #tpu.pipeline_mode<synchronous>, transform_indices = @transform_7, window_bounds = array<i64: 3, 1, 3>}, {pipeline_mode = #tpu.pipeline_mode<synchronous>, transform_indices = @transform_8, window_bounds = array<i64: 3, 192, 64>}, {pipeline_mode = #tpu.pipeline_mode<synchronous>, transform_indices = @transform_9, window_bounds = array<i64: 1, 64>}, {pipeline_mode = #tpu.pipeline_mode<synchronous>, transform_indices = @transform_10, window_bounds = array<i64: 1, 64, 512>}, {pipeline_mode = #tpu.pipeline_mode<synchronous>, transform_indices = @transform_11, window_bounds = array<i64: 1, 512>}, {pipeline_mode = #tpu.pipeline_mode<synchronous>, transform_indices = @transform_12, window_bounds = array<i64: 512, 6>}, {pipeline_mode = #tpu.pipeline_mode<synchronous>, transform_indices = @transform_13, window_bounds = array<i64: 1, 6>}, {transform_indices = @transform_14, window_bounds = array<i64: 1, 1, 6>}]} {
    %c0 = arith.constant 0 : index
    %c0_0 = arith.constant 0 : index
    %c0_1 = arith.constant 0 : index
    %0 = vector.load %arg1[%c0, %c0_0, %c0_1] : memref<1x36x144xbf16, #tpu.memory_space<vmem>>, vector<1x36x144xbf16>
    %1 = vector.shape_cast %0 : vector<1x36x144xbf16> to vector<36x144xbf16>
    %cst = arith.constant 0.000000e+00 : f32
    %2 = vector.broadcast %cst : f32 to vector<8x256xf32>
    %c0_2 = arith.constant 0 : index
    %c0_3 = arith.constant 0 : index
    %c0_4 = arith.constant 0 : index
    %3 = vector.load %arg2[%c0_2, %c0_3, %c0_4] : memref<8x8x36xbf16, #tpu.memory_space<vmem>>, vector<1x8x36xbf16>
    %4 = vector.shape_cast %3 : vector<1x8x36xbf16> to vector<8x36xbf16>
    %cst_5 = arith.constant dense<0.000000e+00> : vector<8x144xf32>
    %5 = tpu.matmul %4, %1, %cst_5 {dimension_numbers = #tpu.dot_dimension_numbers<[1], [0], [0], [1], [0, 0, 1, 1], [], []>} : vector<8x36xbf16>, vector<36x144xbf16>, vector<8x144xf32> -> vector<8x144xf32>
    %6 = arith.truncf %5 : vector<8x144xf32> to vector<8x144xbf16>
    %c0_6 = arith.constant 0 : index
    %c0_7 = arith.constant 0 : index
    %c0_8 = arith.constant 0 : index
    %7 = vector.load %arg3[%c0_6, %c0_7, %c0_8] : memref<8x144x256xbf16, #tpu.memory_space<vmem>>, vector<1x144x256xbf16>
    %8 = vector.shape_cast %7 : vector<1x144x256xbf16> to vector<144x256xbf16>
    %cst_9 = arith.constant dense<0.000000e+00> : vector<8x256xf32>
    %9 = tpu.matmul %6, %8, %cst_9 {dimension_numbers = #tpu.dot_dimension_numbers<[1], [0], [0], [1], [0, 0, 1, 1], [], []>} : vector<8x144xbf16>, vector<144x256xbf16>, vector<8x256xf32> -> vector<8x256xf32>
    %10 = arith.addf %2, %9 : vector<8x256xf32>
    %c1 = arith.constant 1 : index
    %c0_10 = arith.constant 0 : index
    %c0_11 = arith.constant 0 : index
    %11 = vector.load %arg2[%c1, %c0_10, %c0_11] : memref<8x8x36xbf16, #tpu.memory_space<vmem>>, vector<1x8x36xbf16>
    %12 = vector.shape_cast %11 : vector<1x8x36xbf16> to vector<8x36xbf16>
    %cst_12 = arith.constant dense<0.000000e+00> : vector<8x144xf32>
    %13 = tpu.matmul %12, %1, %cst_12 {dimension_numbers = #tpu.dot_dimension_numbers<[1], [0], [0], [1], [0, 0, 1, 1], [], []>} : vector<8x36xbf16>, vector<36x144xbf16>, vector<8x144xf32> -> vector<8x144xf32>
    %14 = arith.truncf %13 : vector<8x144xf32> to vector<8x144xbf16>
    %c1_13 = arith.constant 1 : index
    %c0_14 = arith.constant 0 : index
    %c0_15 = arith.constant 0 : index
    %15 = vector.load %arg3[%c1_13, %c0_14, %c0_15] : memref<8x144x256xbf16, #tpu.memory_space<vmem>>, vector<1x144x256xbf16>
    %16 = vector.shape_cast %15 : vector<1x144x256xbf16> to vector<144x256xbf16>
    %cst_16 = arith.constant dense<0.000000e+00> : vector<8x256xf32>
    %17 = tpu.matmul %14, %16, %cst_16 {dimension_numbers = #tpu.dot_dimension_numbers<[1], [0], [0], [1], [0, 0, 1, 1], [], []>} : vector<8x144xbf16>, vector<144x256xbf16>, vector<8x256xf32> -> vector<8x256xf32>
    %18 = arith.addf %10, %17 : vector<8x256xf32>
    %c2 = arith.constant 2 : index
    %c0_17 = arith.constant 0 : index
    %c0_18 = arith.constant 0 : index
    %19 = vector.load %arg2[%c2, %c0_17, %c0_18] : memref<8x8x36xbf16, #tpu.memory_space<vmem>>, vector<1x8x36xbf16>
    %20 = vector.shape_cast %19 : vector<1x8x36xbf16> to vector<8x36xbf16>
    %cst_19 = arith.constant dense<0.000000e+00> : vector<8x144xf32>
    %21 = tpu.matmul %20, %1, %cst_19 {dimension_numbers = #tpu.dot_dimension_numbers<[1], [0], [0], [1], [0, 0, 1, 1], [], []>} : vector<8x36xbf16>, vector<36x144xbf16>, vector<8x144xf32> -> vector<8x144xf32>
    %22 = arith.truncf %21 : vector<8x144xf32> to vector<8x144xbf16>
    %c2_20 = arith.constant 2 : index
    %c0_21 = arith.constant 0 : index
    %c0_22 = arith.constant 0 : index
    %23 = vector.load %arg3[%c2_20, %c0_21, %c0_22] : memref<8x144x256xbf16, #tpu.memory_space<vmem>>, vector<1x144x256xbf16>
    %24 = vector.shape_cast %23 : vector<1x144x256xbf16> to vector<144x256xbf16>
    %cst_23 = arith.constant dense<0.000000e+00> : vector<8x256xf32>
    %25 = tpu.matmul %22, %24, %cst_23 {dimension_numbers = #tpu.dot_dimension_numbers<[1], [0], [0], [1], [0, 0, 1, 1], [], []>} : vector<8x144xbf16>, vector<144x256xbf16>, vector<8x256xf32> -> vector<8x256xf32>
    %26 = arith.addf %18, %25 : vector<8x256xf32>
    %c3 = arith.constant 3 : index
    %c0_24 = arith.constant 0 : index
    %c0_25 = arith.constant 0 : index
    %27 = vector.load %arg2[%c3, %c0_24, %c0_25] : memref<8x8x36xbf16, #tpu.memory_space<vmem>>, vector<1x8x36xbf16>
    %28 = vector.shape_cast %27 : vector<1x8x36xbf16> to vector<8x36xbf16>
    %cst_26 = arith.constant dense<0.000000e+00> : vector<8x144xf32>
    %29 = tpu.matmul %28, %1, %cst_26 {dimension_numbers = #tpu.dot_dimension_numbers<[1], [0], [0], [1], [0, 0, 1, 1], [], []>} : vector<8x36xbf16>, vector<36x144xbf16>, vector<8x144xf32> -> vector<8x144xf32>
    %30 = arith.truncf %29 : vector<8x144xf32> to vector<8x144xbf16>
    %c3_27 = arith.constant 3 : index
    %c0_28 = arith.constant 0 : index
    %c0_29 = arith.constant 0 : index
    %31 = vector.load %arg3[%c3_27, %c0_28, %c0_29] : memref<8x144x256xbf16, #tpu.memory_space<vmem>>, vector<1x144x256xbf16>
    %32 = vector.shape_cast %31 : vector<1x144x256xbf16> to vector<144x256xbf16>
    %cst_30 = arith.constant dense<0.000000e+00> : vector<8x256xf32>
    %33 = tpu.matmul %30, %32, %cst_30 {dimension_numbers = #tpu.dot_dimension_numbers<[1], [0], [0], [1], [0, 0, 1, 1], [], []>} : vector<8x144xbf16>, vector<144x256xbf16>, vector<8x256xf32> -> vector<8x256xf32>
    %34 = arith.addf %26, %33 : vector<8x256xf32>
    %c4 = arith.constant 4 : index
    %c0_31 = arith.constant 0 : index
    %c0_32 = arith.constant 0 : index
    %35 = vector.load %arg2[%c4, %c0_31, %c0_32] : memref<8x8x36xbf16, #tpu.memory_space<vmem>>, vector<1x8x36xbf16>
    %36 = vector.shape_cast %35 : vector<1x8x36xbf16> to vector<8x36xbf16>
    %cst_33 = arith.constant dense<0.000000e+00> : vector<8x144xf32>
    %37 = tpu.matmul %36, %1, %cst_33 {dimension_numbers = #tpu.dot_dimension_numbers<[1], [0], [0], [1], [0, 0, 1, 1], [], []>} : vector<8x36xbf16>, vector<36x144xbf16>, vector<8x144xf32> -> vector<8x144xf32>
    %38 = arith.truncf %37 : vector<8x144xf32> to vector<8x144xbf16>
    %c4_34 = arith.constant 4 : index
    %c0_35 = arith.constant 0 : index
    %c0_36 = arith.constant 0 : index
    %39 = vector.load %arg3[%c4_34, %c0_35, %c0_36] : memref<8x144x256xbf16, #tpu.memory_space<vmem>>, vector<1x144x256xbf16>
    %40 = vector.shape_cast %39 : vector<1x144x256xbf16> to vector<144x256xbf16>
    %cst_37 = arith.constant dense<0.000000e+00> : vector<8x256xf32>
    %41 = tpu.matmul %38, %40, %cst_37 {dimension_numbers = #tpu.dot_dimension_numbers<[1], [0], [0], [1], [0, 0, 1, 1], [], []>} : vector<8x144xbf16>, vector<144x256xbf16>, vector<8x256xf32> -> vector<8x256xf32>
    %42 = arith.addf %34, %41 : vector<8x256xf32>
    %c5 = arith.constant 5 : index
    %c0_38 = arith.constant 0 : index
    %c0_39 = arith.constant 0 : index
    %43 = vector.load %arg2[%c5, %c0_38, %c0_39] : memref<8x8x36xbf16, #tpu.memory_space<vmem>>, vector<1x8x36xbf16>
    %44 = vector.shape_cast %43 : vector<1x8x36xbf16> to vector<8x36xbf16>
    %cst_40 = arith.constant dense<0.000000e+00> : vector<8x144xf32>
    %45 = tpu.matmul %44, %1, %cst_40 {dimension_numbers = #tpu.dot_dimension_numbers<[1], [0], [0], [1], [0, 0, 1, 1], [], []>} : vector<8x36xbf16>, vector<36x144xbf16>, vector<8x144xf32> -> vector<8x144xf32>
    %46 = arith.truncf %45 : vector<8x144xf32> to vector<8x144xbf16>
    %c5_41 = arith.constant 5 : index
    %c0_42 = arith.constant 0 : index
    %c0_43 = arith.constant 0 : index
    %47 = vector.load %arg3[%c5_41, %c0_42, %c0_43] : memref<8x144x256xbf16, #tpu.memory_space<vmem>>, vector<1x144x256xbf16>
    %48 = vector.shape_cast %47 : vector<1x144x256xbf16> to vector<144x256xbf16>
    %cst_44 = arith.constant dense<0.000000e+00> : vector<8x256xf32>
    %49 = tpu.matmul %46, %48, %cst_44 {dimension_numbers = #tpu.dot_dimension_numbers<[1], [0], [0], [1], [0, 0, 1, 1], [], []>} : vector<8x144xbf16>, vector<144x256xbf16>, vector<8x256xf32> -> vector<8x256xf32>
    %50 = arith.addf %42, %49 : vector<8x256xf32>
    %c6 = arith.constant 6 : index
    %c0_45 = arith.constant 0 : index
    %c0_46 = arith.constant 0 : index
    %51 = vector.load %arg2[%c6, %c0_45, %c0_46] : memref<8x8x36xbf16, #tpu.memory_space<vmem>>, vector<1x8x36xbf16>
    %52 = vector.shape_cast %51 : vector<1x8x36xbf16> to vector<8x36xbf16>
    %cst_47 = arith.constant dense<0.000000e+00> : vector<8x144xf32>
    %53 = tpu.matmul %52, %1, %cst_47 {dimension_numbers = #tpu.dot_dimension_numbers<[1], [0], [0], [1], [0, 0, 1, 1], [], []>} : vector<8x36xbf16>, vector<36x144xbf16>, vector<8x144xf32> -> vector<8x144xf32>
    %54 = arith.truncf %53 : vector<8x144xf32> to vector<8x144xbf16>
    %c6_48 = arith.constant 6 : index
    %c0_49 = arith.constant 0 : index
    %c0_50 = arith.constant 0 : index
    %55 = vector.load %arg3[%c6_48, %c0_49, %c0_50] : memref<8x144x256xbf16, #tpu.memory_space<vmem>>, vector<1x144x256xbf16>
    %56 = vector.shape_cast %55 : vector<1x144x256xbf16> to vector<144x256xbf16>
    %cst_51 = arith.constant dense<0.000000e+00> : vector<8x256xf32>
    %57 = tpu.matmul %54, %56, %cst_51 {dimension_numbers = #tpu.dot_dimension_numbers<[1], [0], [0], [1], [0, 0, 1, 1], [], []>} : vector<8x144xbf16>, vector<144x256xbf16>, vector<8x256xf32> -> vector<8x256xf32>
    %58 = arith.addf %50, %57 : vector<8x256xf32>
    %c7 = arith.constant 7 : index
    %c0_52 = arith.constant 0 : index
    %c0_53 = arith.constant 0 : index
    %59 = vector.load %arg2[%c7, %c0_52, %c0_53] : memref<8x8x36xbf16, #tpu.memory_space<vmem>>, vector<1x8x36xbf16>
    %60 = vector.shape_cast %59 : vector<1x8x36xbf16> to vector<8x36xbf16>
    %cst_54 = arith.constant dense<0.000000e+00> : vector<8x144xf32>
    %61 = tpu.matmul %60, %1, %cst_54 {dimension_numbers = #tpu.dot_dimension_numbers<[1], [0], [0], [1], [0, 0, 1, 1], [], []>} : vector<8x36xbf16>, vector<36x144xbf16>, vector<8x144xf32> -> vector<8x144xf32>
    %62 = arith.truncf %61 : vector<8x144xf32> to vector<8x144xbf16>
    %c7_55 = arith.constant 7 : index
    %c0_56 = arith.constant 0 : index
    %c0_57 = arith.constant 0 : index
    %63 = vector.load %arg3[%c7_55, %c0_56, %c0_57] : memref<8x144x256xbf16, #tpu.memory_space<vmem>>, vector<1x144x256xbf16>
    %64 = vector.shape_cast %63 : vector<1x144x256xbf16> to vector<144x256xbf16>
    %cst_58 = arith.constant dense<0.000000e+00> : vector<8x256xf32>
    %65 = tpu.matmul %62, %64, %cst_58 {dimension_numbers = #tpu.dot_dimension_numbers<[1], [0], [0], [1], [0, 0, 1, 1], [], []>} : vector<8x144xbf16>, vector<144x256xbf16>, vector<8x256xf32> -> vector<8x256xf32>
    %66 = arith.addf %58, %65 : vector<8x256xf32>
    %c0_59 = arith.constant 0 : index
    %c0_60 = arith.constant 0 : index
    %67 = vector.load %arg4[%c0_59, %c0_60] : memref<1x256xf32, #tpu.memory_space<vmem>>, vector<1x256xf32>
    %68 = vector.broadcast %67 : vector<1x256xf32> to vector<8x256xf32>
    %69 = arith.addf %66, %68 : vector<8x256xf32>
    %cst_61 = arith.constant 0.000000e+00 : f32
    %70 = vector.broadcast %cst_61 : f32 to vector<8x256xf32>
    %71 = arith.maximumf %69, %70 : vector<8x256xf32>
    %72 = arith.truncf %71 : vector<8x256xf32> to vector<8x256xbf16>
    %cst_62 = arith.constant 0.000000e+00 : f32
    %73 = vector.broadcast %cst_62 : f32 to vector<3x192xf32>
    %c0_63 = arith.constant 0 : index
    %c0_64 = arith.constant 0 : index
    %c0_65 = arith.constant 0 : index
    %74 = vector.load %arg5[%c0_63, %c0_64, %c0_65] : memref<4x3x8xbf16, #tpu.memory_space<vmem>>, vector<1x3x8xbf16>
    %75 = vector.shape_cast %74 : vector<1x3x8xbf16> to vector<3x8xbf16>
    %cst_66 = arith.constant dense<0.000000e+00> : vector<3x256xf32>
    %76 = tpu.matmul %75, %72, %cst_66 {dimension_numbers = #tpu.dot_dimension_numbers<[1], [0], [0], [1], [0, 0, 1, 1], [], []>} : vector<3x8xbf16>, vector<8x256xbf16>, vector<3x256xf32> -> vector<3x256xf32>
    %77 = arith.truncf %76 : vector<3x256xf32> to vector<3x256xbf16>
    %c0_67 = arith.constant 0 : index
    %c0_68 = arith.constant 0 : index
    %c0_69 = arith.constant 0 : index
    %78 = vector.load %arg6[%c0_67, %c0_68, %c0_69] : memref<4x256x192xbf16, #tpu.memory_space<vmem>>, vector<1x256x192xbf16>
    %79 = vector.shape_cast %78 : vector<1x256x192xbf16> to vector<256x192xbf16>
    %cst_70 = arith.constant dense<0.000000e+00> : vector<3x192xf32>
    %80 = tpu.matmul %77, %79, %cst_70 {dimension_numbers = #tpu.dot_dimension_numbers<[1], [0], [0], [1], [0, 0, 1, 1], [], []>} : vector<3x256xbf16>, vector<256x192xbf16>, vector<3x192xf32> -> vector<3x192xf32>
    %81 = arith.addf %73, %80 : vector<3x192xf32>
    %c1_71 = arith.constant 1 : index
    %c0_72 = arith.constant 0 : index
    %c0_73 = arith.constant 0 : index
    %82 = vector.load %arg5[%c1_71, %c0_72, %c0_73] : memref<4x3x8xbf16, #tpu.memory_space<vmem>>, vector<1x3x8xbf16>
    %83 = vector.shape_cast %82 : vector<1x3x8xbf16> to vector<3x8xbf16>
    %cst_74 = arith.constant dense<0.000000e+00> : vector<3x256xf32>
    %84 = tpu.matmul %83, %72, %cst_74 {dimension_numbers = #tpu.dot_dimension_numbers<[1], [0], [0], [1], [0, 0, 1, 1], [], []>} : vector<3x8xbf16>, vector<8x256xbf16>, vector<3x256xf32> -> vector<3x256xf32>
    %85 = arith.truncf %84 : vector<3x256xf32> to vector<3x256xbf16>
    %c1_75 = arith.constant 1 : index
    %c0_76 = arith.constant 0 : index
    %c0_77 = arith.constant 0 : index
    %86 = vector.load %arg6[%c1_75, %c0_76, %c0_77] : memref<4x256x192xbf16, #tpu.memory_space<vmem>>, vector<1x256x192xbf16>
    %87 = vector.shape_cast %86 : vector<1x256x192xbf16> to vector<256x192xbf16>
    %cst_78 = arith.constant dense<0.000000e+00> : vector<3x192xf32>
    %88 = tpu.matmul %85, %87, %cst_78 {dimension_numbers = #tpu.dot_dimension_numbers<[1], [0], [0], [1], [0, 0, 1, 1], [], []>} : vector<3x256xbf16>, vector<256x192xbf16>, vector<3x192xf32> -> vector<3x192xf32>
    %89 = arith.addf %81, %88 : vector<3x192xf32>
    %c2_79 = arith.constant 2 : index
    %c0_80 = arith.constant 0 : index
    %c0_81 = arith.constant 0 : index
    %90 = vector.load %arg5[%c2_79, %c0_80, %c0_81] : memref<4x3x8xbf16, #tpu.memory_space<vmem>>, vector<1x3x8xbf16>
    %91 = vector.shape_cast %90 : vector<1x3x8xbf16> to vector<3x8xbf16>
    %cst_82 = arith.constant dense<0.000000e+00> : vector<3x256xf32>
    %92 = tpu.matmul %91, %72, %cst_82 {dimension_numbers = #tpu.dot_dimension_numbers<[1], [0], [0], [1], [0, 0, 1, 1], [], []>} : vector<3x8xbf16>, vector<8x256xbf16>, vector<3x256xf32> -> vector<3x256xf32>
    %93 = arith.truncf %92 : vector<3x256xf32> to vector<3x256xbf16>
    %c2_83 = arith.constant 2 : index
    %c0_84 = arith.constant 0 : index
    %c0_85 = arith.constant 0 : index
    %94 = vector.load %arg6[%c2_83, %c0_84, %c0_85] : memref<4x256x192xbf16, #tpu.memory_space<vmem>>, vector<1x256x192xbf16>
    %95 = vector.shape_cast %94 : vector<1x256x192xbf16> to vector<256x192xbf16>
    %cst_86 = arith.constant dense<0.000000e+00> : vector<3x192xf32>
    %96 = tpu.matmul %93, %95, %cst_86 {dimension_numbers = #tpu.dot_dimension_numbers<[1], [0], [0], [1], [0, 0, 1, 1], [], []>} : vector<3x256xbf16>, vector<256x192xbf16>, vector<3x192xf32> -> vector<3x192xf32>
    %97 = arith.addf %89, %96 : vector<3x192xf32>
    %c3_87 = arith.constant 3 : index
    %c0_88 = arith.constant 0 : index
    %c0_89 = arith.constant 0 : index
    %98 = vector.load %arg5[%c3_87, %c0_88, %c0_89] : memref<4x3x8xbf16, #tpu.memory_space<vmem>>, vector<1x3x8xbf16>
    %99 = vector.shape_cast %98 : vector<1x3x8xbf16> to vector<3x8xbf16>
    %cst_90 = arith.constant dense<0.000000e+00> : vector<3x256xf32>
    %100 = tpu.matmul %99, %72, %cst_90 {dimension_numbers = #tpu.dot_dimension_numbers<[1], [0], [0], [1], [0, 0, 1, 1], [], []>} : vector<3x8xbf16>, vector<8x256xbf16>, vector<3x256xf32> -> vector<3x256xf32>
    %101 = arith.truncf %100 : vector<3x256xf32> to vector<3x256xbf16>
    %c3_91 = arith.constant 3 : index
    %c0_92 = arith.constant 0 : index
    %c0_93 = arith.constant 0 : index
    %102 = vector.load %arg6[%c3_91, %c0_92, %c0_93] : memref<4x256x192xbf16, #tpu.memory_space<vmem>>, vector<1x256x192xbf16>
    %103 = vector.shape_cast %102 : vector<1x256x192xbf16> to vector<256x192xbf16>
    %cst_94 = arith.constant dense<0.000000e+00> : vector<3x192xf32>
    %104 = tpu.matmul %101, %103, %cst_94 {dimension_numbers = #tpu.dot_dimension_numbers<[1], [0], [0], [1], [0, 0, 1, 1], [], []>} : vector<3x256xbf16>, vector<256x192xbf16>, vector<3x192xf32> -> vector<3x192xf32>
    %105 = arith.addf %97, %104 : vector<3x192xf32>
    %c0_95 = arith.constant 0 : index
    %c0_96 = arith.constant 0 : index
    %106 = vector.load %arg7[%c0_95, %c0_96] : memref<1x192xf32, #tpu.memory_space<vmem>>, vector<1x192xf32>
    %107 = vector.broadcast %106 : vector<1x192xf32> to vector<3x192xf32>
    %108 = arith.addf %105, %107 : vector<3x192xf32>
    %cst_97 = arith.constant 0.000000e+00 : f32
    %109 = vector.broadcast %cst_97 : f32 to vector<3x192xf32>
    %110 = arith.maximumf %108, %109 : vector<3x192xf32>
    %111 = arith.truncf %110 : vector<3x192xf32> to vector<3x192xbf16>
    %cst_98 = arith.constant 0.000000e+00 : f32
    %112 = vector.broadcast %cst_98 : f32 to vector<1x64xf32>
    %c0_99 = arith.constant 0 : index
    %c0_100 = arith.constant 0 : index
    %c0_101 = arith.constant 0 : index
    %113 = vector.load %arg8[%c0_99, %c0_100, %c0_101] : memref<3x1x3xbf16, #tpu.memory_space<vmem>>, vector<1x1x3xbf16>
    %114 = vector.shape_cast %113 : vector<1x1x3xbf16> to vector<1x3xbf16>
    %cst_102 = arith.constant dense<0.000000e+00> : vector<1x192xf32>
    %115 = tpu.matmul %114, %111, %cst_102 {dimension_numbers = #tpu.dot_dimension_numbers<[1], [0], [0], [1], [0, 0, 1, 1], [], []>} : vector<1x3xbf16>, vector<3x192xbf16>, vector<1x192xf32> -> vector<1x192xf32>
    %116 = arith.truncf %115 : vector<1x192xf32> to vector<1x192xbf16>
    %c0_103 = arith.constant 0 : index
    %c0_104 = arith.constant 0 : index
    %c0_105 = arith.constant 0 : index
    %117 = vector.load %arg9[%c0_103, %c0_104, %c0_105] : memref<3x192x64xbf16, #tpu.memory_space<vmem>>, vector<1x192x64xbf16>
    %118 = vector.shape_cast %117 : vector<1x192x64xbf16> to vector<192x64xbf16>
    %cst_106 = arith.constant dense<0.000000e+00> : vector<1x64xf32>
    %119 = tpu.matmul %116, %118, %cst_106 {dimension_numbers = #tpu.dot_dimension_numbers<[1], [0], [0], [1], [0, 0, 1, 1], [], []>} : vector<1x192xbf16>, vector<192x64xbf16>, vector<1x64xf32> -> vector<1x64xf32>
    %120 = arith.addf %112, %119 : vector<1x64xf32>
    %c1_107 = arith.constant 1 : index
    %c0_108 = arith.constant 0 : index
    %c0_109 = arith.constant 0 : index
    %121 = vector.load %arg8[%c1_107, %c0_108, %c0_109] : memref<3x1x3xbf16, #tpu.memory_space<vmem>>, vector<1x1x3xbf16>
    %122 = vector.shape_cast %121 : vector<1x1x3xbf16> to vector<1x3xbf16>
    %cst_110 = arith.constant dense<0.000000e+00> : vector<1x192xf32>
    %123 = tpu.matmul %122, %111, %cst_110 {dimension_numbers = #tpu.dot_dimension_numbers<[1], [0], [0], [1], [0, 0, 1, 1], [], []>} : vector<1x3xbf16>, vector<3x192xbf16>, vector<1x192xf32> -> vector<1x192xf32>
    %124 = arith.truncf %123 : vector<1x192xf32> to vector<1x192xbf16>
    %c1_111 = arith.constant 1 : index
    %c0_112 = arith.constant 0 : index
    %c0_113 = arith.constant 0 : index
    %125 = vector.load %arg9[%c1_111, %c0_112, %c0_113] : memref<3x192x64xbf16, #tpu.memory_space<vmem>>, vector<1x192x64xbf16>
    %126 = vector.shape_cast %125 : vector<1x192x64xbf16> to vector<192x64xbf16>
    %cst_114 = arith.constant dense<0.000000e+00> : vector<1x64xf32>
    %127 = tpu.matmul %124, %126, %cst_114 {dimension_numbers = #tpu.dot_dimension_numbers<[1], [0], [0], [1], [0, 0, 1, 1], [], []>} : vector<1x192xbf16>, vector<192x64xbf16>, vector<1x64xf32> -> vector<1x64xf32>
    %128 = arith.addf %120, %127 : vector<1x64xf32>
    %c2_115 = arith.constant 2 : index
    %c0_116 = arith.constant 0 : index
    %c0_117 = arith.constant 0 : index
    %129 = vector.load %arg8[%c2_115, %c0_116, %c0_117] : memref<3x1x3xbf16, #tpu.memory_space<vmem>>, vector<1x1x3xbf16>
    %130 = vector.shape_cast %129 : vector<1x1x3xbf16> to vector<1x3xbf16>
    %cst_118 = arith.constant dense<0.000000e+00> : vector<1x192xf32>
    %131 = tpu.matmul %130, %111, %cst_118 {dimension_numbers = #tpu.dot_dimension_numbers<[1], [0], [0], [1], [0, 0, 1, 1], [], []>} : vector<1x3xbf16>, vector<3x192xbf16>, vector<1x192xf32> -> vector<1x192xf32>
    %132 = arith.truncf %131 : vector<1x192xf32> to vector<1x192xbf16>
    %c2_119 = arith.constant 2 : index
    %c0_120 = arith.constant 0 : index
    %c0_121 = arith.constant 0 : index
    %133 = vector.load %arg9[%c2_119, %c0_120, %c0_121] : memref<3x192x64xbf16, #tpu.memory_space<vmem>>, vector<1x192x64xbf16>
    %134 = vector.shape_cast %133 : vector<1x192x64xbf16> to vector<192x64xbf16>
    %cst_122 = arith.constant dense<0.000000e+00> : vector<1x64xf32>
    %135 = tpu.matmul %132, %134, %cst_122 {dimension_numbers = #tpu.dot_dimension_numbers<[1], [0], [0], [1], [0, 0, 1, 1], [], []>} : vector<1x192xbf16>, vector<192x64xbf16>, vector<1x64xf32> -> vector<1x64xf32>
    %136 = arith.addf %128, %135 : vector<1x64xf32>
    %c0_123 = arith.constant 0 : index
    %c0_124 = arith.constant 0 : index
    %137 = vector.load %arg10[%c0_123, %c0_124] : memref<1x64xf32, #tpu.memory_space<vmem>>, vector<1x64xf32>
    %138 = arith.addf %136, %137 : vector<1x64xf32>
    %cst_125 = arith.constant 0.000000e+00 : f32
    %139 = vector.broadcast %cst_125 : f32 to vector<1x64xf32>
    %140 = arith.maximumf %138, %139 : vector<1x64xf32>
    %141 = arith.truncf %140 : vector<1x64xf32> to vector<1x64xbf16>
    %cst_126 = arith.constant 0.000000e+00 : f32
    %142 = vector.broadcast %cst_126 : f32 to vector<1x512xf32>
    %c0_127 = arith.constant 0 : index
    %c0_128 = arith.constant 0 : index
    %c0_129 = arith.constant 0 : index
    %143 = vector.load %arg11[%c0_127, %c0_128, %c0_129] : memref<1x64x512xbf16, #tpu.memory_space<vmem>>, vector<1x64x512xbf16>
    %144 = vector.shape_cast %143 : vector<1x64x512xbf16> to vector<64x512xbf16>
    %cst_130 = arith.constant dense<0.000000e+00> : vector<1x512xf32>
    %145 = tpu.matmul %141, %144, %cst_130 {dimension_numbers = #tpu.dot_dimension_numbers<[1], [0], [0], [1], [0, 0, 1, 1], [], []>} : vector<1x64xbf16>, vector<64x512xbf16>, vector<1x512xf32> -> vector<1x512xf32>
    %146 = arith.addf %142, %145 : vector<1x512xf32>
    %c0_131 = arith.constant 0 : index
    %c0_132 = arith.constant 0 : index
    %147 = vector.load %arg12[%c0_131, %c0_132] : memref<1x512xf32, #tpu.memory_space<vmem>>, vector<1x512xf32>
    %148 = arith.addf %146, %147 : vector<1x512xf32>
    %cst_133 = arith.constant 0.000000e+00 : f32
    %149 = vector.broadcast %cst_133 : f32 to vector<1x512xf32>
    %150 = arith.maximumf %148, %149 : vector<1x512xf32>
    %151 = arith.truncf %150 : vector<1x512xf32> to vector<1x512xbf16>
    %c0_134 = arith.constant 0 : index
    %c0_135 = arith.constant 0 : index
    %152 = vector.load %arg13[%c0_134, %c0_135] : memref<512x6xbf16, #tpu.memory_space<vmem>>, vector<512x6xbf16>
    %cst_136 = arith.constant dense<0.000000e+00> : vector<1x6xf32>
    %153 = tpu.matmul %151, %152, %cst_136 {dimension_numbers = #tpu.dot_dimension_numbers<[1], [0], [0], [1], [0, 0, 1, 1], [], []>} : vector<1x512xbf16>, vector<512x6xbf16>, vector<1x6xf32> -> vector<1x6xf32>
    %c0_137 = arith.constant 0 : index
    %c0_138 = arith.constant 0 : index
    %154 = vector.load %arg14[%c0_137, %c0_138] : memref<1x6xf32, #tpu.memory_space<vmem>>, vector<1x6xf32>
    %155 = arith.addf %153, %154 : vector<1x6xf32>
    %c0_139 = arith.constant 0 : index
    %c0_140 = arith.constant 0 : index
    %c0_141 = arith.constant 0 : index
    %156 = vector.load %arg15[%c0_139, %c0_140, %c0_141] : memref<1x1x6xf32, #tpu.memory_space<vmem>>, vector<1x1x6xf32>
    %157 = vector.shape_cast %156 : vector<1x1x6xf32> to vector<1x6xf32>
    %158 = vector.shape_cast %155 : vector<1x6xf32> to vector<1x1x6xf32>
    tpu.vector_store %arg15[%c0_139, %c0_140, %c0_141], %158 {strides = array<i32>} : memref<1x1x6xf32, #tpu.memory_space<vmem>>, vector<1x1x6xf32>,
    return
  }
  func.func @transform_0(%arg0: i32) -> (i32, i32, i32) {
    %c0_i32 = arith.constant 0 : i32
    %c0_i32_0 = arith.constant 0 : i32
    %c0_i32_1 = arith.constant 0 : i32
    return %arg0, %c0_i32, %c0_i32_0 : i32, i32, i32
  }
  func.func @transform_1(%arg0: i32) -> (i32, i32, i32) {
    %c0_i32 = arith.constant 0 : i32
    %c0_i32_0 = arith.constant 0 : i32
    %c0_i32_1 = arith.constant 0 : i32
    %c0_i32_2 = arith.constant 0 : i32
    return %c0_i32, %c0_i32_0, %c0_i32_1 : i32, i32, i32
  }
  func.func @transform_2(%arg0: i32) -> (i32, i32, i32) {
    %c0_i32 = arith.constant 0 : i32
    %c0_i32_0 = arith.constant 0 : i32
    %c0_i32_1 = arith.constant 0 : i32
    %c0_i32_2 = arith.constant 0 : i32
    return %c0_i32, %c0_i32_0, %c0_i32_1 : i32, i32, i32
  }
  func.func @transform_3(%arg0: i32) -> (i32, i32) {
    %c0_i32 = arith.constant 0 : i32
    %c0_i32_0 = arith.constant 0 : i32
    %c0_i32_1 = arith.constant 0 : i32
    return %c0_i32, %c0_i32_0 : i32, i32
  }
  func.func @transform_4(%arg0: i32) -> (i32, i32, i32) {
    %c0_i32 = arith.constant 0 : i32
    %c0_i32_0 = arith.constant 0 : i32
    %c0_i32_1 = arith.constant 0 : i32
    %c0_i32_2 = arith.constant 0 : i32
    return %c0_i32, %c0_i32_0, %c0_i32_1 : i32, i32, i32
  }
  func.func @transform_5(%arg0: i32) -> (i32, i32, i32) {
    %c0_i32 = arith.constant 0 : i32
    %c0_i32_0 = arith.constant 0 : i32
    %c0_i32_1 = arith.constant 0 : i32
    %c0_i32_2 = arith.constant 0 : i32
    return %c0_i32, %c0_i32_0, %c0_i32_1 : i32, i32, i32
  }
  func.func @transform_6(%arg0: i32) -> (i32, i32) {
    %c0_i32 = arith.constant 0 : i32
    %c0_i32_0 = arith.constant 0 : i32
    %c0_i32_1 = arith.constant 0 : i32
    return %c0_i32, %c0_i32_0 : i32, i32
  }
  func.func @transform_7(%arg0: i32) -> (i32, i32, i32) {
    %c0_i32 = arith.constant 0 : i32
    %c0_i32_0 = arith.constant 0 : i32
    %c0_i32_1 = arith.constant 0 : i32
    %c0_i32_2 = arith.constant 0 : i32
    return %c0_i32, %c0_i32_0, %c0_i32_1 : i32, i32, i32
  }
  func.func @transform_8(%arg0: i32) -> (i32, i32, i32) {
    %c0_i32 = arith.constant 0 : i32
    %c0_i32_0 = arith.constant 0 : i32
    %c0_i32_1 = arith.constant 0 : i32
    %c0_i32_2 = arith.constant 0 : i32
    return %c0_i32, %c0_i32_0, %c0_i32_1 : i32, i32, i32
  }
  func.func @transform_9(%arg0: i32) -> (i32, i32) {
    %c0_i32 = arith.constant 0 : i32
    %c0_i32_0 = arith.constant 0 : i32
    %c0_i32_1 = arith.constant 0 : i32
    return %c0_i32, %c0_i32_0 : i32, i32
  }
  func.func @transform_10(%arg0: i32) -> (i32, i32, i32) {
    %c0_i32 = arith.constant 0 : i32
    %c0_i32_0 = arith.constant 0 : i32
    %c0_i32_1 = arith.constant 0 : i32
    %c0_i32_2 = arith.constant 0 : i32
    return %c0_i32, %c0_i32_0, %c0_i32_1 : i32, i32, i32
  }
  func.func @transform_11(%arg0: i32) -> (i32, i32) {
    %c0_i32 = arith.constant 0 : i32
    %c0_i32_0 = arith.constant 0 : i32
    %c0_i32_1 = arith.constant 0 : i32
    return %c0_i32, %c0_i32_0 : i32, i32
  }
  func.func @transform_12(%arg0: i32) -> (i32, i32) {
    %c0_i32 = arith.constant 0 : i32
    %c0_i32_0 = arith.constant 0 : i32
    %c0_i32_1 = arith.constant 0 : i32
    return %c0_i32, %c0_i32_0 : i32, i32
  }
  func.func @transform_13(%arg0: i32) -> (i32, i32) {
    %c0_i32 = arith.constant 0 : i32
    %c0_i32_0 = arith.constant 0 : i32
    %c0_i32_1 = arith.constant 0 : i32
    return %c0_i32, %c0_i32_0 : i32, i32
  }
  func.func @transform_14(%arg0: i32) -> (i32, i32, i32) {
    %c0_i32 = arith.constant 0 : i32
    %c0_i32_0 = arith.constant 0 : i32
    %c0_i32_1 = arith.constant 0 : i32
    return %arg0, %c0_i32, %c0_i32_0 : i32, i32, i32
  }
}

</mosaic_0001>

<llo_original>
// kernel: cnn_forward.1
$region0: #{cnn_forward.1}
  #allocation0 [shape = 'u32[]', space=smem, size = 0x4, offset = 0x4, fixed_abs, tag = 'smem constant byte address 0x4 - core index']
  #allocation1 [shape = 'u32[144,128]{1,0:T(1,128)}', space=vmem, size = 0x12000, scoped, tag = 'internal scratch']
  %s0 = inlined_call_operand.vmem [shape: bf16[2,36,144], index: 0, kind: input, shape index: {}]
  %s1 = inlined_call_operand.vmem [shape: bf16[8,8,36], index: 1, kind: input, shape index: {}]
  %s2 = inlined_call_operand.vmem [shape: bf16[8,144,256], index: 2, kind: input, shape index: {}]
  %s3 = inlined_call_operand.vmem [shape: f32[1,256], index: 3, kind: input, shape index: {}]
  %s4 = inlined_call_operand.vmem [shape: bf16[4,3,8], index: 4, kind: input, shape index: {}]
  %s5 = inlined_call_operand.vmem [shape: bf16[4,256,192], index: 5, kind: input, shape index: {}]
  %s6 = inlined_call_operand.vmem [shape: f32[1,192], index: 6, kind: input, shape index: {}]
  %s7 = inlined_call_operand.vmem [shape: bf16[3,1,3], index: 7, kind: input, shape index: {}]
  %s8 = inlined_call_operand.vmem [shape: bf16[3,192,64], index: 8, kind: input, shape index: {}]
  %s9 = inlined_call_operand.vmem [shape: f32[1,64], index: 9, kind: input, shape index: {}]
  %s10 = inlined_call_operand.vmem [shape: bf16[1,64,512], index: 10, kind: input, shape index: {}]
  %s11 = inlined_call_operand.vmem [shape: f32[1,512], index: 11, kind: input, shape index: {}]
  %s12 = inlined_call_operand.vmem [shape: bf16[512,6], index: 12, kind: input, shape index: {}]
  %s13 = inlined_call_operand.vmem [shape: f32[1,6], index: 13, kind: input, shape index: {}]
  %s14 = inlined_call_operand.hbm [shape: f32[2,1,6], index: 14, kind: output, shape index: {}]
  %s15 = sld [smem:[#allocation0]]
  $region89: #{cnn_forward.1} parent=0
    _
  %s17 = ssub.s32 1, %s15
  %s18 = scalar_select 0, %s17, %s15
  $region1: #{cnn_forward.1} parent=0
    #allocation2 [shape = 'u8[1024]{0}', space=vmem, size = 0x400, scoped, tag = 'output window, operand 0']
    #allocation3 [shape = 's32[2]{0}', space=sflag, size = 0x8, scoped, tag = 'scoped memory for cnn_forward.1']
    %19 = vsyncpa [#allocation3], 0
    %s20 = scalar_lea.sflag [#allocation3], 1
    %21 = vsyncpa %s20, 0
    loop: start=0, step=1, limit=4
    $region2: #{cnn_forward.1} parent=1 // loop_pre_header
      _
    $region3: #{cnn_forward.1} parent=1 // loop_header
      %s23 = sphi 0, %s27
      %p24 = scmp.ge.s32.totalorder %s23, 4
      %s33 = sphi 0, %s35
      %s36 = sphi 0, %s33
      %s37 = sphi 0, %s36
      %s53 = sphi 0, %s37
      %s57 = sphi 0, %s57
      %s59 = sphi 0, %s57
      %s60 = sphi 0, %s59
      %s74 = sphi 0, %s60
      %s78 = sphi 0, %s78
      %s80 = sphi 0, %s78
      %s81 = sphi 0, %s80
      %s95 = sphi 0, %s81
      %s99 = sphi 0, %s99
      %s101 = sphi 0, %s99
      %s102 = sphi 0, %s101
      %s116 = sphi 0, %s102
      %s120 = sphi 0, %s120
      %s122 = sphi 0, %s120
      %s123 = sphi 0, %s122
      %s137 = sphi 0, %s123
      %s141 = sphi 0, %s141
      %s143 = sphi 0, %s141
      %s144 = sphi 0, %s143
      %s158 = sphi 0, %s144
      %s162 = sphi 0, %s162
      %s164 = sphi 0, %s162
      %s165 = sphi 0, %s164
      %s179 = sphi 0, %s165
      %s183 = sphi 0, %s183
      %s185 = sphi 0, %s183
      %s186 = sphi 0, %s185
      %s200 = sphi 0, %s186
      %s204 = sphi 0, %s204
      %s206 = sphi 0, %s204
      %s207 = sphi 0, %s206
      %s221 = sphi 0, %s207
      %s225 = sphi 0, %s225
      %s227 = sphi 0, %s225
      %s228 = sphi 0, %s227
      %s242 = sphi 0, %s228
      %s246 = sphi 0, %s246
      %s248 = sphi 0, %s246
      %s249 = sphi 0, %s248
      %s263 = sphi 0, %s249
      %s267 = sphi 0, %s267
      %s269 = sphi 0, %s267
      %s270 = sphi 0, %s269
      %s284 = sphi 0, %s270
      %s288 = sphi 0, %s288
      %s290 = sphi 0, %s288
      %s291 = sphi 0, %s290
      %s305 = sphi 0, %s291
      %s309 = sphi 0, %s309
      %s311 = sphi 0, %s309
      %s312 = sphi 0, %s311
      %s326 = sphi 0, %s312
      %s332 = sphi 0, %s334
      %s335 = sphi 0, %s332
      %s336 = sphi 0, %s335
      %s352 = sphi 0, %s336
    $region4: #{cnn_forward.1} parent=1 // loop_header_branch
      %26 = sbr.rel (%p24) target = $region8
    $region5: #{cnn_forward.1} parent=1 // loop_body
      %s28 = ssub.s32 %s23, 1
      %s29 = ssub.s32 %s23, 2
      %s30 = sadd.s32 %s23, 1
      %s31 = ssub.s32 %s23, %s30
      %p32 = scmp.eq.s32.totalorder %s31, 0
      %s34 = sadd.s32 %s33, 1
      %s35 = scalar_select %p32, %s33, %s34
      %p38 = pneg %p32
      %p39 = scmp.eq.s32.totalorder %s23, 1
      %p40 = por %p38, %p39
      %p41 = scmp.ne.s32.totalorder %s33, %s36
      %p42 = scmp.eq.s32.totalorder %s23, 0
      %p43 = por %p41, %p42
      %p44 = scmp.ne.s32.totalorder %s33, %s36
      %p45 = scmp.eq.s32.totalorder %s28, 1
      %p46 = por %p44, %p45
      %p47 = scmp.ne.s32.totalorder %s36, %s37
      %p48 = scmp.eq.s32.totalorder %s28, 0
      %p49 = por %p47, %p48
      %p50 = scmp.ne.s32.totalorder %s36, %s37
      %p51 = scmp.eq.s32.totalorder %s29, 1
      %p52 = por %p50, %p51
      %p54 = scmp.ne.s32.totalorder %s37, %s53
      %p55 = scmp.eq.s32.totalorder %s29, 0
      %p56 = por %p54, %p55
      %s58 = sadd.s32 %s57, 1
      %p61 = scmp.eq.s32.totalorder %s23, 1
      %p62 = scmp.ne.s32.totalorder %s57, %s59
      %p63 = scmp.eq.s32.totalorder %s23, 0
      %p64 = por %p62, %p63
      %p65 = scmp.ne.s32.totalorder %s57, %s59
      %p66 = scmp.eq.s32.totalorder %s28, 1
      %p67 = por %p65, %p66
      %p68 = scmp.ne.s32.totalorder %s59, %s60
      %p69 = scmp.eq.s32.totalorder %s28, 0
      %p70 = por %p68, %p69
      %p71 = scmp.ne.s32.totalorder %s59, %s60
      %p72 = scmp.eq.s32.totalorder %s29, 1
      %p73 = por %p71, %p72
      %p75 = scmp.ne.s32.totalorder %s60, %s74
      %p76 = scmp.eq.s32.totalorder %s29, 0
      %p77 = por %p75, %p76
      %s79 = sadd.s32 %s78, 1
      %p82 = scmp.eq.s32.totalorder %s23, 1
      %p83 = scmp.ne.s32.totalorder %s78, %s80
      %p84 = scmp.eq.s32.totalorder %s23, 0
      %p85 = por %p83, %p84
      %p86 = scmp.ne.s32.totalorder %s78, %s80
      %p87 = scmp.eq.s32.totalorder %s28, 1
      %p88 = por %p86, %p87
      %p89 = scmp.ne.s32.totalorder %s80, %s81
      %p90 = scmp.eq.s32.totalorder %s28, 0
      %p91 = por %p89, %p90
      %p92 = scmp.ne.s32.totalorder %s80, %s81
      %p93 = scmp.eq.s32.totalorder %s29, 1
      %p94 = por %p92, %p93
      %p96 = scmp.ne.s32.totalorder %s81, %s95
      %p97 = scmp.eq.s32.totalorder %s29, 0
      %p98 = por %p96, %p97
      %s100 = sadd.s32 %s99, 1
      %p103 = scmp.eq.s32.totalorder %s23, 1
      %p104 = scmp.ne.s32.totalorder %s99, %s101
      %p105 = scmp.eq.s32.totalorder %s23, 0
      %p106 = por %p104, %p105
      %p107 = scmp.ne.s32.totalorder %s99, %s101
      %p108 = scmp.eq.s32.totalorder %s28, 1
      %p109 = por %p107, %p108
      %p110 = scmp.ne.s32.totalorder %s101, %s102
      %p111 = scmp.eq.s32.totalorder %s28, 0
      %p112 = por %p110, %p111
      %p113 = scmp.ne.s32.totalorder %s101, %s102
      %p114 = scmp.eq.s32.totalorder %s29, 1
      %p115 = por %p113, %p114
      %p117 = scmp.ne.s32.totalorder %s102, %s116
      %p118 = scmp.eq.s32.totalorder %s29, 0
      %p119 = por %p117, %p118
      %s121 = sadd.s32 %s120, 1
      %p124 = scmp.eq.s32.totalorder %s23, 1
      %p125 = scmp.ne.s32.totalorder %s120, %s122
      %p126 = scmp.eq.s32.totalorder %s23, 0
      %p127 = por %p125, %p126
      %p128 = scmp.ne.s32.totalorder %s120, %s122
      %p129 = scmp.eq.s32.totalorder %s28, 1
      %p130 = por %p128, %p129
      %p131 = scmp.ne.s32.totalorder %s122, %s123
      %p132 = scmp.eq.s32.totalorder %s28, 0
      %p133 = por %p131, %p132
      %p134 = scmp.ne.s32.totalorder %s122, %s123
      %p135 = scmp.eq.s32.totalorder %s29, 1
      %p136 = por %p134, %p135
      %p138 = scmp.ne.s32.totalorder %s123, %s137
      %p139 = scmp.eq.s32.totalorder %s29, 0
      %p140 = por %p138, %p139
      %s142 = sadd.s32 %s141, 1
      %p145 = scmp.eq.s32.totalorder %s23, 1
      %p146 = scmp.ne.s32.totalorder %s141, %s143
      %p147 = scmp.eq.s32.totalorder %s23, 0
      %p148 = por %p146, %p147
      %p149 = scmp.ne.s32.totalorder %s141, %s143
      %p150 = scmp.eq.s32.totalorder %s28, 1
      %p151 = por %p149, %p150
      %p152 = scmp.ne.s32.totalorder %s143, %s144
      %p153 = scmp.eq.s32.totalorder %s28, 0
      %p154 = por %p152, %p153
      %p155 = scmp.ne.s32.totalorder %s143, %s144
      %p156 = scmp.eq.s32.totalorder %s29, 1
      %p157 = por %p155, %p156
      %p159 = scmp.ne.s32.totalorder %s144, %s158
      %p160 = scmp.eq.s32.totalorder %s29, 0
      %p161 = por %p159, %p160
      %s163 = sadd.s32 %s162, 1
      %p166 = scmp.eq.s32.totalorder %s23, 1
      %p167 = scmp.ne.s32.totalorder %s162, %s164
      %p168 = scmp.eq.s32.totalorder %s23, 0
      %p169 = por %p167, %p168
      %p170 = scmp.ne.s32.totalorder %s162, %s164
      %p171 = scmp.eq.s32.totalorder %s28, 1
      %p172 = por %p170, %p171
      %p173 = scmp.ne.s32.totalorder %s164, %s165
      %p174 = scmp.eq.s32.totalorder %s28, 0
      %p175 = por %p173, %p174
      %p176 = scmp.ne.s32.totalorder %s164, %s165
      %p177 = scmp.eq.s32.totalorder %s29, 1
      %p178 = por %p176, %p177
      %p180 = scmp.ne.s32.totalorder %s165, %s179
      %p181 = scmp.eq.s32.totalorder %s29, 0
      %p182 = por %p180, %p181
      %s184 = sadd.s32 %s183, 1
      %p187 = scmp.eq.s32.totalorder %s23, 1
      %p188 = scmp.ne.s32.totalorder %s183, %s185
      %p189 = scmp.eq.s32.totalorder %s23, 0
      %p190 = por %p188, %p189
      %p191 = scmp.ne.s32.totalorder %s183, %s185
      %p192 = scmp.eq.s32.totalorder %s28, 1
      %p193 = por %p191, %p192
      %p194 = scmp.ne.s32.totalorder %s185, %s186
      %p195 = scmp.eq.s32.totalorder %s28, 0
      %p196 = por %p194, %p195
      %p197 = scmp.ne.s32.totalorder %s185, %s186
      %p198 = scmp.eq.s32.totalorder %s29, 1
      %p199 = por %p197, %p198
      %p201 = scmp.ne.s32.totalorder %s186, %s200
      %p202 = scmp.eq.s32.totalorder %s29, 0
      %p203 = por %p201, %p202
      %s205 = sadd.s32 %s204, 1
      %p208 = scmp.eq.s32.totalorder %s23, 1
      %p209 = scmp.ne.s32.totalorder %s204, %s206
      %p210 = scmp.eq.s32.totalorder %s23, 0
      %p211 = por %p209, %p210
      %p212 = scmp.ne.s32.totalorder %s204, %s206
      %p213 = scmp.eq.s32.totalorder %s28, 1
      %p214 = por %p212, %p213
      %p215 = scmp.ne.s32.totalorder %s206, %s207
      %p216 = scmp.eq.s32.totalorder %s28, 0
      %p217 = por %p215, %p216
      %p218 = scmp.ne.s32.totalorder %s206, %s207
      %p219 = scmp.eq.s32.totalorder %s29, 1
      %p220 = por %p218, %p219
      %p222 = scmp.ne.s32.totalorder %s207, %s221
      %p223 = scmp.eq.s32.totalorder %s29, 0
      %p224 = por %p222, %p223
      %s226 = sadd.s32 %s225, 1
      %p229 = scmp.eq.s32.totalorder %s23, 1
      %p230 = scmp.ne.s32.totalorder %s225, %s227
      %p231 = scmp.eq.s32.totalorder %s23, 0
      %p232 = por %p230, %p231
      %p233 = scmp.ne.s32.totalorder %s225, %s227
      %p234 = scmp.eq.s32.totalorder %s28, 1
      %p235 = por %p233, %p234
      %p236 = scmp.ne.s32.totalorder %s227, %s228
      %p237 = scmp.eq.s32.totalorder %s28, 0
      %p238 = por %p236, %p237
      %p239 = scmp.ne.s32.totalorder %s227, %s228
      %p240 = scmp.eq.s32.totalorder %s29, 1
      %p241 = por %p239, %p240
      %p243 = scmp.ne.s32.totalorder %s228, %s242
      %p244 = scmp.eq.s32.totalorder %s29, 0
      %p245 = por %p243, %p244
      %s247 = sadd.s32 %s246, 1
      %p250 = scmp.eq.s32.totalorder %s23, 1
      %p251 = scmp.ne.s32.totalorder %s246, %s248
      %p252 = scmp.eq.s32.totalorder %s23, 0
      %p253 = por %p251, %p252
      %p254 = scmp.ne.s32.totalorder %s246, %s248
      %p255 = scmp.eq.s32.totalorder %s28, 1
      %p256 = por %p254, %p255
      %p257 = scmp.ne.s32.totalorder %s248, %s249
      %p258 = scmp.eq.s32.totalorder %s28, 0
      %p259 = por %p257, %p258
      %p260 = scmp.ne.s32.totalorder %s248, %s249
      %p261 = scmp.eq.s32.totalorder %s29, 1
      %p262 = por %p260, %p261
      %p264 = scmp.ne.s32.totalorder %s249, %s263
      %p265 = scmp.eq.s32.totalorder %s29, 0
      %p266 = por %p264, %p265
      %s268 = sadd.s32 %s267, 1
      %p271 = scmp.eq.s32.totalorder %s23, 1
      %p272 = scmp.ne.s32.totalorder %s267, %s269
      %p273 = scmp.eq.s32.totalorder %s23, 0
      %p274 = por %p272, %p273
      %p275 = scmp.ne.s32.totalorder %s267, %s269
      %p276 = scmp.eq.s32.totalorder %s28, 1
      %p277 = por %p275, %p276
      %p278 = scmp.ne.s32.totalorder %s269, %s270
      %p279 = scmp.eq.s32.totalorder %s28, 0
      %p280 = por %p278, %p279
      %p281 = scmp.ne.s32.totalorder %s269, %s270
      %p282 = scmp.eq.s32.totalorder %s29, 1
      %p283 = por %p281, %p282
      %p285 = scmp.ne.s32.totalorder %s270, %s284
      %p286 = scmp.eq.s32.totalorder %s29, 0
      %p287 = por %p285, %p286
      %s289 = sadd.s32 %s288, 1
      %p292 = scmp.eq.s32.totalorder %s23, 1
      %p293 = scmp.ne.s32.totalorder %s288, %s290
      %p294 = scmp.eq.s32.totalorder %s23, 0
      %p295 = por %p293, %p294
      %p296 = scmp.ne.s32.totalorder %s288, %s290
      %p297 = scmp.eq.s32.totalorder %s28, 1
      %p298 = por %p296, %p297
      %p299 = scmp.ne.s32.totalorder %s290, %s291
      %p300 = scmp.eq.s32.totalorder %s28, 0
      %p301 = por %p299, %p300
      %p302 = scmp.ne.s32.totalorder %s290, %s291
      %p303 = scmp.eq.s32.totalorder %s29, 1
      %p304 = por %p302, %p303
      %p306 = scmp.ne.s32.totalorder %s291, %s305
      %p307 = scmp.eq.s32.totalorder %s29, 0
      %p308 = por %p306, %p307
      %s310 = sadd.s32 %s309, 1
      %p313 = scmp.eq.s32.totalorder %s23, 1
      %p314 = scmp.ne.s32.totalorder %s309, %s311
      %p315 = scmp.eq.s32.totalorder %s23, 0
      %p316 = por %p314, %p315
      %p317 = scmp.ne.s32.totalorder %s309, %s311
      %p318 = scmp.eq.s32.totalorder %s28, 1
      %p319 = por %p317, %p318
      %p320 = scmp.ne.s32.totalorder %s311, %s312
      %p321 = scmp.eq.s32.totalorder %s28, 0
      %p322 = por %p320, %p321
      %p323 = scmp.ne.s32.totalorder %s311, %s312
      %p324 = scmp.eq.s32.totalorder %s29, 1
      %p325 = por %p323, %p324
      %p327 = scmp.ne.s32.totalorder %s312, %s326
      %p328 = scmp.eq.s32.totalorder %s29, 0
      %p329 = por %p327, %p328
      %s330 = ssub.s32 %s23, %s30
      %p331 = scmp.eq.s32.totalorder %s330, 0
      %s333 = sadd.s32 %s332, 1
      %s334 = scalar_select %p331, %s332, %s333
      %p337 = pneg %p331
      %p338 = scmp.eq.s32.totalorder %s23, 1
      %p339 = por %p337, %p338
      %p340 = scmp.ne.s32.totalorder %s332, %s335
      %p341 = scmp.eq.s32.totalorder %s23, 0
      %p342 = por %p340, %p341
      %p343 = scmp.ne.s32.totalorder %s332, %s335
      %p344 = scmp.eq.s32.totalorder %s28, 1
      %p345 = por %p343, %p344
      %p346 = scmp.ne.s32.totalorder %s335, %s336
      %p347 = scmp.eq.s32.totalorder %s28, 0
      %p348 = por %p346, %p347
      %p349 = scmp.ne.s32.totalorder %s335, %s336
      %p350 = scmp.eq.s32.totalorder %s29, 1
      %p351 = por %p349, %p350
      %p353 = scmp.ne.s32.totalorder %s336, %s352
      %p354 = scmp.eq.s32.totalorder %s29, 0
      %p355 = por %p353, %p354
      %p356 = scmp.le.s32.totalorder 1, %s23
      %p357 = scmp.lt.s32.totalorder %s23, 3
      %p358 = pnand %p356, %p357
      %p359 = pneg %p358
      // Predicated region
      $region9: #{cnn_forward.1} parent=5 // pred_check
        _
      $region10: #{cnn_forward.1} parent=5 // pred_check_branch
        %361 = sbr.rel (%p358) target = $region12
      $region11: #{cnn_forward.1} parent=5 // pred_region
        %s362 = ssub.s32 %s23, 1
        // Predicated region
        $region13: #{cnn_forward.1} parent=11 // pred_check
          %p363 = pneg %p70
        $region14: #{cnn_forward.1} parent=11 // pred_check_branch
          %365 = sbr.rel (%p363) target = $region16
        $region15: #{cnn_forward.1} parent=11 // pred_region
          _
        $region16: #{cnn_forward.1} parent=11 // pred_fallthru
          _
        // Predicated region
        $region17: #{cnn_forward.1} parent=11 // pred_check
          %p366 = pneg %p91
        $region18: #{cnn_forward.1} parent=11 // pred_check_branch
          %368 = sbr.rel (%p366) target = $region20
        $region19: #{cnn_forward.1} parent=11 // pred_region
          _
        $region20: #{cnn_forward.1} parent=11 // pred_fallthru
          _
        // Predicated region
        $region21: #{cnn_forward.1} parent=11 // pred_check
          %p369 = pneg %p112
        $region22: #{cnn_forward.1} parent=11 // pred_check_branch
          %371 = sbr.rel (%p369) target = $region24
        $region23: #{cnn_forward.1} parent=11 // pred_region
          _
        $region24: #{cnn_forward.1} parent=11 // pred_fallthru
          _
        // Predicated region
        $region25: #{cnn_forward.1} parent=11 // pred_check
          %p372 = pneg %p133
        $region26: #{cnn_forward.1} parent=11 // pred_check_branch
          %374 = sbr.rel (%p372) target = $region28
        $region27: #{cnn_forward.1} parent=11 // pred_region
          _
        $region28: #{cnn_forward.1} parent=11 // pred_fallthru
          _
        // Predicated region
        $region29: #{cnn_forward.1} parent=11 // pred_check
          %p375 = pneg %p154
        $region30: #{cnn_forward.1} parent=11 // pred_check_branch
          %377 = sbr.rel (%p375) target = $region32
        $region31: #{cnn_forward.1} parent=11 // pred_region
          _
        $region32: #{cnn_forward.1} parent=11 // pred_fallthru
          _
        // Predicated region
        $region33: #{cnn_forward.1} parent=11 // pred_check
          %p378 = pneg %p175
        $region34: #{cnn_forward.1} parent=11 // pred_check_branch
          %380 = sbr.rel (%p378) target = $region36
        $region35: #{cnn_forward.1} parent=11 // pred_region
          _
        $region36: #{cnn_forward.1} parent=11 // pred_fallthru
          _
        // Predicated region
        $region37: #{cnn_forward.1} parent=11 // pred_check
          %p381 = pneg %p196
        $region38: #{cnn_forward.1} parent=11 // pred_check_branch
          %383 = sbr.rel (%p381) target = $region40
        $region39: #{cnn_forward.1} parent=11 // pred_region
          _
        $region40: #{cnn_forward.1} parent=11 // pred_fallthru
          _
        // Predicated region
        $region41: #{cnn_forward.1} parent=11 // pred_check
          %p384 = pneg %p217
        $region42: #{cnn_forward.1} parent=11 // pred_check_branch
          %386 = sbr.rel (%p384) target = $region44
        $region43: #{cnn_forward.1} parent=11 // pred_region
          _
        $region44: #{cnn_forward.1} parent=11 // pred_fallthru
          _
        // Predicated region
        $region45: #{cnn_forward.1} parent=11 // pred_check
          %p387 = pneg %p238
        $region46: #{cnn_forward.1} parent=11 // pred_check_branch
          %389 = sbr.rel (%p387) target = $region48
        $region47: #{cnn_forward.1} parent=11 // pred_region
          _
        $region48: #{cnn_forward.1} parent=11 // pred_fallthru
          _
        // Predicated region
        $region49: #{cnn_forward.1} parent=11 // pred_check
          %p390 = pneg %p259
        $region50: #{cnn_forward.1} parent=11 // pred_check_branch
          %392 = sbr.rel (%p390) target = $region52
        $region51: #{cnn_forward.1} parent=11 // pred_region
          _
        $region52: #{cnn_forward.1} parent=11 // pred_fallthru
          _
        // Predicated region
        $region53: #{cnn_forward.1} parent=11 // pred_check
          %p393 = pneg %p280
        $region54: #{cnn_forward.1} parent=11 // pred_check_branch
          %395 = sbr.rel (%p393) target = $region56
        $region55: #{cnn_forward.1} parent=11 // pred_region
          _
        $region56: #{cnn_forward.1} parent=11 // pred_fallthru
          _
        // Predicated region
        $region57: #{cnn_forward.1} parent=11 // pred_check
          %p396 = pneg %p301
        $region58: #{cnn_forward.1} parent=11 // pred_check_branch
          %398 = sbr.rel (%p396) target = $region60
        $region59: #{cnn_forward.1} parent=11 // pred_region
          _
        $region60: #{cnn_forward.1} parent=11 // pred_fallthru
          _
        // Predicated region
        $region61: #{cnn_forward.1} parent=11 // pred_check
          %p399 = pneg %p322
        $region62: #{cnn_forward.1} parent=11 // pred_check_branch
          %401 = sbr.rel (%p399) target = $region64
        $region63: #{cnn_forward.1} parent=11 // pred_region
          _
        $region64: #{cnn_forward.1} parent=11 // pred_fallthru
          _
      $region12: #{cnn_forward.1} parent=5 // pred_fallthru
        _
      %p402 = scmp.lt.s32.totalorder %s23, 2
      // Predicated region
      $region65: #{cnn_forward.1} parent=5 // pred_check
        %p403 = pneg %p402
      $region66: #{cnn_forward.1} parent=5 // pred_check_branch
        %405 = sbr.rel (%p403) target = $region68
      $region67: #{cnn_forward.1} parent=5 // pred_region
        // Predicated region
        $region69: #{cnn_forward.1} parent=67 // pred_check
          %p406 = pneg %p43
        $region70: #{cnn_forward.1} parent=67 // pred_check_branch
          %408 = sbr.rel (%p406) target = $region72
        $region71: #{cnn_forward.1} parent=67 // pred_region
          %p409 = scmp.lt.s32.totalorder %s23, 1
          %s410 = scalar_select %p409, %s23, 1
          %s411 = smul.addr %s410, 10
          %s412 = smul.addr %s411, 4
          %s413 = scalar_lea.vmem %s0, %s412
        $region72: #{cnn_forward.1} parent=67 // pred_fallthru
          _
      $region68: #{cnn_forward.1} parent=5 // pred_fallthru
        _
      %p414 = scmp.le.s32.totalorder 1, %s23
      %p415 = scmp.lt.s32.totalorder %s23, 3
      %p416 = pnand %p414, %p415
      %p417 = pneg %p416
      // Predicated region
      $region73: #{cnn_forward.1} parent=5 // pred_check
        _
      $region74: #{cnn_forward.1} parent=5 // pred_check_branch
        %419 = sbr.rel (%p416) target = $region76
      $region75: #{cnn_forward.1} parent=5 // pred_region
        %s420 = ssub.s32 %s23, 1
        %p421 = scmp.lt.s32.totalorder %s28, 1
        %s422 = scalar_select %p421, %s28, 1
        %s423 = smul.addr %s422, 10
        %s424 = smul.addr %s423, 4
        %s425 = scalar_lea.vmem %s0, %s424
        %p426 = pneg %p49
        %p427 = pneg %p46
        %p428 = pneg %p70
        %p429 = pneg %p67
        %p430 = pneg %p91
        %p431 = pneg %p88
        %p432 = pneg %p112
        %p433 = pneg %p109
        %p434 = pneg %p133
        %p435 = pneg %p130
        %p436 = pneg %p154
        %p437 = pneg %p151
        %p438 = pneg %p175
        %p439 = pneg %p172
        %p440 = pneg %p196
        %p441 = pneg %p193
        %p442 = pneg %p217
        %p443 = pneg %p214
        %p444 = pneg %p238
        %p445 = pneg %p235
        %p446 = pneg %p259
        %p447 = pneg %p256
        %p448 = pneg %p280
        %p449 = pneg %p277
        %p450 = pneg %p301
        %p451 = pneg %p298
        %p452 = pneg %p322
        %p453 = pneg %p319
        %p454 = pneg %p348
        %p455 = pneg %p345
        %s456 = sand.u32 %s335, 1
        %s457 = scalar_lea.sflag [#allocation3], %s456
        %s458 = sand.u32 %s335, 1
        %s459 = scalar_lea.vmem [#allocation2], %s458
        %p460 = scmp.lt.s32.totalorder %s28, 1
        %s461 = scalar_select %p460, %s28, 1
        %s462 = smul.addr %s461, 10
        %s463 = smul.addr %s462, 4
        %s464 = scalar_lea.vmem %s0, %s463
        %v466 = vld [vmem:[%s464] sm:$0xff]
        %v467 = vld [vmem:[%s464 + $0x8] sm:$0xff]
        %v468 = vld [vmem:[%s464 + $0x10] sm:$0xff]
        %v469 = vld [vmem:[%s464 + $0x18] sm:$0xff]
        %v470 = vld [vmem:[%s464 + $0x20] sm:$0x33]
        %v471 = vld [vmem:[%s1] sm:$0xf]
        %v477 = vunpack.c.l.b16 %v466
        %v478 = vunpack.c.h.b16 %v466
        %v479 = vunpack.c.l.b16 %v467
        %v480 = vunpack.c.h.b16 %v467
        %v481 = vunpack.c.l.b16 %v468
        %v482 = vunpack.c.h.b16 %v468
        %v483 = vunpack.c.l.b16 %v469
        %v484 = vunpack.c.h.b16 %v469
        %v485 = vunpack.c.l.b16 %v470
        %v486 = vunpack.c.h.b16 %v470
        %v487 = vpack.c.b16 %v479, %v477
        %v488 = vpack.c.b16 %v480, %v478
        %v489 = vpack.c.b16 %v483, %v481
        %v490 = vpack.c.b16 %v484, %v482
        %v491 = vpack.c.b16 %v485, %v485
        %v492 = vpack.c.b16 %v486, %v486
        %vm497 = vcmask 293888
        %v499 = vsel %vm497, %v471, 0
        %vm501 = vcmask 1041408
        %v503 = vsel %vm501, %v491, 0
        %v506 = vsel %vm501, %v492, 0
        %508 = vmatprep.subr.bf16.mxu0 0
        %509 = vmatpush1.bf16.msra.mxu0 0
        %510 = vmatprep.subr.bf16.mxu0 0
        %511 = vmatpush1.bf16.msra.mxu0 0
        %512 = vmatprep.subr.bf16.mxu0 0
        %513 = vmatpush1.bf16.msra.mxu0 0
        %514 = vmatprep.subr.bf16.mxu0 0
        %515 = vmatpush1.bf16.msra.mxu0 0
        %516 = vmatprep.subr.bf16.mxu0 0
        %517 = vmatpush1.bf16.msra.mxu0 0
        %518 = vmatprep.subr.bf16.mxu0 %v506
        %519 = vmatpush1.bf16.msra.mxu0 %v503
        %520 = vmatprep.subr.bf16.mxu0 %v490
        %521 = vmatpush1.bf16.msra.mxu0 %v489
        %522 = vmatprep.subr.bf16.mxu0 %v488
        %523 = vmatpush1.bf16.msra.mxu0 %v487
        %524 = vmatprep.subr.bf16.mxu0 0
        %525 = vmatpush2.bf16.msra.mxu0 0
        %526 = vmatprep.subr.bf16.mxu0 0
        %527 = vmatpush2.bf16.msra.mxu0 0
        %528 = vmatprep.subr.bf16.mxu0 0
        %529 = vmatpush2.bf16.msra.mxu0 0
        %530 = vmatprep.subr.bf16.mxu0 0
        %531 = vmatpush2.bf16.msra.mxu0 0
        %532 = vmatprep.subr.bf16.mxu0 0
        %533 = vmatpush2.bf16.msra.mxu0 0
        %534 = vmatprep.subr.bf16.mxu0 0
        %535 = vmatpush2.bf16.msra.mxu0 0
        %536 = vmatprep.subr.bf16.mxu0 0
        %537 = vmatpush2.bf16.msra.mxu0 0
        %538 = vmatprep.subr.bf16.mxu0 0
        %539 = vmatpush2.bf16.msra.mxu0 0
        %540 = vmatprep.mubr.bf16.mxu0 0
        %541 = vmatmul.mubr.bf16.gmra.mxu0 %v499
        %v542 = vpop.f32.mrf.mxu0
        %v543 = vadd.f32 0.0, %v542
        %v544 = vpop.f32.mrf.mxu0
        %v545 = vadd.f32 0.0, %v544
        %v546 = vpop.f32.mrf.mxu0
        %v547 = vpop.f32.mrf.mxu0
        %548 = vdwg.mxu0
        %v549 = vpack.c.bf16 %v543, %v543
        %v550 = vpack.c.bf16 %v545, %v545
        %v551 = vld [vmem:[%s2] sm:$0xff]
        %v552 = vld [vmem:[%s2 + $0x8] sm:$0xff]
        %v553 = vld [vmem:[%s2 + $0x10] sm:$0xff]
        %v554 = vld [vmem:[%s2 + $0x18] sm:$0xff]
        %v555 = vld [vmem:[%s2 + $0x20] sm:$0xff]
        %v556 = vld [vmem:[%s2 + $0x28] sm:$0xff]
        %v557 = vld [vmem:[%s2 + $0x30] sm:$0xff]
        %v558 = vld [vmem:[%s2 + $0x38] sm:$0xff]
        %v559 = vld [vmem:[%s2 + $0x40] sm:$0xff]
        %v560 = vld [vmem:[%s2 + $0x48] sm:$0xff]
        %v561 = vld [vmem:[%s2 + $0x50] sm:$0xff]
        %v562 = vld [vmem:[%s2 + $0x58] sm:$0xff]
        %v563 = vld [vmem:[%s2 + $0x60] sm:$0xff]
        %v564 = vld [vmem:[%s2 + $0x68] sm:$0xff]
        %v565 = vld [vmem:[%s2 + $0x70] sm:$0xff]
        %v566 = vld [vmem:[%s2 + $0x78] sm:$0xff]
        %v567 = vld [vmem:[%s2 + $0x80] sm:$0xff]
        %v568 = vld [vmem:[%s2 + $0x88] sm:$0xff]
        %s569 = scalar_lea.vmem %s1, 4
        %v570 = vld [vmem:[%s569] sm:$0xf]
        %v572 = vsel %vm497, %v570, 0
        %574 = vmatprep.subr.bf16.mxu0 0
        %575 = vmatpush1.bf16.msra.mxu0 0
        %576 = vmatprep.subr.bf16.mxu0 0
        %577 = vmatpush1.bf16.msra.mxu0 0
        %578 = vmatprep.subr.bf16.mxu0 0
        %579 = vmatpush1.bf16.msra.mxu0 0
        %580 = vmatprep.subr.bf16.mxu0 0
        %581 = vmatpush1.bf16.msra.mxu0 0
        %582 = vmatprep.subr.bf16.mxu0 0
        %583 = vmatpush1.bf16.msra.mxu0 0
        %584 = vmatprep.subr.bf16.mxu0 %v506
        %585 = vmatpush1.bf16.msra.mxu0 %v503
        %586 = vmatprep.subr.bf16.mxu0 %v490
        %587 = vmatpush1.bf16.msra.mxu0 %v489
        %588 = vmatprep.subr.bf16.mxu0 %v488
        %589 = vmatpush1.bf16.msra.mxu0 %v487
        %590 = vmatprep.subr.bf16.mxu0 0
        %591 = vmatpush2.bf16.msra.mxu0 0
        %592 = vmatprep.subr.bf16.mxu0 0
        %593 = vmatpush2.bf16.msra.mxu0 0
        %594 = vmatprep.subr.bf16.mxu0 0
        %595 = vmatpush2.bf16.msra.mxu0 0
        %596 = vmatprep.subr.bf16.mxu0 0
        %597 = vmatpush2.bf16.msra.mxu0 0
        %598 = vmatprep.subr.bf16.mxu0 0
        %599 = vmatpush2.bf16.msra.mxu0 0
        %600 = vmatprep.subr.bf16.mxu0 0
        %601 = vmatpush2.bf16.msra.mxu0 0
        %602 = vmatprep.subr.bf16.mxu0 0
        %603 = vmatpush2.bf16.msra.mxu0 0
        %604 = vmatprep.subr.bf16.mxu0 0
        %605 = vmatpush2.bf16.msra.mxu0 0
        %606 = vmatprep.mubr.bf16.mxu0 0
        %607 = vmatmul.mubr.bf16.gmra.mxu0 %v572
        %v608 = vpop.f32.mrf.mxu0
        %v609 = vadd.f32 0.0, %v608
        %v610 = vpop.f32.mrf.mxu0
        %v611 = vadd.f32 0.0, %v610
        %v612 = vpop.f32.mrf.mxu0
        %v613 = vpop.f32.mrf.mxu0
        %614 = vdwg.mxu0
        %v615 = vpack.c.bf16 %v609, %v609
        %v616 = vpack.c.bf16 %v611, %v611
        %s617 = scalar_lea.vmem %s2, 144
        %v618 = vld [vmem:[%s617] sm:$0xff]
        %v619 = vld [vmem:[%s617 + $0x8] sm:$0xff]
        %v620 = vld [vmem:[%s617 + $0x10] sm:$0xff]
        %v621 = vld [vmem:[%s617 + $0x18] sm:$0xff]
        %v622 = vld [vmem:[%s617 + $0x20] sm:$0xff]
        %v623 = vld [vmem:[%s617 + $0x28] sm:$0xff]
        %v624 = vld [vmem:[%s617 + $0x30] sm:$0xff]
        %v625 = vld [vmem:[%s617 + $0x38] sm:$0xff]
        %v626 = vld [vmem:[%s617 + $0x40] sm:$0xff]
        %v627 = vld [vmem:[%s617 + $0x48] sm:$0xff]
        %v628 = vld [vmem:[%s617 + $0x50] sm:$0xff]
        %v629 = vld [vmem:[%s617 + $0x58] sm:$0xff]
        %v630 = vld [vmem:[%s617 + $0x60] sm:$0xff]
        %v631 = vld [vmem:[%s617 + $0x68] sm:$0xff]
        %v632 = vld [vmem:[%s617 + $0x70] sm:$0xff]
        %v633 = vld [vmem:[%s617 + $0x78] sm:$0xff]
        %v634 = vld [vmem:[%s617 + $0x80] sm:$0xff]
        %v635 = vld [vmem:[%s617 + $0x88] sm:$0xff]
        %v654 = vunpack.c.l.b16 %v618
        %v655 = vunpack.c.h.b16 %v618
        %v656 = vunpack.c.l.b16 %v619
        %v657 = vunpack.c.h.b16 %v619
        %v658 = vunpack.c.l.b16 %v620
        %v659 = vunpack.c.h.b16 %v620
        %v660 = vunpack.c.l.b16 %v621
        %v661 = vunpack.c.h.b16 %v621
        %v662 = vunpack.c.l.b16 %v622
        %v663 = vunpack.c.h.b16 %v622
        %v664 = vunpack.c.l.b16 %v623
        %v665 = vunpack.c.h.b16 %v623
        %v666 = vunpack.c.l.b16 %v624
        %v667 = vunpack.c.h.b16 %v624
        %v668 = vunpack.c.l.b16 %v625
        %v669 = vunpack.c.h.b16 %v625
        %v670 = vunpack.c.l.b16 %v626
        %v671 = vunpack.c.h.b16 %v626
        %v672 = vunpack.c.l.b16 %v627
        %v673 = vunpack.c.h.b16 %v627
        %v674 = vunpack.c.l.b16 %v628
        %v675 = vunpack.c.h.b16 %v628
        %v676 = vunpack.c.l.b16 %v629
        %v677 = vunpack.c.h.b16 %v629
        %v678 = vunpack.c.l.b16 %v630
        %v679 = vunpack.c.h.b16 %v630
        %v680 = vunpack.c.l.b16 %v631
        %v681 = vunpack.c.h.b16 %v631
        %v682 = vunpack.c.l.b16 %v632
        %v683 = vunpack.c.h.b16 %v632
        %v684 = vunpack.c.l.b16 %v633
        %v685 = vunpack.c.h.b16 %v633
        %v686 = vunpack.c.l.b16 %v634
        %v687 = vunpack.c.h.b16 %v634
        %v688 = vunpack.c.l.b16 %v635
        %v689 = vunpack.c.h.b16 %v635
        %v690 = vpack.c.b16 %v656, %v654
        %v691 = vpack.c.b16 %v657, %v655
        %v692 = vpack.c.b16 %v660, %v658
        %v693 = vpack.c.b16 %v661, %v659
        %v694 = vpack.c.b16 %v664, %v662
        %v695 = vpack.c.b16 %v665, %v663
        %v696 = vpack.c.b16 %v668, %v666
        %v697 = vpack.c.b16 %v669, %v667
        %v698 = vpack.c.b16 %v672, %v670
        %v699 = vpack.c.b16 %v673, %v671
        %v700 = vpack.c.b16 %v676, %v674
        %v701 = vpack.c.b16 %v677, %v675
        %v702 = vpack.c.b16 %v680, %v678
        %v703 = vpack.c.b16 %v681, %v679
        %v704 = vpack.c.b16 %v684, %v682
        %v705 = vpack.c.b16 %v685, %v683
        %v706 = vpack.c.b16 %v688, %v686
        %v707 = vpack.c.b16 %v689, %v687
        %vm726 = vcmask 130048
        %v728 = vsel %vm726, %v616, 0
        %730 = vmatprep.subr.bf16.mxu0 %v705
        %731 = vmatpush1.bf16.msra.mxu0 %v704
        %732 = vmatprep.subr.bf16.mxu0 %v703
        %733 = vmatpush1.bf16.msra.mxu0 %v702
        %734 = vmatprep.subr.bf16.mxu0 %v701
        %735 = vmatpush1.bf16.msra.mxu0 %v700
        %736 = vmatprep.subr.bf16.mxu0 %v699
        %737 = vmatpush1.bf16.msra.mxu0 %v698
        %738 = vmatprep.subr.bf16.mxu0 %v697
        %739 = vmatpush1.bf16.msra.mxu0 %v696
        %740 = vmatprep.subr.bf16.mxu0 %v695
        %741 = vmatpush1.bf16.msra.mxu0 %v694
        %742 = vmatprep.subr.bf16.mxu0 %v693
        %743 = vmatpush1.bf16.msra.mxu0 %v692
        %744 = vmatprep.subr.bf16.mxu0 %v691
        %745 = vmatpush1.bf16.msra.mxu0 %v690
        %746 = vmatprep.subr.bf16.mxu0 0
        %747 = vmatpush2.bf16.msra.mxu0 0
        %748 = vmatprep.subr.bf16.mxu0 0
        %749 = vmatpush2.bf16.msra.mxu0 0
        %750 = vmatprep.subr.bf16.mxu0 0
        %751 = vmatpush2.bf16.msra.mxu0 0
        %752 = vmatprep.subr.bf16.mxu0 0
        %753 = vmatpush2.bf16.msra.mxu0 0
        %754 = vmatprep.subr.bf16.mxu0 0
        %755 = vmatpush2.bf16.msra.mxu0 0
        %756 = vmatprep.subr.bf16.mxu0 0
        %757 = vmatpush2.bf16.msra.mxu0 0
        %758 = vmatprep.subr.bf16.mxu0 0
        %759 = vmatpush2.bf16.msra.mxu0 0
        %760 = vmatprep.subr.bf16.mxu0 %v707
        %761 = vmatpush2.bf16.msra.mxu0 %v706
        %762 = vmatprep.mubr.bf16.mxu0 %v728
        %763 = vmatmul.mubr.bf16.gmra.mxu0 %v615
        %v764 = vpop.f32.mrf.mxu0
        %v765 = vadd.f32 0.0, %v764
        %v766 = vpop.f32.mrf.mxu0
        %v767 = vadd.f32 0.0, %v766
        %v768 = vpop.f32.mrf.mxu0
        %v769 = vpop.f32.mrf.mxu0
        %770 = vdwg.mxu0
        %v789 = vunpack.c.l.b16 %v551
        %v790 = vunpack.c.h.b16 %v551
        %v791 = vunpack.c.l.b16 %v552
        %v792 = vunpack.c.h.b16 %v552
        %v793 = vunpack.c.l.b16 %v553
        %v794 = vunpack.c.h.b16 %v553
        %v795 = vunpack.c.l.b16 %v554
        %v796 = vunpack.c.h.b16 %v554
        %v797 = vunpack.c.l.b16 %v555
        %v798 = vunpack.c.h.b16 %v555
        %v799 = vunpack.c.l.b16 %v556
        %v800 = vunpack.c.h.b16 %v556
        %v801 = vunpack.c.l.b16 %v557
        %v802 = vunpack.c.h.b16 %v557
        %v803 = vunpack.c.l.b16 %v558
        %v804 = vunpack.c.h.b16 %v558
        %v805 = vunpack.c.l.b16 %v559
        %v806 = vunpack.c.h.b16 %v559
        %v807 = vunpack.c.l.b16 %v560
        %v808 = vunpack.c.h.b16 %v560
        %v809 = vunpack.c.l.b16 %v561
        %v810 = vunpack.c.h.b16 %v561
        %v811 = vunpack.c.l.b16 %v562
        %v812 = vunpack.c.h.b16 %v562
        %v813 = vunpack.c.l.b16 %v563
        %v814 = vunpack.c.h.b16 %v563
        %v815 = vunpack.c.l.b16 %v564
        %v816 = vunpack.c.h.b16 %v564
        %v817 = vunpack.c.l.b16 %v565
        %v818 = vunpack.c.h.b16 %v565
        %v819 = vunpack.c.l.b16 %v566
        %v820 = vunpack.c.h.b16 %v566
        %v821 = vunpack.c.l.b16 %v567
        %v822 = vunpack.c.h.b16 %v567
        %v823 = vunpack.c.l.b16 %v568
        %v824 = vunpack.c.h.b16 %v568
        %v825 = vpack.c.b16 %v791, %v789
        %v826 = vpack.c.b16 %v792, %v790
        %v827 = vpack.c.b16 %v795, %v793
        %v828 = vpack.c.b16 %v796, %v794
        %v829 = vpack.c.b16 %v799, %v797
        %v830 = vpack.c.b16 %v800, %v798
        %v831 = vpack.c.b16 %v803, %v801
        %v832 = vpack.c.b16 %v804, %v802
        %v833 = vpack.c.b16 %v807, %v805
        %v834 = vpack.c.b16 %v808, %v806
        %v835 = vpack.c.b16 %v811, %v809
        %v836 = vpack.c.b16 %v812, %v810
        %v837 = vpack.c.b16 %v815, %v813
        %v838 = vpack.c.b16 %v816, %v814
        %v839 = vpack.c.b16 %v819, %v817
        %v840 = vpack.c.b16 %v820, %v818
        %v841 = vpack.c.b16 %v823, %v821
        %v842 = vpack.c.b16 %v824, %v822
        %v862 = vsel %vm726, %v550, 0
        %864 = vmatprep.subr.bf16.mxu0 %v840
        %865 = vmatpush1.bf16.msra.mxu0 %v839
        %866 = vmatprep.subr.bf16.mxu0 %v838
        %867 = vmatpush1.bf16.msra.mxu0 %v837
        %868 = vmatprep.subr.bf16.mxu0 %v836
        %869 = vmatpush1.bf16.msra.mxu0 %v835
        %870 = vmatprep.subr.bf16.mxu0 %v834
        %871 = vmatpush1.bf16.msra.mxu0 %v833
        %872 = vmatprep.subr.bf16.mxu0 %v832
        %873 = vmatpush1.bf16.msra.mxu0 %v831
        %874 = vmatprep.subr.bf16.mxu0 %v830
        %875 = vmatpush1.bf16.msra.mxu0 %v829
        %876 = vmatprep.subr.bf16.mxu0 %v828
        %877 = vmatpush1.bf16.msra.mxu0 %v827
        %878 = vmatprep.subr.bf16.mxu0 %v826
        %879 = vmatpush1.bf16.msra.mxu0 %v825
        %880 = vmatprep.subr.bf16.mxu0 0
        %881 = vmatpush2.bf16.msra.mxu0 0
        %882 = vmatprep.subr.bf16.mxu0 0
        %883 = vmatpush2.bf16.msra.mxu0 0
        %884 = vmatprep.subr.bf16.mxu0 0
        %885 = vmatpush2.bf16.msra.mxu0 0
        %886 = vmatprep.subr.bf16.mxu0 0
        %887 = vmatpush2.bf16.msra.mxu0 0
        %888 = vmatprep.subr.bf16.mxu0 0
        %889 = vmatpush2.bf16.msra.mxu0 0
        %890 = vmatprep.subr.bf16.mxu0 0
        %891 = vmatpush2.bf16.msra.mxu0 0
        %892 = vmatprep.subr.bf16.mxu0 0
        %893 = vmatpush2.bf16.msra.mxu0 0
        %894 = vmatprep.subr.bf16.mxu0 %v842
        %895 = vmatpush2.bf16.msra.mxu0 %v841
        %896 = vmatprep.mubr.bf16.mxu0 %v862
        %897 = vmatmul.mubr.bf16.gmra.mxu0 %v549
        %v898 = vpop.f32.mrf.mxu0
        %v899 = vadd.f32 %v765, %v898
        %v900 = vpop.f32.mrf.mxu0
        %v901 = vadd.f32 %v767, %v900
        %v902 = vpop.f32.mrf.mxu0
        %v903 = vpop.f32.mrf.mxu0
        %904 = vdwg.mxu0
        %s905 = scalar_lea.vmem %s1, 8
        %v906 = vld [vmem:[%s905] sm:$0xf]
        %v908 = vsel %vm497, %v906, 0
        %910 = vmatprep.subr.bf16.mxu0 0
        %911 = vmatpush1.bf16.msra.mxu0 0
        %912 = vmatprep.subr.bf16.mxu0 0
        %913 = vmatpush1.bf16.msra.mxu0 0
        %914 = vmatprep.subr.bf16.mxu0 0
        %915 = vmatpush1.bf16.msra.mxu0 0
        %916 = vmatprep.subr.bf16.mxu0 0
        %917 = vmatpush1.bf16.msra.mxu0 0
        %918 = vmatprep.subr.bf16.mxu0 0
        %919 = vmatpush1.bf16.msra.mxu0 0
        %920 = vmatprep.subr.bf16.mxu0 %v506
        %921 = vmatpush1.bf16.msra.mxu0 %v503
        %922 = vmatprep.subr.bf16.mxu0 %v490
        %923 = vmatpush1.bf16.msra.mxu0 %v489
        %924 = vmatprep.subr.bf16.mxu0 %v488
        %925 = vmatpush1.bf16.msra.mxu0 %v487
        %926 = vmatprep.subr.bf16.mxu0 0
        %927 = vmatpush2.bf16.msra.mxu0 0
        %928 = vmatprep.subr.bf16.mxu0 0
        %929 = vmatpush2.bf16.msra.mxu0 0
        %930 = vmatprep.subr.bf16.mxu0 0
        %931 = vmatpush2.bf16.msra.mxu0 0
        %932 = vmatprep.subr.bf16.mxu0 0
        %933 = vmatpush2.bf16.msra.mxu0 0
        %934 = vmatprep.subr.bf16.mxu0 0
        %935 = vmatpush2.bf16.msra.mxu0 0
        %936 = vmatprep.subr.bf16.mxu0 0
        %937 = vmatpush2.bf16.msra.mxu0 0
        %938 = vmatprep.subr.bf16.mxu0 0
        %939 = vmatpush2.bf16.msra.mxu0 0
        %940 = vmatprep.subr.bf16.mxu0 0
        %941 = vmatpush2.bf16.msra.mxu0 0
        %942 = vmatprep.mubr.bf16.mxu0 0
        %943 = vmatmul.mubr.bf16.gmra.mxu0 %v908
        %v944 = vpop.f32.mrf.mxu0
        %v945 = vadd.f32 0.0, %v944
        %v946 = vpop.f32.mrf.mxu0
        %v947 = vadd.f32 0.0, %v946
        %v948 = vpop.f32.mrf.mxu0
        %v949 = vpop.f32.mrf.mxu0
        %950 = vdwg.mxu0
        %v951 = vpack.c.bf16 %v945, %v945
        %v952 = vpack.c.bf16 %v947, %v947
        %s953 = scalar_lea.vmem %s2, 288
        %v954 = vld [vmem:[%s953] sm:$0xff]
        %v955 = vld [vmem:[%s953 + $0x8] sm:$0xff]
        %v956 = vld [vmem:[%s953 + $0x10] sm:$0xff]
        %v957 = vld [vmem:[%s953 + $0x18] sm:$0xff]
        %v958 = vld [vmem:[%s953 + $0x20] sm:$0xff]
        %v959 = vld [vmem:[%s953 + $0x28] sm:$0xff]
        %v960 = vld [vmem:[%s953 + $0x30] sm:$0xff]
        %v961 = vld [vmem:[%s953 + $0x38] sm:$0xff]
        %v962 = vld [vmem:[%s953 + $0x40] sm:$0xff]
        %v963 = vld [vmem:[%s953 + $0x48] sm:$0xff]
        %v964 = vld [vmem:[%s953 + $0x50] sm:$0xff]
        %v965 = vld [vmem:[%s953 + $0x58] sm:$0xff]
        %v966 = vld [vmem:[%s953 + $0x60] sm:$0xff]
        %v967 = vld [vmem:[%s953 + $0x68] sm:$0xff]
        %v968 = vld [vmem:[%s953 + $0x70] sm:$0xff]
        %v969 = vld [vmem:[%s953 + $0x78] sm:$0xff]
        %v970 = vld [vmem:[%s953 + $0x80] sm:$0xff]
        %v971 = vld [vmem:[%s953 + $0x88] sm:$0xff]
        %v990 = vunpack.c.l.b16 %v954
        %v991 = vunpack.c.h.b16 %v954
        %v992 = vunpack.c.l.b16 %v955
        %v993 = vunpack.c.h.b16 %v955
        %v994 = vunpack.c.l.b16 %v956
        %v995 = vunpack.c.h.b16 %v956
        %v996 = vunpack.c.l.b16 %v957
        %v997 = vunpack.c.h.b16 %v957
        %v998 = vunpack.c.l.b16 %v958
        %v999 = vunpack.c.h.b16 %v958
        %v1000 = vunpack.c.l.b16 %v959
        %v1001 = vunpack.c.h.b16 %v959
        %v1002 = vunpack.c.l.b16 %v960
        %v1003 = vunpack.c.h.b16 %v960
        %v1004 = vunpack.c.l.b16 %v961
        %v1005 = vunpack.c.h.b16 %v961
        %v1006 = vunpack.c.l.b16 %v962
        %v1007 = vunpack.c.h.b16 %v962
        %v1008 = vunpack.c.l.b16 %v963
        %v1009 = vunpack.c.h.b16 %v963
        %v1010 = vunpack.c.l.b16 %v964
        %v1011 = vunpack.c.h.b16 %v964
        %v1012 = vunpack.c.l.b16 %v965
        %v1013 = vunpack.c.h.b16 %v965
        %v1014 = vunpack.c.l.b16 %v966
        %v1015 = vunpack.c.h.b16 %v966
        %v1016 = vunpack.c.l.b16 %v967
        %v1017 = vunpack.c.h.b16 %v967
        %v1018 = vunpack.c.l.b16 %v968
        %v1019 = vunpack.c.h.b16 %v968
        %v1020 = vunpack.c.l.b16 %v969
        %v1021 = vunpack.c.h.b16 %v969
        %v1022 = vunpack.c.l.b16 %v970
        %v1023 = vunpack.c.h.b16 %v970
        %v1024 = vunpack.c.l.b16 %v971
        %v1025 = vunpack.c.h.b16 %v971
        %v1026 = vpack.c.b16 %v992, %v990
        %v1027 = vpack.c.b16 %v993, %v991
        %v1028 = vpack.c.b16 %v996, %v994
        %v1029 = vpack.c.b16 %v997, %v995
        %v1030 = vpack.c.b16 %v1000, %v998
        %v1031 = vpack.c.b16 %v1001, %v999
        %v1032 = vpack.c.b16 %v1004, %v1002
        %v1033 = vpack.c.b16 %v1005, %v1003
        %v1034 = vpack.c.b16 %v1008, %v1006
        %v1035 = vpack.c.b16 %v1009, %v1007
        %v1036 = vpack.c.b16 %v1012, %v1010
        %v1037 = vpack.c.b16 %v1013, %v1011
        %v1038 = vpack.c.b16 %v1016, %v1014
        %v1039 = vpack.c.b16 %v1017, %v1015
        %v1040 = vpack.c.b16 %v1020, %v1018
        %v1041 = vpack.c.b16 %v1021, %v1019
        %v1042 = vpack.c.b16 %v1024, %v1022
        %v1043 = vpack.c.b16 %v1025, %v1023
        %v1063 = vsel %vm726, %v952, 0
        %1065 = vmatprep.subr.bf16.mxu0 %v1041
        %1066 = vmatpush1.bf16.msra.mxu0 %v1040
        %1067 = vmatprep.subr.bf16.mxu0 %v1039
        %1068 = vmatpush1.bf16.msra.mxu0 %v1038
        %1069 = vmatprep.subr.bf16.mxu0 %v1037
        %1070 = vmatpush1.bf16.msra.mxu0 %v1036
        %1071 = vmatprep.subr.bf16.mxu0 %v1035
        %1072 = vmatpush1.bf16.msra.mxu0 %v1034
        %1073 = vmatprep.subr.bf16.mxu0 %v1033
        %1074 = vmatpush1.bf16.msra.mxu0 %v1032
        %1075 = vmatprep.subr.bf16.mxu0 %v1031
        %1076 = vmatpush1.bf16.msra.mxu0 %v1030
        %1077 = vmatprep.subr.bf16.mxu0 %v1029
        %1078 = vmatpush1.bf16.msra.mxu0 %v1028
        %1079 = vmatprep.subr.bf16.mxu0 %v1027
        %1080 = vmatpush1.bf16.msra.mxu0 %v1026
        %1081 = vmatprep.subr.bf16.mxu0 0
        %1082 = vmatpush2.bf16.msra.mxu0 0
        %1083 = vmatprep.subr.bf16.mxu0 0
        %1084 = vmatpush2.bf16.msra.mxu0 0
        %1085 = vmatprep.subr.bf16.mxu0 0
        %1086 = vmatpush2.bf16.msra.mxu0 0
        %1087 = vmatprep.subr.bf16.mxu0 0
        %1088 = vmatpush2.bf16.msra.mxu0 0
        %1089 = vmatprep.subr.bf16.mxu0 0
        %1090 = vmatpush2.bf16.msra.mxu0 0
        %1091 = vmatprep.subr.bf16.mxu0 0
        %1092 = vmatpush2.bf16.msra.mxu0 0
        %1093 = vmatprep.subr.bf16.mxu0 0
        %1094 = vmatpush2.bf16.msra.mxu0 0
        %1095 = vmatprep.subr.bf16.mxu0 %v1043
        %1096 = vmatpush2.bf16.msra.mxu0 %v1042
        %1097 = vmatprep.mubr.bf16.mxu0 %v1063
        %1098 = vmatmul.mubr.bf16.gmra.mxu0 %v951
        %v1099 = vpop.f32.mrf.mxu0
        %v1100 = vadd.f32 0.0, %v1099
        %v1101 = vpop.f32.mrf.mxu0
        %v1102 = vadd.f32 0.0, %v1101
        %v1103 = vpop.f32.mrf.mxu0
        %v1104 = vpop.f32.mrf.mxu0
        %1105 = vdwg.mxu0
        %v1106 = vadd.f32 %v899, %v1100
        %v1107 = vadd.f32 %v901, %v1102
        %s1108 = scalar_lea.vmem %s1, 12
        %v1109 = vld [vmem:[%s1108] sm:$0xf]
        %v1111 = vsel %vm497, %v1109, 0
        %1113 = vmatprep.subr.bf16.mxu0 0
        %1114 = vmatpush1.bf16.msra.mxu0 0
        %1115 = vmatprep.subr.bf16.mxu0 0
        %1116 = vmatpush1.bf16.msra.mxu0 0
        %1117 = vmatprep.subr.bf16.mxu0 0
        %1118 = vmatpush1.bf16.msra.mxu0 0
        %1119 = vmatprep.subr.bf16.mxu0 0
        %1120 = vmatpush1.bf16.msra.mxu0 0
        %1121 = vmatprep.subr.bf16.mxu0 0
        %1122 = vmatpush1.bf16.msra.mxu0 0
        %1123 = vmatprep.subr.bf16.mxu0 %v506
        %1124 = vmatpush1.bf16.msra.mxu0 %v503
        %1125 = vmatprep.subr.bf16.mxu0 %v490
        %1126 = vmatpush1.bf16.msra.mxu0 %v489
        %1127 = vmatprep.subr.bf16.mxu0 %v488
        %1128 = vmatpush1.bf16.msra.mxu0 %v487
        %1129 = vmatprep.subr.bf16.mxu0 0
        %1130 = vmatpush2.bf16.msra.mxu0 0
        %1131 = vmatprep.subr.bf16.mxu0 0
        %1132 = vmatpush2.bf16.msra.mxu0 0
        %1133 = vmatprep.subr.bf16.mxu0 0
        %1134 = vmatpush2.bf16.msra.mxu0 0
        %1135 = vmatprep.subr.bf16.mxu0 0
        %1136 = vmatpush2.bf16.msra.mxu0 0
        %1137 = vmatprep.subr.bf16.mxu0 0
        %1138 = vmatpush2.bf16.msra.mxu0 0
        %1139 = vmatprep.subr.bf16.mxu0 0
        %1140 = vmatpush2.bf16.msra.mxu0 0
        %1141 = vmatprep.subr.bf16.mxu0 0
        %1142 = vmatpush2.bf16.msra.mxu0 0
        %1143 = vmatprep.subr.bf16.mxu0 0
        %1144 = vmatpush2.bf16.msra.mxu0 0
        %1145 = vmatprep.mubr.bf16.mxu0 0
        %1146 = vmatmul.mubr.bf16.gmra.mxu0 %v1111
        %v1147 = vpop.f32.mrf.mxu0
        %v1148 = vadd.f32 0.0, %v1147
        %v1149 = vpop.f32.mrf.mxu0
        %v1150 = vadd.f32 0.0, %v1149
        %v1151 = vpop.f32.mrf.mxu0
        %v1152 = vpop.f32.mrf.mxu0
        %1153 = vdwg.mxu0
        %v1154 = vpack.c.bf16 %v1148, %v1148
        %v1155 = vpack.c.bf16 %v1150, %v1150
        %s1156 = scalar_lea.vmem %s2, 432
        %v1157 = vld [vmem:[%s1156] sm:$0xff]
        %v1158 = vld [vmem:[%s1156 + $0x8] sm:$0xff]
        %v1159 = vld [vmem:[%s1156 + $0x10] sm:$0xff]
        %v1160 = vld [vmem:[%s1156 + $0x18] sm:$0xff]
        %v1161 = vld [vmem:[%s1156 + $0x20] sm:$0xff]
        %v1162 = vld [vmem:[%s1156 + $0x28] sm:$0xff]
        %v1163 = vld [vmem:[%s1156 + $0x30] sm:$0xff]
        %v1164 = vld [vmem:[%s1156 + $0x38] sm:$0xff]
        %v1165 = vld [vmem:[%s1156 + $0x40] sm:$0xff]
        %v1166 = vld [vmem:[%s1156 + $0x48] sm:$0xff]
        %v1167 = vld [vmem:[%s1156 + $0x50] sm:$0xff]
        %v1168 = vld [vmem:[%s1156 + $0x58] sm:$0xff]
        %v1169 = vld [vmem:[%s1156 + $0x60] sm:$0xff]
        %v1170 = vld [vmem:[%s1156 + $0x68] sm:$0xff]
        %v1171 = vld [vmem:[%s1156 + $0x70] sm:$0xff]
        %v1172 = vld [vmem:[%s1156 + $0x78] sm:$0xff]
        %v1173 = vld [vmem:[%s1156 + $0x80] sm:$0xff]
        %v1174 = vld [vmem:[%s1156 + $0x88] sm:$0xff]
        %v1193 = vunpack.c.l.b16 %v1157
        %v1194 = vunpack.c.h.b16 %v1157
        %v1195 = vunpack.c.l.b16 %v1158
        %v1196 = vunpack.c.h.b16 %v1158
        %v1197 = vunpack.c.l.b16 %v1159
        %v1198 = vunpack.c.h.b16 %v1159
        %v1199 = vunpack.c.l.b16 %v1160
        %v1200 = vunpack.c.h.b16 %v1160
        %v1201 = vunpack.c.l.b16 %v1161
        %v1202 = vunpack.c.h.b16 %v1161
        %v1203 = vunpack.c.l.b16 %v1162
        %v1204 = vunpack.c.h.b16 %v1162
        %v1205 = vunpack.c.l.b16 %v1163
        %v1206 = vunpack.c.h.b16 %v1163
        %v1207 = vunpack.c.l.b16 %v1164
        %v1208 = vunpack.c.h.b16 %v1164
        %v1209 = vunpack.c.l.b16 %v1165
        %v1210 = vunpack.c.h.b16 %v1165
        %v1211 = vunpack.c.l.b16 %v1166
        %v1212 = vunpack.c.h.b16 %v1166
        %v1213 = vunpack.c.l.b16 %v1167
        %v1214 = vunpack.c.h.b16 %v1167
        %v1215 = vunpack.c.l.b16 %v1168
        %v1216 = vunpack.c.h.b16 %v1168
        %v1217 = vunpack.c.l.b16 %v1169
        %v1218 = vunpack.c.h.b16 %v1169
        %v1219 = vunpack.c.l.b16 %v1170
        %v1220 = vunpack.c.h.b16 %v1170
        %v1221 = vunpack.c.l.b16 %v1171
        %v1222 = vunpack.c.h.b16 %v1171
        %v1223 = vunpack.c.l.b16 %v1172
        %v1224 = vunpack.c.h.b16 %v1172
        %v1225 = vunpack.c.l.b16 %v1173
        %v1226 = vunpack.c.h.b16 %v1173
        %v1227 = vunpack.c.l.b16 %v1174
        %v1228 = vunpack.c.h.b16 %v1174
        %v1229 = vpack.c.b16 %v1195, %v1193
        %v1230 = vpack.c.b16 %v1196, %v1194
        %v1231 = vpack.c.b16 %v1199, %v1197
        %v1232 = vpack.c.b16 %v1200, %v1198
        %v1233 = vpack.c.b16 %v1203, %v1201
        %v1234 = vpack.c.b16 %v1204, %v1202
        %v1235 = vpack.c.b16 %v1207, %v1205
        %v1236 = vpack.c.b16 %v1208, %v1206
        %v1237 = vpack.c.b16 %v1211, %v1209
        %v1238 = vpack.c.b16 %v1212, %v1210
        %v1239 = vpack.c.b16 %v1215, %v1213
        %v1240 = vpack.c.b16 %v1216, %v1214
        %v1241 = vpack.c.b16 %v1219, %v1217
        %v1242 = vpack.c.b16 %v1220, %v1218
        %v1243 = vpack.c.b16 %v1223, %v1221
        %v1244 = vpack.c.b16 %v1224, %v1222
        %v1245 = vpack.c.b16 %v1227, %v1225
        %v1246 = vpack.c.b16 %v1228, %v1226
        %v1266 = vsel %vm726, %v1155, 0
        %1268 = vmatprep.subr.bf16.mxu0 %v1244
        %1269 = vmatpush1.bf16.msra.mxu0 %v1243
        %1270 = vmatprep.subr.bf16.mxu0 %v1242
        %1271 = vmatpush1.bf16.msra.mxu0 %v1241
        %1272 = vmatprep.subr.bf16.mxu0 %v1240
        %1273 = vmatpush1.bf16.msra.mxu0 %v1239
        %1274 = vmatprep.subr.bf16.mxu0 %v1238
        %1275 = vmatpush1.bf16.msra.mxu0 %v1237
        %1276 = vmatprep.subr.bf16.mxu0 %v1236
        %1277 = vmatpush1.bf16.msra.mxu0 %v1235
        %1278 = vmatprep.subr.bf16.mxu0 %v1234
        %1279 = vmatpush1.bf16.msra.mxu0 %v1233
        %1280 = vmatprep.subr.bf16.mxu0 %v1232
        %1281 = vmatpush1.bf16.msra.mxu0 %v1231
        %1282 = vmatprep.subr.bf16.mxu0 %v1230
        %1283 = vmatpush1.bf16.msra.mxu0 %v1229
        %1284 = vmatprep.subr.bf16.mxu0 0
        %1285 = vmatpush2.bf16.msra.mxu0 0
        %1286 = vmatprep.subr.bf16.mxu0 0
        %1287 = vmatpush2.bf16.msra.mxu0 0
        %1288 = vmatprep.subr.bf16.mxu0 0
        %1289 = vmatpush2.bf16.msra.mxu0 0
        %1290 = vmatprep.subr.bf16.mxu0 0
        %1291 = vmatpush2.bf16.msra.mxu0 0
        %1292 = vmatprep.subr.bf16.mxu0 0
        %1293 = vmatpush2.bf16.msra.mxu0 0
        %1294 = vmatprep.subr.bf16.mxu0 0
        %1295 = vmatpush2.bf16.msra.mxu0 0
        %1296 = vmatprep.subr.bf16.mxu0 0
        %1297 = vmatpush2.bf16.msra.mxu0 0
        %1298 = vmatprep.subr.bf16.mxu0 %v1246
        %1299 = vmatpush2.bf16.msra.mxu0 %v1245
        %1300 = vmatprep.mubr.bf16.mxu0 %v1266
        %1301 = vmatmul.mubr.bf16.gmra.mxu0 %v1154
        %v1302 = vpop.f32.mrf.mxu0
        %v1303 = vadd.f32 0.0, %v1302
        %v1304 = vpop.f32.mrf.mxu0
        %v1305 = vadd.f32 0.0, %v1304
        %v1306 = vpop.f32.mrf.mxu0
        %v1307 = vpop.f32.mrf.mxu0
        %1308 = vdwg.mxu0
        %v1309 = vadd.f32 %v1106, %v1303
        %v1310 = vadd.f32 %v1107, %v1305
        %s1311 = scalar_lea.vmem %s1, 16
        %v1312 = vld [vmem:[%s1311] sm:$0xf]
        %v1314 = vsel %vm497, %v1312, 0
        %1316 = vmatprep.subr.bf16.mxu0 0
        %1317 = vmatpush1.bf16.msra.mxu0 0
        %1318 = vmatprep.subr.bf16.mxu0 0
        %1319 = vmatpush1.bf16.msra.mxu0 0
        %1320 = vmatprep.subr.bf16.mxu0 0
        %1321 = vmatpush1.bf16.msra.mxu0 0
        %1322 = vmatprep.subr.bf16.mxu0 0
        %1323 = vmatpush1.bf16.msra.mxu0 0
        %1324 = vmatprep.subr.bf16.mxu0 0
        %1325 = vmatpush1.bf16.msra.mxu0 0
        %1326 = vmatprep.subr.bf16.mxu0 %v506
        %1327 = vmatpush1.bf16.msra.mxu0 %v503
        %1328 = vmatprep.subr.bf16.mxu0 %v490
        %1329 = vmatpush1.bf16.msra.mxu0 %v489
        %1330 = vmatprep.subr.bf16.mxu0 %v488
        %1331 = vmatpush1.bf16.msra.mxu0 %v487
        %1332 = vmatprep.subr.bf16.mxu0 0
        %1333 = vmatpush2.bf16.msra.mxu0 0
        %1334 = vmatprep.subr.bf16.mxu0 0
        %1335 = vmatpush2.bf16.msra.mxu0 0
        %1336 = vmatprep.subr.bf16.mxu0 0
        %1337 = vmatpush2.bf16.msra.mxu0 0
        %1338 = vmatprep.subr.bf16.mxu0 0
        %1339 = vmatpush2.bf16.msra.mxu0 0
        %1340 = vmatprep.subr.bf16.mxu0 0
        %1341 = vmatpush2.bf16.msra.mxu0 0
        %1342 = vmatprep.subr.bf16.mxu0 0
        %1343 = vmatpush2.bf16.msra.mxu0 0
        %1344 = vmatprep.subr.bf16.mxu0 0
        %1345 = vmatpush2.bf16.msra.mxu0 0
        %1346 = vmatprep.subr.bf16.mxu0 0
        %1347 = vmatpush2.bf16.msra.mxu0 0
        %1348 = vmatprep.mubr.bf16.mxu0 0
        %1349 = vmatmul.mubr.bf16.gmra.mxu0 %v1314
        %v1350 = vpop.f32.mrf.mxu0
        %v1351 = vadd.f32 0.0, %v1350
        %v1352 = vpop.f32.mrf.mxu0
        %v1353 = vadd.f32 0.0, %v1352
        %v1354 = vpop.f32.mrf.mxu0
        %v1355 = vpop.f32.mrf.mxu0
        %1356 = vdwg.mxu0
        %v1357 = vpack.c.bf16 %v1351, %v1351
        %v1358 = vpack.c.bf16 %v1353, %v1353
        %s1359 = scalar_lea.vmem %s2, 576
        %v1360 = vld [vmem:[%s1359] sm:$0xff]
        %v1361 = vld [vmem:[%s1359 + $0x8] sm:$0xff]
        %v1362 = vld [vmem:[%s1359 + $0x10] sm:$0xff]
        %v1363 = vld [vmem:[%s1359 + $0x18] sm:$0xff]
        %v1364 = vld [vmem:[%s1359 + $0x20] sm:$0xff]
        %v1365 = vld [vmem:[%s1359 + $0x28] sm:$0xff]
        %v1366 = vld [vmem:[%s1359 + $0x30] sm:$0xff]
        %v1367 = vld [vmem:[%s1359 + $0x38] sm:$0xff]
        %v1368 = vld [vmem:[%s1359 + $0x40] sm:$0xff]
        %v1369 = vld [vmem:[%s1359 + $0x48] sm:$0xff]
        %v1370 = vld [vmem:[%s1359 + $0x50] sm:$0xff]
        %v1371 = vld [vmem:[%s1359 + $0x58] sm:$0xff]
        %v1372 = vld [vmem:[%s1359 + $0x60] sm:$0xff]
        %v1373 = vld [vmem:[%s1359 + $0x68] sm:$0xff]
        %v1374 = vld [vmem:[%s1359 + $0x70] sm:$0xff]
        %v1375 = vld [vmem:[%s1359 + $0x78] sm:$0xff]
        %v1376 = vld [vmem:[%s1359 + $0x80] sm:$0xff]
        %v1377 = vld [vmem:[%s1359 + $0x88] sm:$0xff]
        %v1396 = vunpack.c.l.b16 %v1360
        %v1397 = vunpack.c.h.b16 %v1360
        %v1398 = vunpack.c.l.b16 %v1361
        %v1399 = vunpack.c.h.b16 %v1361
        %v1400 = vunpack.c.l.b16 %v1362
        %v1401 = vunpack.c.h.b16 %v1362
        %v1402 = vunpack.c.l.b16 %v1363
        %v1403 = vunpack.c.h.b16 %v1363
        %v1404 = vunpack.c.l.b16 %v1364
        %v1405 = vunpack.c.h.b16 %v1364
        %v1406 = vunpack.c.l.b16 %v1365
        %v1407 = vunpack.c.h.b16 %v1365
        %v1408 = vunpack.c.l.b16 %v1366
        %v1409 = vunpack.c.h.b16 %v1366
        %v1410 = vunpack.c.l.b16 %v1367
        %v1411 = vunpack.c.h.b16 %v1367
        %v1412 = vunpack.c.l.b16 %v1368
        %v1413 = vunpack.c.h.b16 %v1368
        %v1414 = vunpack.c.l.b16 %v1369
        %v1415 = vunpack.c.h.b16 %v1369
        %v1416 = vunpack.c.l.b16 %v1370
        %v1417 = vunpack.c.h.b16 %v1370
        %v1418 = vunpack.c.l.b16 %v1371
        %v1419 = vunpack.c.h.b16 %v1371
        %v1420 = vunpack.c.l.b16 %v1372
        %v1421 = vunpack.c.h.b16 %v1372
        %v1422 = vunpack.c.l.b16 %v1373
        %v1423 = vunpack.c.h.b16 %v1373
        %v1424 = vunpack.c.l.b16 %v1374
        %v1425 = vunpack.c.h.b16 %v1374
        %v1426 = vunpack.c.l.b16 %v1375
        %v1427 = vunpack.c.h.b16 %v1375
        %v1428 = vunpack.c.l.b16 %v1376
        %v1429 = vunpack.c.h.b16 %v1376
        %v1430 = vunpack.c.l.b16 %v1377
        %v1431 = vunpack.c.h.b16 %v1377
        %v1432 = vpack.c.b16 %v1398, %v1396
        %v1433 = vpack.c.b16 %v1399, %v1397
        %v1434 = vpack.c.b16 %v1402, %v1400
        %v1435 = vpack.c.b16 %v1403, %v1401
        %v1436 = vpack.c.b16 %v1406, %v1404
        %v1437 = vpack.c.b16 %v1407, %v1405
        %v1438 = vpack.c.b16 %v1410, %v1408
        %v1439 = vpack.c.b16 %v1411, %v1409
        %v1440 = vpack.c.b16 %v1414, %v1412
        %v1441 = vpack.c.b16 %v1415, %v1413
        %v1442 = vpack.c.b16 %v1418, %v1416
        %v1443 = vpack.c.b16 %v1419, %v1417
        %v1444 = vpack.c.b16 %v1422, %v1420
        %v1445 = vpack.c.b16 %v1423, %v1421
        %v1446 = vpack.c.b16 %v1426, %v1424
        %v1447 = vpack.c.b16 %v1427, %v1425
        %v1448 = vpack.c.b16 %v1430, %v1428
        %v1449 = vpack.c.b16 %v1431, %v1429
        %v1469 = vsel %vm726, %v1358, 0
        %1471 = vmatprep.subr.bf16.mxu0 %v1447
        %1472 = vmatpush1.bf16.msra.mxu0 %v1446
        %1473 = vmatprep.subr.bf16.mxu0 %v1445
        %1474 = vmatpush1.bf16.msra.mxu0 %v1444
        %1475 = vmatprep.subr.bf16.mxu0 %v1443
        %1476 = vmatpush1.bf16.msra.mxu0 %v1442
        %1477 = vmatprep.subr.bf16.mxu0 %v1441
        %1478 = vmatpush1.bf16.msra.mxu0 %v1440
        %1479 = vmatprep.subr.bf16.mxu0 %v1439
        %1480 = vmatpush1.bf16.msra.mxu0 %v1438
        %1481 = vmatprep.subr.bf16.mxu0 %v1437
        %1482 = vmatpush1.bf16.msra.mxu0 %v1436
        %1483 = vmatprep.subr.bf16.mxu0 %v1435
        %1484 = vmatpush1.bf16.msra.mxu0 %v1434
        %1485 = vmatprep.subr.bf16.mxu0 %v1433
        %1486 = vmatpush1.bf16.msra.mxu0 %v1432
        %1487 = vmatprep.subr.bf16.mxu0 0
        %1488 = vmatpush2.bf16.msra.mxu0 0
        %1489 = vmatprep.subr.bf16.mxu0 0
        %1490 = vmatpush2.bf16.msra.mxu0 0
        %1491 = vmatprep.subr.bf16.mxu0 0
        %1492 = vmatpush2.bf16.msra.mxu0 0
        %1493 = vmatprep.subr.bf16.mxu0 0
        %1494 = vmatpush2.bf16.msra.mxu0 0
        %1495 = vmatprep.subr.bf16.mxu0 0
        %1496 = vmatpush2.bf16.msra.mxu0 0
        %1497 = vmatprep.subr.bf16.mxu0 0
        %1498 = vmatpush2.bf16.msra.mxu0 0
        %1499 = vmatprep.subr.bf16.mxu0 0
        %1500 = vmatpush2.bf16.msra.mxu0 0
        %1501 = vmatprep.subr.bf16.mxu0 %v1449
        %1502 = vmatpush2.bf16.msra.mxu0 %v1448
        %1503 = vmatprep.mubr.bf16.mxu0 %v1469
        %1504 = vmatmul.mubr.bf16.gmra.mxu0 %v1357
        %v1505 = vpop.f32.mrf.mxu0
        %v1506 = vadd.f32 0.0, %v1505
        %v1507 = vpop.f32.mrf.mxu0
        %v1508 = vadd.f32 0.0, %v1507
        %v1509 = vpop.f32.mrf.mxu0
        %v1510 = vpop.f32.mrf.mxu0
        %1511 = vdwg.mxu0
        %v1512 = vadd.f32 %v1309, %v1506
        %v1513 = vadd.f32 %v1310, %v1508
        %s1514 = scalar_lea.vmem %s1, 20
        %v1515 = vld [vmem:[%s1514] sm:$0xf]
        %v1517 = vsel %vm497, %v1515, 0
        %1519 = vmatprep.subr.bf16.mxu0 0
        %1520 = vmatpush1.bf16.msra.mxu0 0
        %1521 = vmatprep.subr.bf16.mxu0 0
        %1522 = vmatpush1.bf16.msra.mxu0 0
        %1523 = vmatprep.subr.bf16.mxu0 0
        %1524 = vmatpush1.bf16.msra.mxu0 0
        %1525 = vmatprep.subr.bf16.mxu0 0
        %1526 = vmatpush1.bf16.msra.mxu0 0
        %1527 = vmatprep.subr.bf16.mxu0 0
        %1528 = vmatpush1.bf16.msra.mxu0 0
        %1529 = vmatprep.subr.bf16.mxu0 %v506
        %1530 = vmatpush1.bf16.msra.mxu0 %v503
        %1531 = vmatprep.subr.bf16.mxu0 %v490
        %1532 = vmatpush1.bf16.msra.mxu0 %v489
        %1533 = vmatprep.subr.bf16.mxu0 %v488
        %1534 = vmatpush1.bf16.msra.mxu0 %v487
        %1535 = vmatprep.subr.bf16.mxu0 0
        %1536 = vmatpush2.bf16.msra.mxu0 0
        %1537 = vmatprep.subr.bf16.mxu0 0
        %1538 = vmatpush2.bf16.msra.mxu0 0
        %1539 = vmatprep.subr.bf16.mxu0 0
        %1540 = vmatpush2.bf16.msra.mxu0 0
        %1541 = vmatprep.subr.bf16.mxu0 0
        %1542 = vmatpush2.bf16.msra.mxu0 0
        %1543 = vmatprep.subr.bf16.mxu0 0
        %1544 = vmatpush2.bf16.msra.mxu0 0
        %1545 = vmatprep.subr.bf16.mxu0 0
        %1546 = vmatpush2.bf16.msra.mxu0 0
        %1547 = vmatprep.subr.bf16.mxu0 0
        %1548 = vmatpush2.bf16.msra.mxu0 0
        %1549 = vmatprep.subr.bf16.mxu0 0
        %1550 = vmatpush2.bf16.msra.mxu0 0
        %1551 = vmatprep.mubr.bf16.mxu0 0
        %1552 = vmatmul.mubr.bf16.gmra.mxu0 %v1517
        %v1553 = vpop.f32.mrf.mxu0
        %v1554 = vadd.f32 0.0, %v1553
        %v1555 = vpop.f32.mrf.mxu0
        %v1556 = vadd.f32 0.0, %v1555
        %v1557 = vpop.f32.mrf.mxu0
        %v1558 = vpop.f32.mrf.mxu0
        %1559 = vdwg.mxu0
        %v1560 = vpack.c.bf16 %v1554, %v1554
        %v1561 = vpack.c.bf16 %v1556, %v1556
        %s1562 = scalar_lea.vmem %s2, 720
        %v1563 = vld [vmem:[%s1562] sm:$0xff]
        %v1564 = vld [vmem:[%s1562 + $0x8] sm:$0xff]
        %v1565 = vld [vmem:[%s1562 + $0x10] sm:$0xff]
        %v1566 = vld [vmem:[%s1562 + $0x18] sm:$0xff]
        %v1567 = vld [vmem:[%s1562 + $0x20] sm:$0xff]
        %v1568 = vld [vmem:[%s1562 + $0x28] sm:$0xff]
        %v1569 = vld [vmem:[%s1562 + $0x30] sm:$0xff]
        %v1570 = vld [vmem:[%s1562 + $0x38] sm:$0xff]
        %v1571 = vld [vmem:[%s1562 + $0x40] sm:$0xff]
        %v1572 = vld [vmem:[%s1562 + $0x48] sm:$0xff]
        %v1573 = vld [vmem:[%s1562 + $0x50] sm:$0xff]
        %v1574 = vld [vmem:[%s1562 + $0x58] sm:$0xff]
        %v1575 = vld [vmem:[%s1562 + $0x60] sm:$0xff]
        %v1576 = vld [vmem:[%s1562 + $0x68] sm:$0xff]
        %v1577 = vld [vmem:[%s1562 + $0x70] sm:$0xff]
        %v1578 = vld [vmem:[%s1562 + $0x78] sm:$0xff]
        %v1579 = vld [vmem:[%s1562 + $0x80] sm:$0xff]
        %v1580 = vld [vmem:[%s1562 + $0x88] sm:$0xff]
        %v1599 = vunpack.c.l.b16 %v1563
        %v1600 = vunpack.c.h.b16 %v1563
        %v1601 = vunpack.c.l.b16 %v1564
        %v1602 = vunpack.c.h.b16 %v1564
        %v1603 = vunpack.c.l.b16 %v1565
        %v1604 = vunpack.c.h.b16 %v1565
        %v1605 = vunpack.c.l.b16 %v1566
        %v1606 = vunpack.c.h.b16 %v1566
        %v1607 = vunpack.c.l.b16 %v1567
        %v1608 = vunpack.c.h.b16 %v1567
        %v1609 = vunpack.c.l.b16 %v1568
        %v1610 = vunpack.c.h.b16 %v1568
        %v1611 = vunpack.c.l.b16 %v1569
        %v1612 = vunpack.c.h.b16 %v1569
        %v1613 = vunpack.c.l.b16 %v1570
        %v1614 = vunpack.c.h.b16 %v1570
        %v1615 = vunpack.c.l.b16 %v1571
        %v1616 = vunpack.c.h.b16 %v1571
        %v1617 = vunpack.c.l.b16 %v1572
        %v1618 = vunpack.c.h.b16 %v1572
        %v1619 = vunpack.c.l.b16 %v1573
        %v1620 = vunpack.c.h.b16 %v1573
        %v1621 = vunpack.c.l.b16 %v1574
        %v1622 = vunpack.c.h.b16 %v1574
        %v1623 = vunpack.c.l.b16 %v1575
        %v1624 = vunpack.c.h.b16 %v1575
        %v1625 = vunpack.c.l.b16 %v1576
        %v1626 = vunpack.c.h.b16 %v1576
        %v1627 = vunpack.c.l.b16 %v1577
        %v1628 = vunpack.c.h.b16 %v1577
        %v1629 = vunpack.c.l.b16 %v1578
        %v1630 = vunpack.c.h.b16 %v1578
        %v1631 = vunpack.c.l.b16 %v1579
        %v1632 = vunpack.c.h.b16 %v1579
        %v1633 = vunpack.c.l.b16 %v1580
        %v1634 = vunpack.c.h.b16 %v1580
        %v1635 = vpack.c.b16 %v1601, %v1599
        %v1636 = vpack.c.b16 %v1602, %v1600
        %v1637 = vpack.c.b16 %v1605, %v1603
        %v1638 = vpack.c.b16 %v1606, %v1604
        %v1639 = vpack.c.b16 %v1609, %v1607
        %v1640 = vpack.c.b16 %v1610, %v1608
        %v1641 = vpack.c.b16 %v1613, %v1611
        %v1642 = vpack.c.b16 %v1614, %v1612
        %v1643 = vpack.c.b16 %v1617, %v1615
        %v1644 = vpack.c.b16 %v1618, %v1616
        %v1645 = vpack.c.b16 %v1621, %v1619
        %v1646 = vpack.c.b16 %v1622, %v1620
        %v1647 = vpack.c.b16 %v1625, %v1623
        %v1648 = vpack.c.b16 %v1626, %v1624
        %v1649 = vpack.c.b16 %v1629, %v1627
        %v1650 = vpack.c.b16 %v1630, %v1628
        %v1651 = vpack.c.b16 %v1633, %v1631
        %v1652 = vpack.c.b16 %v1634, %v1632
        %v1672 = vsel %vm726, %v1561, 0
        %1674 = vmatprep.subr.bf16.mxu0 %v1650
        %1675 = vmatpush1.bf16.msra.mxu0 %v1649
        %1676 = vmatprep.subr.bf16.mxu0 %v1648
        %1677 = vmatpush1.bf16.msra.mxu0 %v1647
        %1678 = vmatprep.subr.bf16.mxu0 %v1646
        %1679 = vmatpush1.bf16.msra.mxu0 %v1645
        %1680 = vmatprep.subr.bf16.mxu0 %v1644
        %1681 = vmatpush1.bf16.msra.mxu0 %v1643
        %1682 = vmatprep.subr.bf16.mxu0 %v1642
        %1683 = vmatpush1.bf16.msra.mxu0 %v1641
        %1684 = vmatprep.subr.bf16.mxu0 %v1640
        %1685 = vmatpush1.bf16.msra.mxu0 %v1639
        %1686 = vmatprep.subr.bf16.mxu0 %v1638
        %1687 = vmatpush1.bf16.msra.mxu0 %v1637
        %1688 = vmatprep.subr.bf16.mxu0 %v1636
        %1689 = vmatpush1.bf16.msra.mxu0 %v1635
        %1690 = vmatprep.subr.bf16.mxu0 0
        %1691 = vmatpush2.bf16.msra.mxu0 0
        %1692 = vmatprep.subr.bf16.mxu0 0
        %1693 = vmatpush2.bf16.msra.mxu0 0
        %1694 = vmatprep.subr.bf16.mxu0 0
        %1695 = vmatpush2.bf16.msra.mxu0 0
        %1696 = vmatprep.subr.bf16.mxu0 0
        %1697 = vmatpush2.bf16.msra.mxu0 0
        %1698 = vmatprep.subr.bf16.mxu0 0
        %1699 = vmatpush2.bf16.msra.mxu0 0
        %1700 = vmatprep.subr.bf16.mxu0 0
        %1701 = vmatpush2.bf16.msra.mxu0 0
        %1702 = vmatprep.subr.bf16.mxu0 0
        %1703 = vmatpush2.bf16.msra.mxu0 0
        %1704 = vmatprep.subr.bf16.mxu0 %v1652
        %1705 = vmatpush2.bf16.msra.mxu0 %v1651
        %1706 = vmatprep.mubr.bf16.mxu0 %v1672
        %1707 = vmatmul.mubr.bf16.gmra.mxu0 %v1560
        %v1708 = vpop.f32.mrf.mxu0
        %v1709 = vadd.f32 0.0, %v1708
        %v1710 = vpop.f32.mrf.mxu0
        %v1711 = vadd.f32 0.0, %v1710
        %v1712 = vpop.f32.mrf.mxu0
        %v1713 = vpop.f32.mrf.mxu0
        %1714 = vdwg.mxu0
        %v1715 = vadd.f32 %v1512, %v1709
        %v1716 = vadd.f32 %v1513, %v1711
        %s1717 = scalar_lea.vmem %s1, 24
        %v1718 = vld [vmem:[%s1717] sm:$0xf]
        %v1720 = vsel %vm497, %v1718, 0
        %1722 = vmatprep.subr.bf16.mxu0 0
        %1723 = vmatpush1.bf16.msra.mxu0 0
        %1724 = vmatprep.subr.bf16.mxu0 0
        %1725 = vmatpush1.bf16.msra.mxu0 0
        %1726 = vmatprep.subr.bf16.mxu0 0
        %1727 = vmatpush1.bf16.msra.mxu0 0
        %1728 = vmatprep.subr.bf16.mxu0 0
        %1729 = vmatpush1.bf16.msra.mxu0 0
        %1730 = vmatprep.subr.bf16.mxu0 0
        %1731 = vmatpush1.bf16.msra.mxu0 0
        %1732 = vmatprep.subr.bf16.mxu0 %v506
        %1733 = vmatpush1.bf16.msra.mxu0 %v503
        %1734 = vmatprep.subr.bf16.mxu0 %v490
        %1735 = vmatpush1.bf16.msra.mxu0 %v489
        %1736 = vmatprep.subr.bf16.mxu0 %v488
        %1737 = vmatpush1.bf16.msra.mxu0 %v487
        %1738 = vmatprep.subr.bf16.mxu0 0
        %1739 = vmatpush2.bf16.msra.mxu0 0
        %1740 = vmatprep.subr.bf16.mxu0 0
        %1741 = vmatpush2.bf16.msra.mxu0 0
        %1742 = vmatprep.subr.bf16.mxu0 0
        %1743 = vmatpush2.bf16.msra.mxu0 0
        %1744 = vmatprep.subr.bf16.mxu0 0
        %1745 = vmatpush2.bf16.msra.mxu0 0
        %1746 = vmatprep.subr.bf16.mxu0 0
        %1747 = vmatpush2.bf16.msra.mxu0 0
        %1748 = vmatprep.subr.bf16.mxu0 0
        %1749 = vmatpush2.bf16.msra.mxu0 0
        %1750 = vmatprep.subr.bf16.mxu0 0
        %1751 = vmatpush2.bf16.msra.mxu0 0
        %1752 = vmatprep.subr.bf16.mxu0 0
        %1753 = vmatpush2.bf16.msra.mxu0 0
        %1754 = vmatprep.mubr.bf16.mxu0 0
        %1755 = vmatmul.mubr.bf16.gmra.mxu0 %v1720
        %v1756 = vpop.f32.mrf.mxu0
        %v1757 = vadd.f32 0.0, %v1756
        %v1758 = vpop.f32.mrf.mxu0
        %v1759 = vadd.f32 0.0, %v1758
        %v1760 = vpop.f32.mrf.mxu0
        %v1761 = vpop.f32.mrf.mxu0
        %1762 = vdwg.mxu0
        %v1763 = vpack.c.bf16 %v1757, %v1757
        %v1764 = vpack.c.bf16 %v1759, %v1759
        %s1765 = scalar_lea.vmem %s2, 864
        %v1766 = vld [vmem:[%s1765] sm:$0xff]
        %v1767 = vld [vmem:[%s1765 + $0x8] sm:$0xff]
        %v1768 = vld [vmem:[%s1765 + $0x10] sm:$0xff]
        %v1769 = vld [vmem:[%s1765 + $0x18] sm:$0xff]
        %v1770 = vld [vmem:[%s1765 + $0x20] sm:$0xff]
        %v1771 = vld [vmem:[%s1765 + $0x28] sm:$0xff]
        %v1772 = vld [vmem:[%s1765 + $0x30] sm:$0xff]
        %v1773 = vld [vmem:[%s1765 + $0x38] sm:$0xff]
        %v1774 = vld [vmem:[%s1765 + $0x40] sm:$0xff]
        %v1775 = vld [vmem:[%s1765 + $0x48] sm:$0xff]
        %v1776 = vld [vmem:[%s1765 + $0x50] sm:$0xff]
        %v1777 = vld [vmem:[%s1765 + $0x58] sm:$0xff]
        %v1778 = vld [vmem:[%s1765 + $0x60] sm:$0xff]
        %v1779 = vld [vmem:[%s1765 + $0x68] sm:$0xff]
        %v1780 = vld [vmem:[%s1765 + $0x70] sm:$0xff]
        %v1781 = vld [vmem:[%s1765 + $0x78] sm:$0xff]
        %v1782 = vld [vmem:[%s1765 + $0x80] sm:$0xff]
        %v1783 = vld [vmem:[%s1765 + $0x88] sm:$0xff]
        %v1802 = vunpack.c.l.b16 %v1766
        %v1803 = vunpack.c.h.b16 %v1766
        %v1804 = vunpack.c.l.b16 %v1767
        %v1805 = vunpack.c.h.b16 %v1767
        %v1806 = vunpack.c.l.b16 %v1768
        %v1807 = vunpack.c.h.b16 %v1768
        %v1808 = vunpack.c.l.b16 %v1769
        %v1809 = vunpack.c.h.b16 %v1769
        %v1810 = vunpack.c.l.b16 %v1770
        %v1811 = vunpack.c.h.b16 %v1770
        %v1812 = vunpack.c.l.b16 %v1771
        %v1813 = vunpack.c.h.b16 %v1771
        %v1814 = vunpack.c.l.b16 %v1772
        %v1815 = vunpack.c.h.b16 %v1772
        %v1816 = vunpack.c.l.b16 %v1773
        %v1817 = vunpack.c.h.b16 %v1773
        %v1818 = vunpack.c.l.b16 %v1774
        %v1819 = vunpack.c.h.b16 %v1774
        %v1820 = vunpack.c.l.b16 %v1775
        %v1821 = vunpack.c.h.b16 %v1775
        %v1822 = vunpack.c.l.b16 %v1776
        %v1823 = vunpack.c.h.b16 %v1776
        %v1824 = vunpack.c.l.b16 %v1777
        %v1825 = vunpack.c.h.b16 %v1777
        %v1826 = vunpack.c.l.b16 %v1778
        %v1827 = vunpack.c.h.b16 %v1778
        %v1828 = vunpack.c.l.b16 %v1779
        %v1829 = vunpack.c.h.b16 %v1779
        %v1830 = vunpack.c.l.b16 %v1780
        %v1831 = vunpack.c.h.b16 %v1780
        %v1832 = vunpack.c.l.b16 %v1781
        %v1833 = vunpack.c.h.b16 %v1781
        %v1834 = vunpack.c.l.b16 %v1782
        %v1835 = vunpack.c.h.b16 %v1782
        %v1836 = vunpack.c.l.b16 %v1783
        %v1837 = vunpack.c.h.b16 %v1783
        %v1838 = vpack.c.b16 %v1804, %v1802
        %v1839 = vpack.c.b16 %v1805, %v1803
        %v1840 = vpack.c.b16 %v1808, %v1806
        %v1841 = vpack.c.b16 %v1809, %v1807
        %v1842 = vpack.c.b16 %v1812, %v1810
        %v1843 = vpack.c.b16 %v1813, %v1811
        %v1844 = vpack.c.b16 %v1816, %v1814
        %v1845 = vpack.c.b16 %v1817, %v1815
        %v1846 = vpack.c.b16 %v1820, %v1818
        %v1847 = vpack.c.b16 %v1821, %v1819
        %v1848 = vpack.c.b16 %v1824, %v1822
        %v1849 = vpack.c.b16 %v1825, %v1823
        %v1850 = vpack.c.b16 %v1828, %v1826
        %v1851 = vpack.c.b16 %v1829, %v1827
        %v1852 = vpack.c.b16 %v1832, %v1830
        %v1853 = vpack.c.b16 %v1833, %v1831
        %v1854 = vpack.c.b16 %v1836, %v1834
        %v1855 = vpack.c.b16 %v1837, %v1835
        %v1875 = vsel %vm726, %v1764, 0
        %1877 = vmatprep.subr.bf16.mxu0 %v1853
        %1878 = vmatpush1.bf16.msra.mxu0 %v1852
        %1879 = vmatprep.subr.bf16.mxu0 %v1851
        %1880 = vmatpush1.bf16.msra.mxu0 %v1850
        %1881 = vmatprep.subr.bf16.mxu0 %v1849
        %1882 = vmatpush1.bf16.msra.mxu0 %v1848
        %1883 = vmatprep.subr.bf16.mxu0 %v1847
        %1884 = vmatpush1.bf16.msra.mxu0 %v1846
        %1885 = vmatprep.subr.bf16.mxu0 %v1845
        %1886 = vmatpush1.bf16.msra.mxu0 %v1844
        %1887 = vmatprep.subr.bf16.mxu0 %v1843
        %1888 = vmatpush1.bf16.msra.mxu0 %v1842
        %1889 = vmatprep.subr.bf16.mxu0 %v1841
        %1890 = vmatpush1.bf16.msra.mxu0 %v1840
        %1891 = vmatprep.subr.bf16.mxu0 %v1839
        %1892 = vmatpush1.bf16.msra.mxu0 %v1838
        %1893 = vmatprep.subr.bf16.mxu0 0
        %1894 = vmatpush2.bf16.msra.mxu0 0
        %1895 = vmatprep.subr.bf16.mxu0 0
        %1896 = vmatpush2.bf16.msra.mxu0 0
        %1897 = vmatprep.subr.bf16.mxu0 0
        %1898 = vmatpush2.bf16.msra.mxu0 0
        %1899 = vmatprep.subr.bf16.mxu0 0
        %1900 = vmatpush2.bf16.msra.mxu0 0
        %1901 = vmatprep.subr.bf16.mxu0 0
        %1902 = vmatpush2.bf16.msra.mxu0 0
        %1903 = vmatprep.subr.bf16.mxu0 0
        %1904 = vmatpush2.bf16.msra.mxu0 0
        %1905 = vmatprep.subr.bf16.mxu0 0
        %1906 = vmatpush2.bf16.msra.mxu0 0
        %1907 = vmatprep.subr.bf16.mxu0 %v1855
        %1908 = vmatpush2.bf16.msra.mxu0 %v1854
        %1909 = vmatprep.mubr.bf16.mxu0 %v1875
        %1910 = vmatmul.mubr.bf16.gmra.mxu0 %v1763
        %v1911 = vpop.f32.mrf.mxu0
        %v1912 = vadd.f32 0.0, %v1911
        %v1913 = vpop.f32.mrf.mxu0
        %v1914 = vadd.f32 0.0, %v1913
        %v1915 = vpop.f32.mrf.mxu0
        %v1916 = vpop.f32.mrf.mxu0
        %1917 = vdwg.mxu0
        %v1918 = vadd.f32 %v1715, %v1912
        %v1919 = vadd.f32 %v1716, %v1914
        %s1920 = scalar_lea.vmem %s1, 28
        %v1921 = vld [vmem:[%s1920] sm:$0xf]
        %v1923 = vsel %vm497, %v1921, 0
        %1925 = vmatprep.subr.bf16.mxu0 0
        %1926 = vmatpush1.bf16.msra.mxu0 0
        %1927 = vmatprep.subr.bf16.mxu0 0
        %1928 = vmatpush1.bf16.msra.mxu0 0
        %1929 = vmatprep.subr.bf16.mxu0 0
        %1930 = vmatpush1.bf16.msra.mxu0 0
        %1931 = vmatprep.subr.bf16.mxu0 0
        %1932 = vmatpush1.bf16.msra.mxu0 0
        %1933 = vmatprep.subr.bf16.mxu0 0
        %1934 = vmatpush1.bf16.msra.mxu0 0
        %1935 = vmatprep.subr.bf16.mxu0 %v506
        %1936 = vmatpush1.bf16.msra.mxu0 %v503
        %1937 = vmatprep.subr.bf16.mxu0 %v490
        %1938 = vmatpush1.bf16.msra.mxu0 %v489
        %1939 = vmatprep.subr.bf16.mxu0 %v488
        %1940 = vmatpush1.bf16.msra.mxu0 %v487
        %1941 = vmatprep.subr.bf16.mxu0 0
        %1942 = vmatpush2.bf16.msra.mxu0 0
        %1943 = vmatprep.subr.bf16.mxu0 0
        %1944 = vmatpush2.bf16.msra.mxu0 0
        %1945 = vmatprep.subr.bf16.mxu0 0
        %1946 = vmatpush2.bf16.msra.mxu0 0
        %1947 = vmatprep.subr.bf16.mxu0 0
        %1948 = vmatpush2.bf16.msra.mxu0 0
        %1949 = vmatprep.subr.bf16.mxu0 0
        %1950 = vmatpush2.bf16.msra.mxu0 0
        %1951 = vmatprep.subr.bf16.mxu0 0
        %1952 = vmatpush2.bf16.msra.mxu0 0
        %1953 = vmatprep.subr.bf16.mxu0 0
        %1954 = vmatpush2.bf16.msra.mxu0 0
        %1955 = vmatprep.subr.bf16.mxu0 0
        %1956 = vmatpush2.bf16.msra.mxu0 0
        %1957 = vmatprep.mubr.bf16.mxu0 0
        %1958 = vmatmul.mubr.bf16.gmra.mxu0 %v1923
        %v1959 = vpop.f32.mrf.mxu0
        %v1960 = vadd.f32 0.0, %v1959
        %v1961 = vpop.f32.mrf.mxu0
        %v1962 = vadd.f32 0.0, %v1961
        %v1963 = vpop.f32.mrf.mxu0
        %v1964 = vpop.f32.mrf.mxu0
        %1965 = vdwg.mxu0
        %v1966 = vpack.c.bf16 %v1960, %v1960
        %v1967 = vpack.c.bf16 %v1962, %v1962
        %s1968 = scalar_lea.vmem %s2, 1008
        %v1969 = vld [vmem:[%s1968] sm:$0xff]
        %v1970 = vld [vmem:[%s1968 + $0x8] sm:$0xff]
        %v1971 = vld [vmem:[%s1968 + $0x10] sm:$0xff]
        %v1972 = vld [vmem:[%s1968 + $0x18] sm:$0xff]
        %v1973 = vld [vmem:[%s1968 + $0x20] sm:$0xff]
        %v1974 = vld [vmem:[%s1968 + $0x28] sm:$0xff]
        %v1975 = vld [vmem:[%s1968 + $0x30] sm:$0xff]
        %v1976 = vld [vmem:[%s1968 + $0x38] sm:$0xff]
        %v1977 = vld [vmem:[%s1968 + $0x40] sm:$0xff]
        %v1978 = vld [vmem:[%s1968 + $0x48] sm:$0xff]
        %v1979 = vld [vmem:[%s1968 + $0x50] sm:$0xff]
        %v1980 = vld [vmem:[%s1968 + $0x58] sm:$0xff]
        %v1981 = vld [vmem:[%s1968 + $0x60] sm:$0xff]
        %v1982 = vld [vmem:[%s1968 + $0x68] sm:$0xff]
        %v1983 = vld [vmem:[%s1968 + $0x70] sm:$0xff]
        %v1984 = vld [vmem:[%s1968 + $0x78] sm:$0xff]
        %v1985 = vld [vmem:[%s1968 + $0x80] sm:$0xff]
        %v1986 = vld [vmem:[%s1968 + $0x88] sm:$0xff]
        %v2005 = vunpack.c.l.b16 %v1969
        %v2006 = vunpack.c.h.b16 %v1969
        %v2007 = vunpack.c.l.b16 %v1970
        %v2008 = vunpack.c.h.b16 %v1970
        %v2009 = vunpack.c.l.b16 %v1971
        %v2010 = vunpack.c.h.b16 %v1971
        %v2011 = vunpack.c.l.b16 %v1972
        %v2012 = vunpack.c.h.b16 %v1972
        %v2013 = vunpack.c.l.b16 %v1973
        %v2014 = vunpack.c.h.b16 %v1973
        %v2015 = vunpack.c.l.b16 %v1974
        %v2016 = vunpack.c.h.b16 %v1974
        %v2017 = vunpack.c.l.b16 %v1975
        %v2018 = vunpack.c.h.b16 %v1975
        %v2019 = vunpack.c.l.b16 %v1976
        %v2020 = vunpack.c.h.b16 %v1976
        %v2021 = vunpack.c.l.b16 %v1977
        %v2022 = vunpack.c.h.b16 %v1977
        %v2023 = vunpack.c.l.b16 %v1978
        %v2024 = vunpack.c.h.b16 %v1978
        %v2025 = vunpack.c.l.b16 %v1979
        %v2026 = vunpack.c.h.b16 %v1979
        %v2027 = vunpack.c.l.b16 %v1980
        %v2028 = vunpack.c.h.b16 %v1980
        %v2029 = vunpack.c.l.b16 %v1981
        %v2030 = vunpack.c.h.b16 %v1981
        %v2031 = vunpack.c.l.b16 %v1982
        %v2032 = vunpack.c.h.b16 %v1982
        %v2033 = vunpack.c.l.b16 %v1983
        %v2034 = vunpack.c.h.b16 %v1983
        %v2035 = vunpack.c.l.b16 %v1984
        %v2036 = vunpack.c.h.b16 %v1984
        %v2037 = vunpack.c.l.b16 %v1985
        %v2038 = vunpack.c.h.b16 %v1985
        %v2039 = vunpack.c.l.b16 %v1986
        %v2040 = vunpack.c.h.b16 %v1986
        %v2041 = vpack.c.b16 %v2007, %v2005
        %v2042 = vpack.c.b16 %v2008, %v2006
        %v2043 = vpack.c.b16 %v2011, %v2009
        %v2044 = vpack.c.b16 %v2012, %v2010
        %v2045 = vpack.c.b16 %v2015, %v2013
        %v2046 = vpack.c.b16 %v2016, %v2014
        %v2047 = vpack.c.b16 %v2019, %v2017
        %v2048 = vpack.c.b16 %v2020, %v2018
        %v2049 = vpack.c.b16 %v2023, %v2021
        %v2050 = vpack.c.b16 %v2024, %v2022
        %v2051 = vpack.c.b16 %v2027, %v2025
        %v2052 = vpack.c.b16 %v2028, %v2026
        %v2053 = vpack.c.b16 %v2031, %v2029
        %v2054 = vpack.c.b16 %v2032, %v2030
        %v2055 = vpack.c.b16 %v2035, %v2033
        %v2056 = vpack.c.b16 %v2036, %v2034
        %v2057 = vpack.c.b16 %v2039, %v2037
        %v2058 = vpack.c.b16 %v2040, %v2038
        %v2078 = vsel %vm726, %v1967, 0
        %2080 = vmatprep.subr.bf16.mxu0 %v2056
        %2081 = vmatpush1.bf16.msra.mxu0 %v2055
        %2082 = vmatprep.subr.bf16.mxu0 %v2054
        %2083 = vmatpush1.bf16.msra.mxu0 %v2053
        %2084 = vmatprep.subr.bf16.mxu0 %v2052
        %2085 = vmatpush1.bf16.msra.mxu0 %v2051
        %2086 = vmatprep.subr.bf16.mxu0 %v2050
        %2087 = vmatpush1.bf16.msra.mxu0 %v2049
        %2088 = vmatprep.subr.bf16.mxu0 %v2048
        %2089 = vmatpush1.bf16.msra.mxu0 %v2047
        %2090 = vmatprep.subr.bf16.mxu0 %v2046
        %2091 = vmatpush1.bf16.msra.mxu0 %v2045
        %2092 = vmatprep.subr.bf16.mxu0 %v2044
        %2093 = vmatpush1.bf16.msra.mxu0 %v2043
        %2094 = vmatprep.subr.bf16.mxu0 %v2042
        %2095 = vmatpush1.bf16.msra.mxu0 %v2041
        %2096 = vmatprep.subr.bf16.mxu0 0
        %2097 = vmatpush2.bf16.msra.mxu0 0
        %2098 = vmatprep.subr.bf16.mxu0 0
        %2099 = vmatpush2.bf16.msra.mxu0 0
        %2100 = vmatprep.subr.bf16.mxu0 0
        %2101 = vmatpush2.bf16.msra.mxu0 0
        %2102 = vmatprep.subr.bf16.mxu0 0
        %2103 = vmatpush2.bf16.msra.mxu0 0
        %2104 = vmatprep.subr.bf16.mxu0 0
        %2105 = vmatpush2.bf16.msra.mxu0 0
        %2106 = vmatprep.subr.bf16.mxu0 0
        %2107 = vmatpush2.bf16.msra.mxu0 0
        %2108 = vmatprep.subr.bf16.mxu0 0
        %2109 = vmatpush2.bf16.msra.mxu0 0
        %2110 = vmatprep.subr.bf16.mxu0 %v2058
        %2111 = vmatpush2.bf16.msra.mxu0 %v2057
        %2112 = vmatprep.mubr.bf16.mxu0 %v2078
        %2113 = vmatmul.mubr.bf16.gmra.mxu0 %v1966
        %v2114 = vpop.f32.mrf.mxu0
        %v2115 = vadd.f32 0.0, %v2114
        %v2116 = vpop.f32.mrf.mxu0
        %v2117 = vadd.f32 0.0, %v2116
        %v2118 = vpop.f32.mrf.mxu0
        %v2119 = vpop.f32.mrf.mxu0
        %2120 = vdwg.mxu0
        %v2121 = vadd.f32 %v1918, %v2115
        %v2122 = vadd.f32 %v1919, %v2117
        %v2123 = vld [vmem:[%s3] sm:$0x3]
        %v2125 = vlaneseq
        %v2126 = vshrl.u32 %v2125, 7
        %v2127 = vsub.s32 0, %v2126
        %v2128 = vrot.slane %v2123, %v2127
        %v2129 = vlaneseq
        %v2130 = vshrl.u32 %v2129, 7
        %v2131 = vsub.s32 1, %v2130
        %v2132 = vrot.slane %v2123, %v2131
        %v2135 = vadd.f32 %v2121, %v2128
        %v2136 = vadd.f32 %v2122, %v2132
        %v2137 = vmax.f32 %v2135, 0.0
        %v2138 = vmax.f32 %v2136, 0.0
        %v2139 = vpack.c.bf16 %v2137, %v2137
        %v2140 = vpack.c.bf16 %v2138, %v2138
        %v2141 = vld [vmem:[%s4] sm:$0x3]
        %vm2142 = vcmask 64512
        %v2144 = vsel %vm2142, %v2141, 0
        %vm2146 = vcmask 1043456
        %v2148 = vsel %vm2146, %v2139, 0
        %v2151 = vsel %vm2146, %v2140, 0
        %2153 = vmatprep.subr.bf16.mxu0 0
        %2154 = vmatpush1.bf16.msra.mxu0 0
        %2155 = vmatprep.subr.bf16.mxu0 0
        %2156 = vmatpush1.bf16.msra.mxu0 0
        %2157 = vmatprep.subr.bf16.mxu0 0
        %2158 = vmatpush1.bf16.msra.mxu0 0
        %2159 = vmatprep.subr.bf16.mxu0 0
        %2160 = vmatpush1.bf16.msra.mxu0 0
        %2161 = vmatprep.subr.bf16.mxu0 0
        %2162 = vmatpush1.bf16.msra.mxu0 0
        %2163 = vmatprep.subr.bf16.mxu0 0
        %2164 = vmatpush1.bf16.msra.mxu0 0
        %2165 = vmatprep.subr.bf16.mxu0 0
        %2166 = vmatpush1.bf16.msra.mxu0 0
        %2167 = vmatprep.subr.bf16.mxu0 %v2151
        %2168 = vmatpush1.bf16.msra.mxu0 %v2148
        %2169 = vmatprep.subr.bf16.mxu0 0
        %2170 = vmatpush2.bf16.msra.mxu0 0
        %2171 = vmatprep.subr.bf16.mxu0 0
        %2172 = vmatpush2.bf16.msra.mxu0 0
        %2173 = vmatprep.subr.bf16.mxu0 0
        %2174 = vmatpush2.bf16.msra.mxu0 0
        %2175 = vmatprep.subr.bf16.mxu0 0
        %2176 = vmatpush2.bf16.msra.mxu0 0
        %2177 = vmatprep.subr.bf16.mxu0 0
        %2178 = vmatpush2.bf16.msra.mxu0 0
        %2179 = vmatprep.subr.bf16.mxu0 0
        %2180 = vmatpush2.bf16.msra.mxu0 0
        %2181 = vmatprep.subr.bf16.mxu0 0
        %2182 = vmatpush2.bf16.msra.mxu0 0
        %2183 = vmatprep.subr.bf16.mxu0 0
        %2184 = vmatpush2.bf16.msra.mxu0 0
        %2185 = vmatprep.mubr.bf16.mxu0 0
        %2186 = vmatmul.mubr.bf16.gmra.mxu0 %v2144
        %v2187 = vpop.f32.mrf.mxu0
        %v2188 = vadd.f32 0.0, %v2187
        %v2189 = vpop.f32.mrf.mxu0
        %v2190 = vadd.f32 0.0, %v2189
        %v2191 = vpop.f32.mrf.mxu0
        %v2192 = vpop.f32.mrf.mxu0
        %2193 = vdwg.mxu0
        %v2194 = vpack.c.bf16 %v2188, %v2188
        %v2195 = vpack.c.bf16 %v2190, %v2190
        %v2196 = vld [vmem:[%s5] sm:$0xff]
        %v2197 = vld [vmem:[%s5 + $0x8] sm:$0xff]
        %v2198 = vld [vmem:[%s5 + $0x10] sm:$0xff]
        %v2199 = vld [vmem:[%s5 + $0x18] sm:$0xff]
        %v2200 = vld [vmem:[%s5 + $0x20] sm:$0xff]
        %v2201 = vld [vmem:[%s5 + $0x28] sm:$0xff]
        %v2202 = vld [vmem:[%s5 + $0x30] sm:$0xff]
        %v2203 = vld [vmem:[%s5 + $0x38] sm:$0xff]
        %v2204 = vld [vmem:[%s5 + $0x40] sm:$0xff]
        %v2205 = vld [vmem:[%s5 + $0x48] sm:$0xff]
        %v2206 = vld [vmem:[%s5 + $0x50] sm:$0xff]
        %v2207 = vld [vmem:[%s5 + $0x58] sm:$0xff]
        %v2208 = vld [vmem:[%s5 + $0x60] sm:$0xff]
        %v2209 = vld [vmem:[%s5 + $0x68] sm:$0xff]
        %v2210 = vld [vmem:[%s5 + $0x70] sm:$0xff]
        %v2211 = vld [vmem:[%s5 + $0x78] sm:$0xff]
        %v2212 = vld [vmem:[%s5 + $0x80] sm:$0xff]
        %v2213 = vld [vmem:[%s5 + $0x88] sm:$0xff]
        %v2214 = vld [vmem:[%s5 + $0x90] sm:$0xff]
        %v2215 = vld [vmem:[%s5 + $0x98] sm:$0xff]
        %v2216 = vld [vmem:[%s5 + $0xa0] sm:$0xff]
        %v2217 = vld [vmem:[%s5 + $0xa8] sm:$0xff]
        %v2218 = vld [vmem:[%s5 + $0xb0] sm:$0xff]
        %v2219 = vld [vmem:[%s5 + $0xb8] sm:$0xff]
        %v2220 = vld [vmem:[%s5 + $0xc0] sm:$0xff]
        %v2221 = vld [vmem:[%s5 + $0xc8] sm:$0xff]
        %v2222 = vld [vmem:[%s5 + $0xd0] sm:$0xff]
        %v2223 = vld [vmem:[%s5 + $0xd8] sm:$0xff]
        %v2224 = vld [vmem:[%s5 + $0xe0] sm:$0xff]
        %v2225 = vld [vmem:[%s5 + $0xe8] sm:$0xff]
        %v2226 = vld [vmem:[%s5 + $0xf0] sm:$0xff]
        %v2227 = vld [vmem:[%s5 + $0xf8] sm:$0xff]
        %s2228 = scalar_lea.vmem %s4, 2
        %v2229 = vld [vmem:[%s2228] sm:$0x3]
        %v2231 = vsel %vm2142, %v2229, 0
        %2233 = vmatprep.subr.bf16.mxu0 0
        %2234 = vmatpush1.bf16.msra.mxu0 0
        %2235 = vmatprep.subr.bf16.mxu0 0
        %2236 = vmatpush1.bf16.msra.mxu0 0
        %2237 = vmatprep.subr.bf16.mxu0 0
        %2238 = vmatpush1.bf16.msra.mxu0 0
        %2239 = vmatprep.subr.bf16.mxu0 0
        %2240 = vmatpush1.bf16.msra.mxu0 0
        %2241 = vmatprep.subr.bf16.mxu0 0
        %2242 = vmatpush1.bf16.msra.mxu0 0
        %2243 = vmatprep.subr.bf16.mxu0 0
        %2244 = vmatpush1.bf16.msra.mxu0 0
        %2245 = vmatprep.subr.bf16.mxu0 0
        %2246 = vmatpush1.bf16.msra.mxu0 0
        %2247 = vmatprep.subr.bf16.mxu0 %v2151
        %2248 = vmatpush1.bf16.msra.mxu0 %v2148
        %2249 = vmatprep.subr.bf16.mxu0 0
        %2250 = vmatpush2.bf16.msra.mxu0 0
        %2251 = vmatprep.subr.bf16.mxu0 0
        %2252 = vmatpush2.bf16.msra.mxu0 0
        %2253 = vmatprep.subr.bf16.mxu0 0
        %2254 = vmatpush2.bf16.msra.mxu0 0
        %2255 = vmatprep.subr.bf16.mxu0 0
        %2256 = vmatpush2.bf16.msra.mxu0 0
        %2257 = vmatprep.subr.bf16.mxu0 0
        %2258 = vmatpush2.bf16.msra.mxu0 0
        %2259 = vmatprep.subr.bf16.mxu0 0
        %2260 = vmatpush2.bf16.msra.mxu0 0
        %2261 = vmatprep.subr.bf16.mxu0 0
        %2262 = vmatpush2.bf16.msra.mxu0 0
        %2263 = vmatprep.subr.bf16.mxu0 0
        %2264 = vmatpush2.bf16.msra.mxu0 0
        %2265 = vmatprep.mubr.bf16.mxu0 0
        %2266 = vmatmul.mubr.bf16.gmra.mxu0 %v2231
        %v2267 = vpop.f32.mrf.mxu0
        %v2268 = vadd.f32 0.0, %v2267
        %v2269 = vpop.f32.mrf.mxu0
        %v2270 = vadd.f32 0.0, %v2269
        %v2271 = vpop.f32.mrf.mxu0
        %v2272 = vpop.f32.mrf.mxu0
        %2273 = vdwg.mxu0
        %v2274 = vpack.c.bf16 %v2268, %v2268
        %v2275 = vpack.c.bf16 %v2270, %v2270
        %s2276 = scalar_lea.vmem %s5, 256
        %v2277 = vld [vmem:[%s2276] sm:$0xff]
        %v2278 = vld [vmem:[%s2276 + $0x8] sm:$0xff]
        %v2279 = vld [vmem:[%s2276 + $0x10] sm:$0xff]
        %v2280 = vld [vmem:[%s2276 + $0x18] sm:$0xff]
        %v2281 = vld [vmem:[%s2276 + $0x20] sm:$0xff]
        %v2282 = vld [vmem:[%s2276 + $0x28] sm:$0xff]
        %v2283 = vld [vmem:[%s2276 + $0x30] sm:$0xff]
        %v2284 = vld [vmem:[%s2276 + $0x38] sm:$0xff]
        %v2285 = vld [vmem:[%s2276 + $0x40] sm:$0xff]
        %v2286 = vld [vmem:[%s2276 + $0x48] sm:$0xff]
        %v2287 = vld [vmem:[%s2276 + $0x50] sm:$0xff]
        %v2288 = vld [vmem:[%s2276 + $0x58] sm:$0xff]
        %v2289 = vld [vmem:[%s2276 + $0x60] sm:$0xff]
        %v2290 = vld [vmem:[%s2276 + $0x68] sm:$0xff]
        %v2291 = vld [vmem:[%s2276 + $0x70] sm:$0xff]
        %v2292 = vld [vmem:[%s2276 + $0x78] sm:$0xff]
        %v2293 = vld [vmem:[%s2276 + $0x80] sm:$0xff]
        %v2294 = vld [vmem:[%s2276 + $0x88] sm:$0xff]
        %v2295 = vld [vmem:[%s2276 + $0x90] sm:$0xff]
        %v2296 = vld [vmem:[%s2276 + $0x98] sm:$0xff]
        %v2297 = vld [vmem:[%s2276 + $0xa0] sm:$0xff]
        %v2298 = vld [vmem:[%s2276 + $0xa8] sm:$0xff]
        %v2299 = vld [vmem:[%s2276 + $0xb0] sm:$0xff]
        %v2300 = vld [vmem:[%s2276 + $0xb8] sm:$0xff]
        %v2301 = vld [vmem:[%s2276 + $0xc0] sm:$0xff]
        %v2302 = vld [vmem:[%s2276 + $0xc8] sm:$0xff]
        %v2303 = vld [vmem:[%s2276 + $0xd0] sm:$0xff]
        %v2304 = vld [vmem:[%s2276 + $0xd8] sm:$0xff]
        %v2305 = vld [vmem:[%s2276 + $0xe0] sm:$0xff]
        %v2306 = vld [vmem:[%s2276 + $0xe8] sm:$0xff]
        %v2307 = vld [vmem:[%s2276 + $0xf0] sm:$0xff]
        %v2308 = vld [vmem:[%s2276 + $0xf8] sm:$0xff]
        %v2341 = vunpack.c.l.b16 %v2277
        %v2342 = vunpack.c.h.b16 %v2277
        %v2343 = vunpack.c.l.b16 %v2278
        %v2344 = vunpack.c.h.b16 %v2278
        %v2345 = vunpack.c.l.b16 %v2279
        %v2346 = vunpack.c.h.b16 %v2279
        %v2347 = vunpack.c.l.b16 %v2280
        %v2348 = vunpack.c.h.b16 %v2280
        %v2349 = vunpack.c.l.b16 %v2281
        %v2350 = vunpack.c.h.b16 %v2281
        %v2351 = vunpack.c.l.b16 %v2282
        %v2352 = vunpack.c.h.b16 %v2282
        %v2353 = vunpack.c.l.b16 %v2283
        %v2354 = vunpack.c.h.b16 %v2283
        %v2355 = vunpack.c.l.b16 %v2284
        %v2356 = vunpack.c.h.b16 %v2284
        %v2357 = vunpack.c.l.b16 %v2285
        %v2358 = vunpack.c.h.b16 %v2285
        %v2359 = vunpack.c.l.b16 %v2286
        %v2360 = vunpack.c.h.b16 %v2286
        %v2361 = vunpack.c.l.b16 %v2287
        %v2362 = vunpack.c.h.b16 %v2287
        %v2363 = vunpack.c.l.b16 %v2288
        %v2364 = vunpack.c.h.b16 %v2288
        %v2365 = vunpack.c.l.b16 %v2289
        %v2366 = vunpack.c.h.b16 %v2289
        %v2367 = vunpack.c.l.b16 %v2290
        %v2368 = vunpack.c.h.b16 %v2290
        %v2369 = vunpack.c.l.b16 %v2291
        %v2370 = vunpack.c.h.b16 %v2291
        %v2371 = vunpack.c.l.b16 %v2292
        %v2372 = vunpack.c.h.b16 %v2292
        %v2373 = vunpack.c.l.b16 %v2293
        %v2374 = vunpack.c.h.b16 %v2293
        %v2375 = vunpack.c.l.b16 %v2294
        %v2376 = vunpack.c.h.b16 %v2294
        %v2377 = vunpack.c.l.b16 %v2295
        %v2378 = vunpack.c.h.b16 %v2295
        %v2379 = vunpack.c.l.b16 %v2296
        %v2380 = vunpack.c.h.b16 %v2296
        %v2381 = vunpack.c.l.b16 %v2297
        %v2382 = vunpack.c.h.b16 %v2297
        %v2383 = vunpack.c.l.b16 %v2298
        %v2384 = vunpack.c.h.b16 %v2298
        %v2385 = vunpack.c.l.b16 %v2299
        %v2386 = vunpack.c.h.b16 %v2299
        %v2387 = vunpack.c.l.b16 %v2300
        %v2388 = vunpack.c.h.b16 %v2300
        %v2389 = vunpack.c.l.b16 %v2301
        %v2390 = vunpack.c.h.b16 %v2301
        %v2391 = vunpack.c.l.b16 %v2302
        %v2392 = vunpack.c.h.b16 %v2302
        %v2393 = vunpack.c.l.b16 %v2303
        %v2394 = vunpack.c.h.b16 %v2303
        %v2395 = vunpack.c.l.b16 %v2304
        %v2396 = vunpack.c.h.b16 %v2304
        %v2397 = vunpack.c.l.b16 %v2305
        %v2398 = vunpack.c.h.b16 %v2305
        %v2399 = vunpack.c.l.b16 %v2306
        %v2400 = vunpack.c.h.b16 %v2306
        %v2401 = vunpack.c.l.b16 %v2307
        %v2402 = vunpack.c.h.b16 %v2307
        %v2403 = vunpack.c.l.b16 %v2308
        %v2404 = vunpack.c.h.b16 %v2308
        %v2405 = vpack.c.b16 %v2343, %v2341
        %v2406 = vpack.c.b16 %v2344, %v2342
        %v2407 = vpack.c.b16 %v2347, %v2345
        %v2408 = vpack.c.b16 %v2348, %v2346
        %v2409 = vpack.c.b16 %v2351, %v2349
        %v2410 = vpack.c.b16 %v2352, %v2350
        %v2411 = vpack.c.b16 %v2355, %v2353
        %v2412 = vpack.c.b16 %v2356, %v2354
        %v2413 = vpack.c.b16 %v2359, %v2357
        %v2414 = vpack.c.b16 %v2360, %v2358
        %v2415 = vpack.c.b16 %v2363, %v2361
        %v2416 = vpack.c.b16 %v2364, %v2362
        %v2417 = vpack.c.b16 %v2367, %v2365
        %v2418 = vpack.c.b16 %v2368, %v2366
        %v2419 = vpack.c.b16 %v2371, %v2369
        %v2420 = vpack.c.b16 %v2372, %v2370
        %v2421 = vpack.c.b16 %v2375, %v2373
        %v2422 = vpack.c.b16 %v2376, %v2374
        %v2423 = vpack.c.b16 %v2379, %v2377
        %v2424 = vpack.c.b16 %v2380, %v2378
        %v2425 = vpack.c.b16 %v2383, %v2381
        %v2426 = vpack.c.b16 %v2384, %v2382
        %v2427 = vpack.c.b16 %v2387, %v2385
        %v2428 = vpack.c.b16 %v2388, %v2386
        %v2429 = vpack.c.b16 %v2391, %v2389
        %v2430 = vpack.c.b16 %v2392, %v2390
        %v2431 = vpack.c.b16 %v2395, %v2393
        %v2432 = vpack.c.b16 %v2396, %v2394
        %v2433 = vpack.c.b16 %v2399, %v2397
        %v2434 = vpack.c.b16 %v2400, %v2398
        %v2435 = vpack.c.b16 %v2403, %v2401
        %v2436 = vpack.c.b16 %v2404, %v2402
        %2469 = vmatprep.subr.bf16.mxu0 %v2420
        %2470 = vmatpush1.bf16.msra.mxu0 %v2419
        %2471 = vmatprep.subr.bf16.mxu0 %v2418
        %2472 = vmatpush1.bf16.msra.mxu0 %v2417
        %2473 = vmatprep.subr.bf16.mxu0 %v2416
        %2474 = vmatpush1.bf16.msra.mxu0 %v2415
        %2475 = vmatprep.subr.bf16.mxu0 %v2414
        %2476 = vmatpush1.bf16.msra.mxu0 %v2413
        %2477 = vmatprep.subr.bf16.mxu0 %v2412
        %2478 = vmatpush1.bf16.msra.mxu0 %v2411
        %2479 = vmatprep.subr.bf16.mxu0 %v2410
        %2480 = vmatpush1.bf16.msra.mxu0 %v2409
        %2481 = vmatprep.subr.bf16.mxu0 %v2408
        %2482 = vmatpush1.bf16.msra.mxu0 %v2407
        %2483 = vmatprep.subr.bf16.mxu0 %v2406
        %2484 = vmatpush1.bf16.msra.mxu0 %v2405
        %2485 = vmatprep.subr.bf16.mxu0 %v2436
        %2486 = vmatpush2.bf16.msra.mxu0 %v2435
        %2487 = vmatprep.subr.bf16.mxu0 %v2434
        %2488 = vmatpush2.bf16.msra.mxu0 %v2433
        %2489 = vmatprep.subr.bf16.mxu0 %v2432
        %2490 = vmatpush2.bf16.msra.mxu0 %v2431
        %2491 = vmatprep.subr.bf16.mxu0 %v2430
        %2492 = vmatpush2.bf16.msra.mxu0 %v2429
        %2493 = vmatprep.subr.bf16.mxu0 %v2428
        %2494 = vmatpush2.bf16.msra.mxu0 %v2427
        %2495 = vmatprep.subr.bf16.mxu0 %v2426
        %2496 = vmatpush2.bf16.msra.mxu0 %v2425
        %2497 = vmatprep.subr.bf16.mxu0 %v2424
        %2498 = vmatpush2.bf16.msra.mxu0 %v2423
        %2499 = vmatprep.subr.bf16.mxu0 %v2422
        %2500 = vmatpush2.bf16.msra.mxu0 %v2421
        %2501 = vmatprep.mubr.bf16.mxu0 %v2275
        %2502 = vmatmul.mubr.bf16.gmra.mxu0 %v2274
        %v2503 = vpop.f32.mrf.mxu0
        %v2504 = vadd.f32 0.0, %v2503
        %v2505 = vpop.f32.mrf.mxu0
        %v2506 = vadd.f32 0.0, %v2505
        %v2507 = vpop.f32.mrf.mxu0
        %v2508 = vpop.f32.mrf.mxu0
        %2509 = vdwg.mxu0
        %v2542 = vunpack.c.l.b16 %v2196
        %v2543 = vunpack.c.h.b16 %v2196
        %v2544 = vunpack.c.l.b16 %v2197
        %v2545 = vunpack.c.h.b16 %v2197
        %v2546 = vunpack.c.l.b16 %v2198
        %v2547 = vunpack.c.h.b16 %v2198
        %v2548 = vunpack.c.l.b16 %v2199
        %v2549 = vunpack.c.h.b16 %v2199
        %v2550 = vunpack.c.l.b16 %v2200
        %v2551 = vunpack.c.h.b16 %v2200
        %v2552 = vunpack.c.l.b16 %v2201
        %v2553 = vunpack.c.h.b16 %v2201
        %v2554 = vunpack.c.l.b16 %v2202
        %v2555 = vunpack.c.h.b16 %v2202
        %v2556 = vunpack.c.l.b16 %v2203
        %v2557 = vunpack.c.h.b16 %v2203
        %v2558 = vunpack.c.l.b16 %v2204
        %v2559 = vunpack.c.h.b16 %v2204
        %v2560 = vunpack.c.l.b16 %v2205
        %v2561 = vunpack.c.h.b16 %v2205
        %v2562 = vunpack.c.l.b16 %v2206
        %v2563 = vunpack.c.h.b16 %v2206
        %v2564 = vunpack.c.l.b16 %v2207
        %v2565 = vunpack.c.h.b16 %v2207
        %v2566 = vunpack.c.l.b16 %v2208
        %v2567 = vunpack.c.h.b16 %v2208
        %v2568 = vunpack.c.l.b16 %v2209
        %v2569 = vunpack.c.h.b16 %v2209
        %v2570 = vunpack.c.l.b16 %v2210
        %v2571 = vunpack.c.h.b16 %v2210
        %v2572 = vunpack.c.l.b16 %v2211
        %v2573 = vunpack.c.h.b16 %v2211
        %v2574 = vunpack.c.l.b16 %v2212
        %v2575 = vunpack.c.h.b16 %v2212
        %v2576 = vunpack.c.l.b16 %v2213
        %v2577 = vunpack.c.h.b16 %v2213
        %v2578 = vunpack.c.l.b16 %v2214
        %v2579 = vunpack.c.h.b16 %v2214
        %v2580 = vunpack.c.l.b16 %v2215
        %v2581 = vunpack.c.h.b16 %v2215
        %v2582 = vunpack.c.l.b16 %v2216
        %v2583 = vunpack.c.h.b16 %v2216
        %v2584 = vunpack.c.l.b16 %v2217
        %v2585 = vunpack.c.h.b16 %v2217
        %v2586 = vunpack.c.l.b16 %v2218
        %v2587 = vunpack.c.h.b16 %v2218
        %v2588 = vunpack.c.l.b16 %v2219
        %v2589 = vunpack.c.h.b16 %v2219
        %v2590 = vunpack.c.l.b16 %v2220
        %v2591 = vunpack.c.h.b16 %v2220
        %v2592 = vunpack.c.l.b16 %v2221
        %v2593 = vunpack.c.h.b16 %v2221
        %v2594 = vunpack.c.l.b16 %v2222
        %v2595 = vunpack.c.h.b16 %v2222
        %v2596 = vunpack.c.l.b16 %v2223
        %v2597 = vunpack.c.h.b16 %v2223
        %v2598 = vunpack.c.l.b16 %v2224
        %v2599 = vunpack.c.h.b16 %v2224
        %v2600 = vunpack.c.l.b16 %v2225
        %v2601 = vunpack.c.h.b16 %v2225
        %v2602 = vunpack.c.l.b16 %v2226
        %v2603 = vunpack.c.h.b16 %v2226
        %v2604 = vunpack.c.l.b16 %v2227
        %v2605 = vunpack.c.h.b16 %v2227
        %v2606 = vpack.c.b16 %v2544, %v2542
        %v2607 = vpack.c.b16 %v2545, %v2543
        %v2608 = vpack.c.b16 %v2548, %v2546
        %v2609 = vpack.c.b16 %v2549, %v2547
        %v2610 = vpack.c.b16 %v2552, %v2550
        %v2611 = vpack.c.b16 %v2553, %v2551
        %v2612 = vpack.c.b16 %v2556, %v2554
        %v2613 = vpack.c.b16 %v2557, %v2555
        %v2614 = vpack.c.b16 %v2560, %v2558
        %v2615 = vpack.c.b16 %v2561, %v2559
        %v2616 = vpack.c.b16 %v2564, %v2562
        %v2617 = vpack.c.b16 %v2565, %v2563
        %v2618 = vpack.c.b16 %v2568, %v2566
        %v2619 = vpack.c.b16 %v2569, %v2567
        %v2620 = vpack.c.b16 %v2572, %v2570
        %v2621 = vpack.c.b16 %v2573, %v2571
        %v2622 = vpack.c.b16 %v2576, %v2574
        %v2623 = vpack.c.b16 %v2577, %v2575
        %v2624 = vpack.c.b16 %v2580, %v2578
        %v2625 = vpack.c.b16 %v2581, %v2579
        %v2626 = vpack.c.b16 %v2584, %v2582
        %v2627 = vpack.c.b16 %v2585, %v2583
        %v2628 = vpack.c.b16 %v2588, %v2586
        %v2629 = vpack.c.b16 %v2589, %v2587
        %v2630 = vpack.c.b16 %v2592, %v2590
        %v2631 = vpack.c.b16 %v2593, %v2591
        %v2632 = vpack.c.b16 %v2596, %v2594
        %v2633 = vpack.c.b16 %v2597, %v2595
        %v2634 = vpack.c.b16 %v2600, %v2598
        %v2635 = vpack.c.b16 %v2601, %v2599
        %v2636 = vpack.c.b16 %v2604, %v2602
        %v2637 = vpack.c.b16 %v2605, %v2603
        %2670 = vmatprep.subr.bf16.mxu0 %v2621
        %2671 = vmatpush1.bf16.msra.mxu0 %v2620
        %2672 = vmatprep.subr.bf16.mxu0 %v2619
        %2673 = vmatpush1.bf16.msra.mxu0 %v2618
        %2674 = vmatprep.subr.bf16.mxu0 %v2617
        %2675 = vmatpush1.bf16.msra.mxu0 %v2616
        %2676 = vmatprep.subr.bf16.mxu0 %v2615
        %2677 = vmatpush1.bf16.msra.mxu0 %v2614
        %2678 = vmatprep.subr.bf16.mxu0 %v2613
        %2679 = vmatpush1.bf16.msra.mxu0 %v2612
        %2680 = vmatprep.subr.bf16.mxu0 %v2611
        %2681 = vmatpush1.bf16.msra.mxu0 %v2610
        %2682 = vmatprep.subr.bf16.mxu0 %v2609
        %2683 = vmatpush1.bf16.msra.mxu0 %v2608
        %2684 = vmatprep.subr.bf16.mxu0 %v2607
        %2685 = vmatpush1.bf16.msra.mxu0 %v2606
        %2686 = vmatprep.subr.bf16.mxu0 %v2637
        %2687 = vmatpush2.bf16.msra.mxu0 %v2636
        %2688 = vmatprep.subr.bf16.mxu0 %v2635
        %2689 = vmatpush2.bf16.msra.mxu0 %v2634
        %2690 = vmatprep.subr.bf16.mxu0 %v2633
        %2691 = vmatpush2.bf16.msra.mxu0 %v2632
        %2692 = vmatprep.subr.bf16.mxu0 %v2631
        %2693 = vmatpush2.bf16.msra.mxu0 %v2630
        %2694 = vmatprep.subr.bf16.mxu0 %v2629
        %2695 = vmatpush2.bf16.msra.mxu0 %v2628
        %2696 = vmatprep.subr.bf16.mxu0 %v2627
        %2697 = vmatpush2.bf16.msra.mxu0 %v2626
        %2698 = vmatprep.subr.bf16.mxu0 %v2625
        %2699 = vmatpush2.bf16.msra.mxu0 %v2624
        %2700 = vmatprep.subr.bf16.mxu0 %v2623
        %2701 = vmatpush2.bf16.msra.mxu0 %v2622
        %2702 = vmatprep.mubr.bf16.mxu0 %v2195
        %2703 = vmatmul.mubr.bf16.gmra.mxu0 %v2194
        %v2704 = vpop.f32.mrf.mxu0
        %v2705 = vadd.f32 %v2504, %v2704
        %v2706 = vpop.f32.mrf.mxu0
        %v2707 = vadd.f32 %v2506, %v2706
        %v2708 = vpop.f32.mrf.mxu0
        %v2709 = vpop.f32.mrf.mxu0
        %2710 = vdwg.mxu0
        %s2711 = scalar_lea.vmem %s4, 4
        %v2712 = vld [vmem:[%s2711] sm:$0x3]
        %v2714 = vsel %vm2142, %v2712, 0
        %2716 = vmatprep.subr.bf16.mxu0 0
        %2717 = vmatpush1.bf16.msra.mxu0 0
        %2718 = vmatprep.subr.bf16.mxu0 0
        %2719 = vmatpush1.bf16.msra.mxu0 0
        %2720 = vmatprep.subr.bf16.mxu0 0
        %2721 = vmatpush1.bf16.msra.mxu0 0
        %2722 = vmatprep.subr.bf16.mxu0 0
        %2723 = vmatpush1.bf16.msra.mxu0 0
        %2724 = vmatprep.subr.bf16.mxu0 0
        %2725 = vmatpush1.bf16.msra.mxu0 0
        %2726 = vmatprep.subr.bf16.mxu0 0
        %2727 = vmatpush1.bf16.msra.mxu0 0
        %2728 = vmatprep.subr.bf16.mxu0 0
        %2729 = vmatpush1.bf16.msra.mxu0 0
        %2730 = vmatprep.subr.bf16.mxu0 %v2151
        %2731 = vmatpush1.bf16.msra.mxu0 %v2148
        %2732 = vmatprep.subr.bf16.mxu0 0
        %2733 = vmatpush2.bf16.msra.mxu0 0
        %2734 = vmatprep.subr.bf16.mxu0 0
        %2735 = vmatpush2.bf16.msra.mxu0 0
        %2736 = vmatprep.subr.bf16.mxu0 0
        %2737 = vmatpush2.bf16.msra.mxu0 0
        %2738 = vmatprep.subr.bf16.mxu0 0
        %2739 = vmatpush2.bf16.msra.mxu0 0
        %2740 = vmatprep.subr.bf16.mxu0 0
        %2741 = vmatpush2.bf16.msra.mxu0 0
        %2742 = vmatprep.subr.bf16.mxu0 0
        %2743 = vmatpush2.bf16.msra.mxu0 0
        %2744 = vmatprep.subr.bf16.mxu0 0
        %2745 = vmatpush2.bf16.msra.mxu0 0
        %2746 = vmatprep.subr.bf16.mxu0 0
        %2747 = vmatpush2.bf16.msra.mxu0 0
        %2748 = vmatprep.mubr.bf16.mxu0 0
        %2749 = vmatmul.mubr.bf16.gmra.mxu0 %v2714
        %v2750 = vpop.f32.mrf.mxu0
        %v2751 = vadd.f32 0.0, %v2750
        %v2752 = vpop.f32.mrf.mxu0
        %v2753 = vadd.f32 0.0, %v2752
        %v2754 = vpop.f32.mrf.mxu0
        %v2755 = vpop.f32.mrf.mxu0
        %2756 = vdwg.mxu0
        %v2757 = vpack.c.bf16 %v2751, %v2751
        %v2758 = vpack.c.bf16 %v2753, %v2753
        %s2759 = scalar_lea.vmem %s5, 512
        %v2760 = vld [vmem:[%s2759] sm:$0xff]
        %v2761 = vld [vmem:[%s2759 + $0x8] sm:$0xff]
        %v2762 = vld [vmem:[%s2759 + $0x10] sm:$0xff]
        %v2763 = vld [vmem:[%s2759 + $0x18] sm:$0xff]
        %v2764 = vld [vmem:[%s2759 + $0x20] sm:$0xff]
        %v2765 = vld [vmem:[%s2759 + $0x28] sm:$0xff]
        %v2766 = vld [vmem:[%s2759 + $0x30] sm:$0xff]
        %v2767 = vld [vmem:[%s2759 + $0x38] sm:$0xff]
        %v2768 = vld [vmem:[%s2759 + $0x40] sm:$0xff]
        %v2769 = vld [vmem:[%s2759 + $0x48] sm:$0xff]
        %v2770 = vld [vmem:[%s2759 + $0x50] sm:$0xff]
        %v2771 = vld [vmem:[%s2759 + $0x58] sm:$0xff]
        %v2772 = vld [vmem:[%s2759 + $0x60] sm:$0xff]
        %v2773 = vld [vmem:[%s2759 + $0x68] sm:$0xff]
        %v2774 = vld [vmem:[%s2759 + $0x70] sm:$0xff]
        %v2775 = vld [vmem:[%s2759 + $0x78] sm:$0xff]
        %v2776 = vld [vmem:[%s2759 + $0x80] sm:$0xff]
        %v2777 = vld [vmem:[%s2759 + $0x88] sm:$0xff]
        %v2778 = vld [vmem:[%s2759 + $0x90] sm:$0xff]
        %v2779 = vld [vmem:[%s2759 + $0x98] sm:$0xff]
        %v2780 = vld [vmem:[%s2759 + $0xa0] sm:$0xff]
        %v2781 = vld [vmem:[%s2759 + $0xa8] sm:$0xff]
        %v2782 = vld [vmem:[%s2759 + $0xb0] sm:$0xff]
        %v2783 = vld [vmem:[%s2759 + $0xb8] sm:$0xff]
        %v2784 = vld [vmem:[%s2759 + $0xc0] sm:$0xff]
        %v2785 = vld [vmem:[%s2759 + $0xc8] sm:$0xff]
        %v2786 = vld [vmem:[%s2759 + $0xd0] sm:$0xff]
        %v2787 = vld [vmem:[%s2759 + $0xd8] sm:$0xff]
        %v2788 = vld [vmem:[%s2759 + $0xe0] sm:$0xff]
        %v2789 = vld [vmem:[%s2759 + $0xe8] sm:$0xff]
        %v2790 = vld [vmem:[%s2759 + $0xf0] sm:$0xff]
        %v2791 = vld [vmem:[%s2759 + $0xf8] sm:$0xff]
        %v2824 = vunpack.c.l.b16 %v2760
        %v2825 = vunpack.c.h.b16 %v2760
        %v2826 = vunpack.c.l.b16 %v2761
        %v2827 = vunpack.c.h.b16 %v2761
        %v2828 = vunpack.c.l.b16 %v2762
        %v2829 = vunpack.c.h.b16 %v2762
        %v2830 = vunpack.c.l.b16 %v2763
        %v2831 = vunpack.c.h.b16 %v2763
        %v2832 = vunpack.c.l.b16 %v2764
        %v2833 = vunpack.c.h.b16 %v2764
        %v2834 = vunpack.c.l.b16 %v2765
        %v2835 = vunpack.c.h.b16 %v2765
        %v2836 = vunpack.c.l.b16 %v2766
        %v2837 = vunpack.c.h.b16 %v2766
        %v2838 = vunpack.c.l.b16 %v2767
        %v2839 = vunpack.c.h.b16 %v2767
        %v2840 = vunpack.c.l.b16 %v2768
        %v2841 = vunpack.c.h.b16 %v2768
        %v2842 = vunpack.c.l.b16 %v2769
        %v2843 = vunpack.c.h.b16 %v2769
        %v2844 = vunpack.c.l.b16 %v2770
        %v2845 = vunpack.c.h.b16 %v2770
        %v2846 = vunpack.c.l.b16 %v2771
        %v2847 = vunpack.c.h.b16 %v2771
        %v2848 = vunpack.c.l.b16 %v2772
        %v2849 = vunpack.c.h.b16 %v2772
        %v2850 = vunpack.c.l.b16 %v2773
        %v2851 = vunpack.c.h.b16 %v2773
        %v2852 = vunpack.c.l.b16 %v2774
        %v2853 = vunpack.c.h.b16 %v2774
        %v2854 = vunpack.c.l.b16 %v2775
        %v2855 = vunpack.c.h.b16 %v2775
        %v2856 = vunpack.c.l.b16 %v2776
        %v2857 = vunpack.c.h.b16 %v2776
        %v2858 = vunpack.c.l.b16 %v2777
        %v2859 = vunpack.c.h.b16 %v2777
        %v2860 = vunpack.c.l.b16 %v2778
        %v2861 = vunpack.c.h.b16 %v2778
        %v2862 = vunpack.c.l.b16 %v2779
        %v2863 = vunpack.c.h.b16 %v2779
        %v2864 = vunpack.c.l.b16 %v2780
        %v2865 = vunpack.c.h.b16 %v2780
        %v2866 = vunpack.c.l.b16 %v2781
        %v2867 = vunpack.c.h.b16 %v2781
        %v2868 = vunpack.c.l.b16 %v2782
        %v2869 = vunpack.c.h.b16 %v2782
        %v2870 = vunpack.c.l.b16 %v2783
        %v2871 = vunpack.c.h.b16 %v2783
        %v2872 = vunpack.c.l.b16 %v2784
        %v2873 = vunpack.c.h.b16 %v2784
        %v2874 = vunpack.c.l.b16 %v2785
        %v2875 = vunpack.c.h.b16 %v2785
        %v2876 = vunpack.c.l.b16 %v2786
        %v2877 = vunpack.c.h.b16 %v2786
        %v2878 = vunpack.c.l.b16 %v2787
        %v2879 = vunpack.c.h.b16 %v2787
        %v2880 = vunpack.c.l.b16 %v2788
        %v2881 = vunpack.c.h.b16 %v2788
        %v2882 = vunpack.c.l.b16 %v2789
        %v2883 = vunpack.c.h.b16 %v2789
        %v2884 = vunpack.c.l.b16 %v2790
        %v2885 = vunpack.c.h.b16 %v2790
        %v2886 = vunpack.c.l.b16 %v2791
        %v2887 = vunpack.c.h.b16 %v2791
        %v2888 = vpack.c.b16 %v2826, %v2824
        %v2889 = vpack.c.b16 %v2827, %v2825
        %v2890 = vpack.c.b16 %v2830, %v2828
        %v2891 = vpack.c.b16 %v2831, %v2829
        %v2892 = vpack.c.b16 %v2834, %v2832
        %v2893 = vpack.c.b16 %v2835, %v2833
        %v2894 = vpack.c.b16 %v2838, %v2836
        %v2895 = vpack.c.b16 %v2839, %v2837
        %v2896 = vpack.c.b16 %v2842, %v2840
        %v2897 = vpack.c.b16 %v2843, %v2841
        %v2898 = vpack.c.b16 %v2846, %v2844
        %v2899 = vpack.c.b16 %v2847, %v2845
        %v2900 = vpack.c.b16 %v2850, %v2848
        %v2901 = vpack.c.b16 %v2851, %v2849
        %v2902 = vpack.c.b16 %v2854, %v2852
        %v2903 = vpack.c.b16 %v2855, %v2853
        %v2904 = vpack.c.b16 %v2858, %v2856
        %v2905 = vpack.c.b16 %v2859, %v2857
        %v2906 = vpack.c.b16 %v2862, %v2860
        %v2907 = vpack.c.b16 %v2863, %v2861
        %v2908 = vpack.c.b16 %v2866, %v2864
        %v2909 = vpack.c.b16 %v2867, %v2865
        %v2910 = vpack.c.b16 %v2870, %v2868
        %v2911 = vpack.c.b16 %v2871, %v2869
        %v2912 = vpack.c.b16 %v2874, %v2872
        %v2913 = vpack.c.b16 %v2875, %v2873
        %v2914 = vpack.c.b16 %v2878, %v2876
        %v2915 = vpack.c.b16 %v2879, %v2877
        %v2916 = vpack.c.b16 %v2882, %v2880
        %v2917 = vpack.c.b16 %v2883, %v2881
        %v2918 = vpack.c.b16 %v2886, %v2884
        %v2919 = vpack.c.b16 %v2887, %v2885
        %2952 = vmatprep.subr.bf16.mxu0 %v2903
        %2953 = vmatpush1.bf16.msra.mxu0 %v2902
        %2954 = vmatprep.subr.bf16.mxu0 %v2901
        %2955 = vmatpush1.bf16.msra.mxu0 %v2900
        %2956 = vmatprep.subr.bf16.mxu0 %v2899
        %2957 = vmatpush1.bf16.msra.mxu0 %v2898
        %2958 = vmatprep.subr.bf16.mxu0 %v2897
        %2959 = vmatpush1.bf16.msra.mxu0 %v2896
        %2960 = vmatprep.subr.bf16.mxu0 %v2895
        %2961 = vmatpush1.bf16.msra.mxu0 %v2894
        %2962 = vmatprep.subr.bf16.mxu0 %v2893
        %2963 = vmatpush1.bf16.msra.mxu0 %v2892
        %2964 = vmatprep.subr.bf16.mxu0 %v2891
        %2965 = vmatpush1.bf16.msra.mxu0 %v2890
        %2966 = vmatprep.subr.bf16.mxu0 %v2889
        %2967 = vmatpush1.bf16.msra.mxu0 %v2888
        %2968 = vmatprep.subr.bf16.mxu0 %v2919
        %2969 = vmatpush2.bf16.msra.mxu0 %v2918
        %2970 = vmatprep.subr.bf16.mxu0 %v2917
        %2971 = vmatpush2.bf16.msra.mxu0 %v2916
        %2972 = vmatprep.subr.bf16.mxu0 %v2915
        %2973 = vmatpush2.bf16.msra.mxu0 %v2914
        %2974 = vmatprep.subr.bf16.mxu0 %v2913
        %2975 = vmatpush2.bf16.msra.mxu0 %v2912
        %2976 = vmatprep.subr.bf16.mxu0 %v2911
        %2977 = vmatpush2.bf16.msra.mxu0 %v2910
        %2978 = vmatprep.subr.bf16.mxu0 %v2909
        %2979 = vmatpush2.bf16.msra.mxu0 %v2908
        %2980 = vmatprep.subr.bf16.mxu0 %v2907
        %2981 = vmatpush2.bf16.msra.mxu0 %v2906
        %2982 = vmatprep.subr.bf16.mxu0 %v2905
        %2983 = vmatpush2.bf16.msra.mxu0 %v2904
        %2984 = vmatprep.mubr.bf16.mxu0 %v2758
        %2985 = vmatmul.mubr.bf16.gmra.mxu0 %v2757
        %v2986 = vpop.f32.mrf.mxu0
        %v2987 = vadd.f32 0.0, %v2986
        %v2988 = vpop.f32.mrf.mxu0
        %v2989 = vadd.f32 0.0, %v2988
        %v2990 = vpop.f32.mrf.mxu0
        %v2991 = vpop.f32.mrf.mxu0
        %2992 = vdwg.mxu0
        %v2993 = vadd.f32 %v2705, %v2987
        %v2994 = vadd.f32 %v2707, %v2989
        %s2995 = scalar_lea.vmem %s4, 6
        %v2996 = vld [vmem:[%s2995] sm:$0x3]
        %v2998 = vsel %vm2142, %v2996, 0
        %3000 = vmatprep.subr.bf16.mxu0 0
        %3001 = vmatpush1.bf16.msra.mxu0 0
        %3002 = vmatprep.subr.bf16.mxu0 0
        %3003 = vmatpush1.bf16.msra.mxu0 0
        %3004 = vmatprep.subr.bf16.mxu0 0
        %3005 = vmatpush1.bf16.msra.mxu0 0
        %3006 = vmatprep.subr.bf16.mxu0 0
        %3007 = vmatpush1.bf16.msra.mxu0 0
        %3008 = vmatprep.subr.bf16.mxu0 0
        %3009 = vmatpush1.bf16.msra.mxu0 0
        %3010 = vmatprep.subr.bf16.mxu0 0
        %3011 = vmatpush1.bf16.msra.mxu0 0
        %3012 = vmatprep.subr.bf16.mxu0 0
        %3013 = vmatpush1.bf16.msra.mxu0 0
        %3014 = vmatprep.subr.bf16.mxu0 %v2151
        %3015 = vmatpush1.bf16.msra.mxu0 %v2148
        %3016 = vmatprep.subr.bf16.mxu0 0
        %3017 = vmatpush2.bf16.msra.mxu0 0
        %3018 = vmatprep.subr.bf16.mxu0 0
        %3019 = vmatpush2.bf16.msra.mxu0 0
        %3020 = vmatprep.subr.bf16.mxu0 0
        %3021 = vmatpush2.bf16.msra.mxu0 0
        %3022 = vmatprep.subr.bf16.mxu0 0
        %3023 = vmatpush2.bf16.msra.mxu0 0
        %3024 = vmatprep.subr.bf16.mxu0 0
        %3025 = vmatpush2.bf16.msra.mxu0 0
        %3026 = vmatprep.subr.bf16.mxu0 0
        %3027 = vmatpush2.bf16.msra.mxu0 0
        %3028 = vmatprep.subr.bf16.mxu0 0
        %3029 = vmatpush2.bf16.msra.mxu0 0
        %3030 = vmatprep.subr.bf16.mxu0 0
        %3031 = vmatpush2.bf16.msra.mxu0 0
        %3032 = vmatprep.mubr.bf16.mxu0 0
        %3033 = vmatmul.mubr.bf16.gmra.mxu0 %v2998
        %v3034 = vpop.f32.mrf.mxu0
        %v3035 = vadd.f32 0.0, %v3034
        %v3036 = vpop.f32.mrf.mxu0
        %v3037 = vadd.f32 0.0, %v3036
        %v3038 = vpop.f32.mrf.mxu0
        %v3039 = vpop.f32.mrf.mxu0
        %3040 = vdwg.mxu0
        %v3041 = vpack.c.bf16 %v3035, %v3035
        %v3042 = vpack.c.bf16 %v3037, %v3037
        %s3043 = scalar_lea.vmem %s5, 768
        %v3044 = vld [vmem:[%s3043] sm:$0xff]
        %v3045 = vld [vmem:[%s3043 + $0x8] sm:$0xff]
        %v3046 = vld [vmem:[%s3043 + $0x10] sm:$0xff]
        %v3047 = vld [vmem:[%s3043 + $0x18] sm:$0xff]
        %v3048 = vld [vmem:[%s3043 + $0x20] sm:$0xff]
        %v3049 = vld [vmem:[%s3043 + $0x28] sm:$0xff]
        %v3050 = vld [vmem:[%s3043 + $0x30] sm:$0xff]
        %v3051 = vld [vmem:[%s3043 + $0x38] sm:$0xff]
        %v3052 = vld [vmem:[%s3043 + $0x40] sm:$0xff]
        %v3053 = vld [vmem:[%s3043 + $0x48] sm:$0xff]
        %v3054 = vld [vmem:[%s3043 + $0x50] sm:$0xff]
        %v3055 = vld [vmem:[%s3043 + $0x58] sm:$0xff]
        %v3056 = vld [vmem:[%s3043 + $0x60] sm:$0xff]
        %v3057 = vld [vmem:[%s3043 + $0x68] sm:$0xff]
        %v3058 = vld [vmem:[%s3043 + $0x70] sm:$0xff]
        %v3059 = vld [vmem:[%s3043 + $0x78] sm:$0xff]
        %v3060 = vld [vmem:[%s3043 + $0x80] sm:$0xff]
        %v3061 = vld [vmem:[%s3043 + $0x88] sm:$0xff]
        %v3062 = vld [vmem:[%s3043 + $0x90] sm:$0xff]
        %v3063 = vld [vmem:[%s3043 + $0x98] sm:$0xff]
        %v3064 = vld [vmem:[%s3043 + $0xa0] sm:$0xff]
        %v3065 = vld [vmem:[%s3043 + $0xa8] sm:$0xff]
        %v3066 = vld [vmem:[%s3043 + $0xb0] sm:$0xff]
        %v3067 = vld [vmem:[%s3043 + $0xb8] sm:$0xff]
        %v3068 = vld [vmem:[%s3043 + $0xc0] sm:$0xff]
        %v3069 = vld [vmem:[%s3043 + $0xc8] sm:$0xff]
        %v3070 = vld [vmem:[%s3043 + $0xd0] sm:$0xff]
        %v3071 = vld [vmem:[%s3043 + $0xd8] sm:$0xff]
        %v3072 = vld [vmem:[%s3043 + $0xe0] sm:$0xff]
        %v3073 = vld [vmem:[%s3043 + $0xe8] sm:$0xff]
        %v3074 = vld [vmem:[%s3043 + $0xf0] sm:$0xff]
        %v3075 = vld [vmem:[%s3043 + $0xf8] sm:$0xff]
        %v3108 = vunpack.c.l.b16 %v3044
        %v3109 = vunpack.c.h.b16 %v3044
        %v3110 = vunpack.c.l.b16 %v3045
        %v3111 = vunpack.c.h.b16 %v3045
        %v3112 = vunpack.c.l.b16 %v3046
        %v3113 = vunpack.c.h.b16 %v3046
        %v3114 = vunpack.c.l.b16 %v3047
        %v3115 = vunpack.c.h.b16 %v3047
        %v3116 = vunpack.c.l.b16 %v3048
        %v3117 = vunpack.c.h.b16 %v3048
        %v3118 = vunpack.c.l.b16 %v3049
        %v3119 = vunpack.c.h.b16 %v3049
        %v3120 = vunpack.c.l.b16 %v3050
        %v3121 = vunpack.c.h.b16 %v3050
        %v3122 = vunpack.c.l.b16 %v3051
        %v3123 = vunpack.c.h.b16 %v3051
        %v3124 = vunpack.c.l.b16 %v3052
        %v3125 = vunpack.c.h.b16 %v3052
        %v3126 = vunpack.c.l.b16 %v3053
        %v3127 = vunpack.c.h.b16 %v3053
        %v3128 = vunpack.c.l.b16 %v3054
        %v3129 = vunpack.c.h.b16 %v3054
        %v3130 = vunpack.c.l.b16 %v3055
        %v3131 = vunpack.c.h.b16 %v3055
        %v3132 = vunpack.c.l.b16 %v3056
        %v3133 = vunpack.c.h.b16 %v3056
        %v3134 = vunpack.c.l.b16 %v3057
        %v3135 = vunpack.c.h.b16 %v3057
        %v3136 = vunpack.c.l.b16 %v3058
        %v3137 = vunpack.c.h.b16 %v3058
        %v3138 = vunpack.c.l.b16 %v3059
        %v3139 = vunpack.c.h.b16 %v3059
        %v3140 = vunpack.c.l.b16 %v3060
        %v3141 = vunpack.c.h.b16 %v3060
        %v3142 = vunpack.c.l.b16 %v3061
        %v3143 = vunpack.c.h.b16 %v3061
        %v3144 = vunpack.c.l.b16 %v3062
        %v3145 = vunpack.c.h.b16 %v3062
        %v3146 = vunpack.c.l.b16 %v3063
        %v3147 = vunpack.c.h.b16 %v3063
        %v3148 = vunpack.c.l.b16 %v3064
        %v3149 = vunpack.c.h.b16 %v3064
        %v3150 = vunpack.c.l.b16 %v3065
        %v3151 = vunpack.c.h.b16 %v3065
        %v3152 = vunpack.c.l.b16 %v3066
        %v3153 = vunpack.c.h.b16 %v3066
        %v3154 = vunpack.c.l.b16 %v3067
        %v3155 = vunpack.c.h.b16 %v3067
        %v3156 = vunpack.c.l.b16 %v3068
        %v3157 = vunpack.c.h.b16 %v3068
        %v3158 = vunpack.c.l.b16 %v3069
        %v3159 = vunpack.c.h.b16 %v3069
        %v3160 = vunpack.c.l.b16 %v3070
        %v3161 = vunpack.c.h.b16 %v3070
        %v3162 = vunpack.c.l.b16 %v3071
        %v3163 = vunpack.c.h.b16 %v3071
        %v3164 = vunpack.c.l.b16 %v3072
        %v3165 = vunpack.c.h.b16 %v3072
        %v3166 = vunpack.c.l.b16 %v3073
        %v3167 = vunpack.c.h.b16 %v3073
        %v3168 = vunpack.c.l.b16 %v3074
        %v3169 = vunpack.c.h.b16 %v3074
        %v3170 = vunpack.c.l.b16 %v3075
        %v3171 = vunpack.c.h.b16 %v3075
        %v3172 = vpack.c.b16 %v3110, %v3108
        %v3173 = vpack.c.b16 %v3111, %v3109
        %v3174 = vpack.c.b16 %v3114, %v3112
        %v3175 = vpack.c.b16 %v3115, %v3113
        %v3176 = vpack.c.b16 %v3118, %v3116
        %v3177 = vpack.c.b16 %v3119, %v3117
        %v3178 = vpack.c.b16 %v3122, %v3120
        %v3179 = vpack.c.b16 %v3123, %v3121
        %v3180 = vpack.c.b16 %v3126, %v3124
        %v3181 = vpack.c.b16 %v3127, %v3125
        %v3182 = vpack.c.b16 %v3130, %v3128
        %v3183 = vpack.c.b16 %v3131, %v3129
        %v3184 = vpack.c.b16 %v3134, %v3132
        %v3185 = vpack.c.b16 %v3135, %v3133
        %v3186 = vpack.c.b16 %v3138, %v3136
        %v3187 = vpack.c.b16 %v3139, %v3137
        %v3188 = vpack.c.b16 %v3142, %v3140
        %v3189 = vpack.c.b16 %v3143, %v3141
        %v3190 = vpack.c.b16 %v3146, %v3144
        %v3191 = vpack.c.b16 %v3147, %v3145
        %v3192 = vpack.c.b16 %v3150, %v3148
        %v3193 = vpack.c.b16 %v3151, %v3149
        %v3194 = vpack.c.b16 %v3154, %v3152
        %v3195 = vpack.c.b16 %v3155, %v3153
        %v3196 = vpack.c.b16 %v3158, %v3156
        %v3197 = vpack.c.b16 %v3159, %v3157
        %v3198 = vpack.c.b16 %v3162, %v3160
        %v3199 = vpack.c.b16 %v3163, %v3161
        %v3200 = vpack.c.b16 %v3166, %v3164
        %v3201 = vpack.c.b16 %v3167, %v3165
        %v3202 = vpack.c.b16 %v3170, %v3168
        %v3203 = vpack.c.b16 %v3171, %v3169
        %3236 = vmatprep.subr.bf16.mxu0 %v3187
        %3237 = vmatpush1.bf16.msra.mxu0 %v3186
        %3238 = vmatprep.subr.bf16.mxu0 %v3185
        %3239 = vmatpush1.bf16.msra.mxu0 %v3184
        %3240 = vmatprep.subr.bf16.mxu0 %v3183
        %3241 = vmatpush1.bf16.msra.mxu0 %v3182
        %3242 = vmatprep.subr.bf16.mxu0 %v3181
        %3243 = vmatpush1.bf16.msra.mxu0 %v3180
        %3244 = vmatprep.subr.bf16.mxu0 %v3179
        %3245 = vmatpush1.bf16.msra.mxu0 %v3178
        %3246 = vmatprep.subr.bf16.mxu0 %v3177
        %3247 = vmatpush1.bf16.msra.mxu0 %v3176
        %3248 = vmatprep.subr.bf16.mxu0 %v3175
        %3249 = vmatpush1.bf16.msra.mxu0 %v3174
        %3250 = vmatprep.subr.bf16.mxu0 %v3173
        %3251 = vmatpush1.bf16.msra.mxu0 %v3172
        %3252 = vmatprep.subr.bf16.mxu0 %v3203
        %3253 = vmatpush2.bf16.msra.mxu0 %v3202
        %3254 = vmatprep.subr.bf16.mxu0 %v3201
        %3255 = vmatpush2.bf16.msra.mxu0 %v3200
        %3256 = vmatprep.subr.bf16.mxu0 %v3199
        %3257 = vmatpush2.bf16.msra.mxu0 %v3198
        %3258 = vmatprep.subr.bf16.mxu0 %v3197
        %3259 = vmatpush2.bf16.msra.mxu0 %v3196
        %3260 = vmatprep.subr.bf16.mxu0 %v3195
        %3261 = vmatpush2.bf16.msra.mxu0 %v3194
        %3262 = vmatprep.subr.bf16.mxu0 %v3193
        %3263 = vmatpush2.bf16.msra.mxu0 %v3192
        %3264 = vmatprep.subr.bf16.mxu0 %v3191
        %3265 = vmatpush2.bf16.msra.mxu0 %v3190
        %3266 = vmatprep.subr.bf16.mxu0 %v3189
        %3267 = vmatpush2.bf16.msra.mxu0 %v3188
        %3268 = vmatprep.mubr.bf16.mxu0 %v3042
        %3269 = vmatmul.mubr.bf16.gmra.mxu0 %v3041
        %v3270 = vpop.f32.mrf.mxu0
        %v3271 = vadd.f32 0.0, %v3270
        %v3272 = vpop.f32.mrf.mxu0
        %v3273 = vadd.f32 0.0, %v3272
        %v3274 = vpop.f32.mrf.mxu0
        %v3275 = vpop.f32.mrf.mxu0
        %3276 = vdwg.mxu0
        %v3277 = vadd.f32 %v2993, %v3271
        %v3278 = vadd.f32 %v2994, %v3273
        %v3279 = vld [vmem:[%s6] sm:$0x3]
        %v3281 = vlaneseq
        %v3282 = vshrl.u32 %v3281, 7
        %v3283 = vsub.s32 0, %v3282
        %v3284 = vrot.slane %v3279, %v3283
        %v3285 = vlaneseq
        %v3286 = vshrl.u32 %v3285, 7
        %v3287 = vsub.s32 1, %v3286
        %v3288 = vrot.slane %v3279, %v3287
        %v3291 = vadd.f32 %v3277, %v3284
        %v3292 = vadd.f32 %v3278, %v3288
        %v3293 = vmax.f32 %v3291, 0.0
        %v3294 = vmax.f32 %v3292, 0.0
        %v3295 = vpack.c.bf16 %v3293, %v3293
        %v3296 = vpack.c.bf16 %v3294, %v3294
        %v3297 = vld [vmem:[%s7] sm:$0x1]
        %vm3298 = vcmask 23552
        %v3300 = vsel %vm3298, %v3297, 0
        %vm3302 = vcmask 1040384
        %v3303 = vsel %vm3302, 4294967295, 65535
        %v3304 = vsel %vm501, %v3303, 0
        %v3306 = vand.u32 %v3295, %v3304
        %v3309 = vand.u32 %v3296, %v3304
        %3311 = vmatprep.subr.bf16.mxu0 0
        %3312 = vmatpush1.bf16.msra.mxu0 0
        %3313 = vmatprep.subr.bf16.mxu0 0
        %3314 = vmatpush1.bf16.msra.mxu0 0
        %3315 = vmatprep.subr.bf16.mxu0 0
        %3316 = vmatpush1.bf16.msra.mxu0 0
        %3317 = vmatprep.subr.bf16.mxu0 0
        %3318 = vmatpush1.bf16.msra.mxu0 0
        %3319 = vmatprep.subr.bf16.mxu0 0
        %3320 = vmatpush1.bf16.msra.mxu0 0
        %3321 = vmatprep.subr.bf16.mxu0 0
        %3322 = vmatpush1.bf16.msra.mxu0 0
        %3323 = vmatprep.subr.bf16.mxu0 0
        %3324 = vmatpush1.bf16.msra.mxu0 0
        %3325 = vmatprep.subr.bf16.mxu0 %v3309
        %3326 = vmatpush1.bf16.msra.mxu0 %v3306
        %3327 = vmatprep.subr.bf16.mxu0 0
        %3328 = vmatpush2.bf16.msra.mxu0 0
        %3329 = vmatprep.subr.bf16.mxu0 0
        %3330 = vmatpush2.bf16.msra.mxu0 0
        %3331 = vmatprep.subr.bf16.mxu0 0
        %3332 = vmatpush2.bf16.msra.mxu0 0
        %3333 = vmatprep.subr.bf16.mxu0 0
        %3334 = vmatpush2.bf16.msra.mxu0 0
        %3335 = vmatprep.subr.bf16.mxu0 0
        %3336 = vmatpush2.bf16.msra.mxu0 0
        %3337 = vmatprep.subr.bf16.mxu0 0
        %3338 = vmatpush2.bf16.msra.mxu0 0
        %3339 = vmatprep.subr.bf16.mxu0 0
        %3340 = vmatpush2.bf16.msra.mxu0 0
        %3341 = vmatprep.subr.bf16.mxu0 0
        %3342 = vmatpush2.bf16.msra.mxu0 0
        %3343 = vmatprep.mubr.bf16.mxu0 0
        %3344 = vmatmul.mubr.bf16.gmra.mxu0 %v3300
        %v3345 = vpop.f32.mrf.mxu0
        %v3346 = vadd.f32 0.0, %v3345
        %v3347 = vpop.f32.mrf.mxu0
        %v3348 = vadd.f32 0.0, %v3347
        %v3349 = vpop.f32.mrf.mxu0
        %v3350 = vpop.f32.mrf.mxu0
        %3351 = vdwg.mxu0
        %v3352 = vpack.c.bf16 %v3346, %v3346
        %v3353 = vpack.c.bf16 %v3348, %v3348
        %v3354 = vld [vmem:[%s8] sm:$0xf]
        %v3355 = vld [vmem:[%s8 + $0x4] sm:$0xf]
        %v3356 = vld [vmem:[%s8 + $0x8] sm:$0xf]
        %v3357 = vld [vmem:[%s8 + $0xc] sm:$0xf]
        %v3358 = vld [vmem:[%s8 + $0x10] sm:$0xf]
        %v3359 = vld [vmem:[%s8 + $0x14] sm:$0xf]
        %v3360 = vld [vmem:[%s8 + $0x18] sm:$0xf]
        %v3361 = vld [vmem:[%s8 + $0x1c] sm:$0xf]
        %v3362 = vld [vmem:[%s8 + $0x20] sm:$0xf]
        %v3363 = vld [vmem:[%s8 + $0x24] sm:$0xf]
        %v3364 = vld [vmem:[%s8 + $0x28] sm:$0xf]
        %v3365 = vld [vmem:[%s8 + $0x2c] sm:$0xf]
        %v3366 = vld [vmem:[%s8 + $0x30] sm:$0xf]
        %v3367 = vld [vmem:[%s8 + $0x34] sm:$0xf]
        %v3368 = vld [vmem:[%s8 + $0x38] sm:$0xf]
        %v3369 = vld [vmem:[%s8 + $0x3c] sm:$0xf]
        %v3370 = vld [vmem:[%s8 + $0x40] sm:$0xf]
        %v3371 = vld [vmem:[%s8 + $0x44] sm:$0xf]
        %v3372 = vld [vmem:[%s8 + $0x48] sm:$0xf]
        %v3373 = vld [vmem:[%s8 + $0x4c] sm:$0xf]
        %v3374 = vld [vmem:[%s8 + $0x50] sm:$0xf]
        %v3375 = vld [vmem:[%s8 + $0x54] sm:$0xf]
        %v3376 = vld [vmem:[%s8 + $0x58] sm:$0xf]
        %v3377 = vld [vmem:[%s8 + $0x5c] sm:$0xf]
        %s3378 = scalar_lea.vmem %s7, 1
        %v3379 = vld [vmem:[%s3378] sm:$0x1]
        %v3381 = vsel %vm3298, %v3379, 0
        %3383 = vmatprep.subr.bf16.mxu0 0
        %3384 = vmatpush1.bf16.msra.mxu0 0
        %3385 = vmatprep.subr.bf16.mxu0 0
        %3386 = vmatpush1.bf16.msra.mxu0 0
        %3387 = vmatprep.subr.bf16.mxu0 0
        %3388 = vmatpush1.bf16.msra.mxu0 0
        %3389 = vmatprep.subr.bf16.mxu0 0
        %3390 = vmatpush1.bf16.msra.mxu0 0
        %3391 = vmatprep.subr.bf16.mxu0 0
        %3392 = vmatpush1.bf16.msra.mxu0 0
        %3393 = vmatprep.subr.bf16.mxu0 0
        %3394 = vmatpush1.bf16.msra.mxu0 0
        %3395 = vmatprep.subr.bf16.mxu0 0
        %3396 = vmatpush1.bf16.msra.mxu0 0
        %3397 = vmatprep.subr.bf16.mxu0 %v3309
        %3398 = vmatpush1.bf16.msra.mxu0 %v3306
        %3399 = vmatprep.subr.bf16.mxu0 0
        %3400 = vmatpush2.bf16.msra.mxu0 0
        %3401 = vmatprep.subr.bf16.mxu0 0
        %3402 = vmatpush2.bf16.msra.mxu0 0
        %3403 = vmatprep.subr.bf16.mxu0 0
        %3404 = vmatpush2.bf16.msra.mxu0 0
        %3405 = vmatprep.subr.bf16.mxu0 0
        %3406 = vmatpush2.bf16.msra.mxu0 0
        %3407 = vmatprep.subr.bf16.mxu0 0
        %3408 = vmatpush2.bf16.msra.mxu0 0
        %3409 = vmatprep.subr.bf16.mxu0 0
        %3410 = vmatpush2.bf16.msra.mxu0 0
        %3411 = vmatprep.subr.bf16.mxu0 0
        %3412 = vmatpush2.bf16.msra.mxu0 0
        %3413 = vmatprep.subr.bf16.mxu0 0
        %3414 = vmatpush2.bf16.msra.mxu0 0
        %3415 = vmatprep.mubr.bf16.mxu0 0
        %3416 = vmatmul.mubr.bf16.gmra.mxu0 %v3381
        %v3417 = vpop.f32.mrf.mxu0
        %v3418 = vadd.f32 0.0, %v3417
        %v3419 = vpop.f32.mrf.mxu0
        %v3420 = vadd.f32 0.0, %v3419
        %v3421 = vpop.f32.mrf.mxu0
        %v3422 = vpop.f32.mrf.mxu0
        %3423 = vdwg.mxu0
        %v3424 = vpack.c.bf16 %v3418, %v3418
        %v3425 = vpack.c.bf16 %v3420, %v3420
        %s3426 = scalar_lea.vmem %s8, 96
        %v3427 = vld [vmem:[%s3426] sm:$0xf]
        %v3428 = vld [vmem:[%s3426 + $0x4] sm:$0xf]
        %v3429 = vld [vmem:[%s3426 + $0x8] sm:$0xf]
        %v3430 = vld [vmem:[%s3426 + $0xc] sm:$0xf]
        %v3431 = vld [vmem:[%s3426 + $0x10] sm:$0xf]
        %v3432 = vld [vmem:[%s3426 + $0x14] sm:$0xf]
        %v3433 = vld [vmem:[%s3426 + $0x18] sm:$0xf]
        %v3434 = vld [vmem:[%s3426 + $0x1c] sm:$0xf]
        %v3435 = vld [vmem:[%s3426 + $0x20] sm:$0xf]
        %v3436 = vld [vmem:[%s3426 + $0x24] sm:$0xf]
        %v3437 = vld [vmem:[%s3426 + $0x28] sm:$0xf]
        %v3438 = vld [vmem:[%s3426 + $0x2c] sm:$0xf]
        %v3439 = vld [vmem:[%s3426 + $0x30] sm:$0xf]
        %v3440 = vld [vmem:[%s3426 + $0x34] sm:$0xf]
        %v3441 = vld [vmem:[%s3426 + $0x38] sm:$0xf]
        %v3442 = vld [vmem:[%s3426 + $0x3c] sm:$0xf]
        %v3443 = vld [vmem:[%s3426 + $0x40] sm:$0xf]
        %v3444 = vld [vmem:[%s3426 + $0x44] sm:$0xf]
        %v3445 = vld [vmem:[%s3426 + $0x48] sm:$0xf]
        %v3446 = vld [vmem:[%s3426 + $0x4c] sm:$0xf]
        %v3447 = vld [vmem:[%s3426 + $0x50] sm:$0xf]
        %v3448 = vld [vmem:[%s3426 + $0x54] sm:$0xf]
        %v3449 = vld [vmem:[%s3426 + $0x58] sm:$0xf]
        %v3450 = vld [vmem:[%s3426 + $0x5c] sm:$0xf]
        %v3475 = vunpack.c.l.b16 %v3427
        %v3476 = vunpack.c.l.b16 %v3428
        %v3477 = vunpack.c.l.b16 %v3429
        %v3478 = vunpack.c.l.b16 %v3430
        %v3479 = vunpack.c.l.b16 %v3431
        %v3480 = vunpack.c.l.b16 %v3432
        %v3481 = vunpack.c.l.b16 %v3433
        %v3482 = vunpack.c.l.b16 %v3434
        %v3483 = vunpack.c.l.b16 %v3435
        %v3484 = vunpack.c.l.b16 %v3436
        %v3485 = vunpack.c.l.b16 %v3437
        %v3486 = vunpack.c.l.b16 %v3438
        %v3487 = vunpack.c.l.b16 %v3439
        %v3488 = vunpack.c.l.b16 %v3440
        %v3489 = vunpack.c.l.b16 %v3441
        %v3490 = vunpack.c.l.b16 %v3442
        %v3491 = vunpack.c.l.b16 %v3443
        %v3492 = vunpack.c.l.b16 %v3444
        %v3493 = vunpack.c.l.b16 %v3445
        %v3494 = vunpack.c.l.b16 %v3446
        %v3495 = vunpack.c.l.b16 %v3447
        %v3496 = vunpack.c.l.b16 %v3448
        %v3497 = vunpack.c.l.b16 %v3449
        %v3498 = vunpack.c.l.b16 %v3450
        %v3499 = vpack.c.b16 %v3476, %v3475
        %v3500 = vpack.c.b16 %v3478, %v3477
        %v3501 = vpack.c.b16 %v3480, %v3479
        %v3502 = vpack.c.b16 %v3482, %v3481
        %v3503 = vpack.c.b16 %v3484, %v3483
        %v3504 = vpack.c.b16 %v3486, %v3485
        %v3505 = vpack.c.b16 %v3488, %v3487
        %v3506 = vpack.c.b16 %v3490, %v3489
        %v3507 = vpack.c.b16 %v3492, %v3491
        %v3508 = vpack.c.b16 %v3494, %v3493
        %v3509 = vpack.c.b16 %v3496, %v3495
        %v3510 = vpack.c.b16 %v3498, %v3497
        %vm3523 = vcmask 523264
        %v3525 = vsel %vm3523, %v3425, 0
        %3527 = vmatprep.subr.bf16.mxu0 0
        %3528 = vmatpush1.bf16.msra.mxu0 %v3506
        %3529 = vmatprep.subr.bf16.mxu0 0
        %3530 = vmatpush1.bf16.msra.mxu0 %v3505
        %3531 = vmatprep.subr.bf16.mxu0 0
        %3532 = vmatpush1.bf16.msra.mxu0 %v3504
        %3533 = vmatprep.subr.bf16.mxu0 0
        %3534 = vmatpush1.bf16.msra.mxu0 %v3503
        %3535 = vmatprep.subr.bf16.mxu0 0
        %3536 = vmatpush1.bf16.msra.mxu0 %v3502
        %3537 = vmatprep.subr.bf16.mxu0 0
        %3538 = vmatpush1.bf16.msra.mxu0 %v3501
        %3539 = vmatprep.subr.bf16.mxu0 0
        %3540 = vmatpush1.bf16.msra.mxu0 %v3500
        %3541 = vmatprep.subr.bf16.mxu0 0
        %3542 = vmatpush1.bf16.msra.mxu0 %v3499
        %3543 = vmatprep.subr.bf16.mxu0 0
        %3544 = vmatpush2.bf16.msra.mxu0 0
        %3545 = vmatprep.subr.bf16.mxu0 0
        %3546 = vmatpush2.bf16.msra.mxu0 0
        %3547 = vmatprep.subr.bf16.mxu0 0
        %3548 = vmatpush2.bf16.msra.mxu0 0
        %3549 = vmatprep.subr.bf16.mxu0 0
        %3550 = vmatpush2.bf16.msra.mxu0 0
        %3551 = vmatprep.subr.bf16.mxu0 0
        %3552 = vmatpush2.bf16.msra.mxu0 %v3510
        %3553 = vmatprep.subr.bf16.mxu0 0
        %3554 = vmatpush2.bf16.msra.mxu0 %v3509
        %3555 = vmatprep.subr.bf16.mxu0 0
        %3556 = vmatpush2.bf16.msra.mxu0 %v3508
        %3557 = vmatprep.subr.bf16.mxu0 0
        %3558 = vmatpush2.bf16.msra.mxu0 %v3507
        %3559 = vmatprep.mubr.bf16.mxu0 %v3525
        %3560 = vmatmul.mubr.bf16.gmra.mxu0 %v3424
        %v3561 = vpop.f32.mrf.mxu0
        %v3562 = vadd.f32 0.0, %v3561
        %v3563 = vpop.f32.mrf.mxu0
        %v3564 = vpop.f32.mrf.mxu0
        %v3565 = vpop.f32.mrf.mxu0
        %3566 = vdwg.mxu0
        %v3591 = vunpack.c.l.b16 %v3354
        %v3592 = vunpack.c.l.b16 %v3355
        %v3593 = vunpack.c.l.b16 %v3356
        %v3594 = vunpack.c.l.b16 %v3357
        %v3595 = vunpack.c.l.b16 %v3358
        %v3596 = vunpack.c.l.b16 %v3359
        %v3597 = vunpack.c.l.b16 %v3360
        %v3598 = vunpack.c.l.b16 %v3361
        %v3599 = vunpack.c.l.b16 %v3362
        %v3600 = vunpack.c.l.b16 %v3363
        %v3601 = vunpack.c.l.b16 %v3364
        %v3602 = vunpack.c.l.b16 %v3365
        %v3603 = vunpack.c.l.b16 %v3366
        %v3604 = vunpack.c.l.b16 %v3367
        %v3605 = vunpack.c.l.b16 %v3368
        %v3606 = vunpack.c.l.b16 %v3369
        %v3607 = vunpack.c.l.b16 %v3370
        %v3608 = vunpack.c.l.b16 %v3371
        %v3609 = vunpack.c.l.b16 %v3372
        %v3610 = vunpack.c.l.b16 %v3373
        %v3611 = vunpack.c.l.b16 %v3374
        %v3612 = vunpack.c.l.b16 %v3375
        %v3613 = vunpack.c.l.b16 %v3376
        %v3614 = vunpack.c.l.b16 %v3377
        %v3615 = vpack.c.b16 %v3592, %v3591
        %v3616 = vpack.c.b16 %v3594, %v3593
        %v3617 = vpack.c.b16 %v3596, %v3595
        %v3618 = vpack.c.b16 %v3598, %v3597
        %v3619 = vpack.c.b16 %v3600, %v3599
        %v3620 = vpack.c.b16 %v3602, %v3601
        %v3621 = vpack.c.b16 %v3604, %v3603
        %v3622 = vpack.c.b16 %v3606, %v3605
        %v3623 = vpack.c.b16 %v3608, %v3607
        %v3624 = vpack.c.b16 %v3610, %v3609
        %v3625 = vpack.c.b16 %v3612, %v3611
        %v3626 = vpack.c.b16 %v3614, %v3613
        %v3640 = vsel %vm3523, %v3353, 0
        %3642 = vmatprep.subr.bf16.mxu0 0
        %3643 = vmatpush1.bf16.msra.mxu0 %v3622
        %3644 = vmatprep.subr.bf16.mxu0 0
        %3645 = vmatpush1.bf16.msra.mxu0 %v3621
        %3646 = vmatprep.subr.bf16.mxu0 0
        %3647 = vmatpush1.bf16.msra.mxu0 %v3620
        %3648 = vmatprep.subr.bf16.mxu0 0
        %3649 = vmatpush1.bf16.msra.mxu0 %v3619
        %3650 = vmatprep.subr.bf16.mxu0 0
        %3651 = vmatpush1.bf16.msra.mxu0 %v3618
        %3652 = vmatprep.subr.bf16.mxu0 0
        %3653 = vmatpush1.bf16.msra.mxu0 %v3617
        %3654 = vmatprep.subr.bf16.mxu0 0
        %3655 = vmatpush1.bf16.msra.mxu0 %v3616
        %3656 = vmatprep.subr.bf16.mxu0 0
        %3657 = vmatpush1.bf16.msra.mxu0 %v3615
        %3658 = vmatprep.subr.bf16.mxu0 0
        %3659 = vmatpush2.bf16.msra.mxu0 0
        %3660 = vmatprep.subr.bf16.mxu0 0
        %3661 = vmatpush2.bf16.msra.mxu0 0
        %3662 = vmatprep.subr.bf16.mxu0 0
        %3663 = vmatpush2.bf16.msra.mxu0 0
        %3664 = vmatprep.subr.bf16.mxu0 0
        %3665 = vmatpush2.bf16.msra.mxu0 0
        %3666 = vmatprep.subr.bf16.mxu0 0
        %3667 = vmatpush2.bf16.msra.mxu0 %v3626
        %3668 = vmatprep.subr.bf16.mxu0 0
        %3669 = vmatpush2.bf16.msra.mxu0 %v3625
        %3670 = vmatprep.subr.bf16.mxu0 0
        %3671 = vmatpush2.bf16.msra.mxu0 %v3624
        %3672 = vmatprep.subr.bf16.mxu0 0
        %3673 = vmatpush2.bf16.msra.mxu0 %v3623
        %3674 = vmatprep.mubr.bf16.mxu0 %v3640
        %3675 = vmatmul.mubr.bf16.gmra.mxu0 %v3352
        %v3676 = vpop.f32.mrf.mxu0
        %v3677 = vadd.f32 %v3562, %v3676
        %v3678 = vpop.f32.mrf.mxu0
        %v3679 = vpop.f32.mrf.mxu0
        %v3680 = vpop.f32.mrf.mxu0
        %3681 = vdwg.mxu0
        %s3682 = scalar_lea.vmem %s7, 2
        %v3683 = vld [vmem:[%s3682] sm:$0x1]
        %v3685 = vsel %vm3298, %v3683, 0
        %3687 = vmatprep.subr.bf16.mxu0 0
        %3688 = vmatpush1.bf16.msra.mxu0 0
        %3689 = vmatprep.subr.bf16.mxu0 0
        %3690 = vmatpush1.bf16.msra.mxu0 0
        %3691 = vmatprep.subr.bf16.mxu0 0
        %3692 = vmatpush1.bf16.msra.mxu0 0
        %3693 = vmatprep.subr.bf16.mxu0 0
        %3694 = vmatpush1.bf16.msra.mxu0 0
        %3695 = vmatprep.subr.bf16.mxu0 0
        %3696 = vmatpush1.bf16.msra.mxu0 0
        %3697 = vmatprep.subr.bf16.mxu0 0
        %3698 = vmatpush1.bf16.msra.mxu0 0
        %3699 = vmatprep.subr.bf16.mxu0 0
        %3700 = vmatpush1.bf16.msra.mxu0 0
        %3701 = vmatprep.subr.bf16.mxu0 %v3309
        %3702 = vmatpush1.bf16.msra.mxu0 %v3306
        %3703 = vmatprep.subr.bf16.mxu0 0
        %3704 = vmatpush2.bf16.msra.mxu0 0
        %3705 = vmatprep.subr.bf16.mxu0 0
        %3706 = vmatpush2.bf16.msra.mxu0 0
        %3707 = vmatprep.subr.bf16.mxu0 0
        %3708 = vmatpush2.bf16.msra.mxu0 0
        %3709 = vmatprep.subr.bf16.mxu0 0
        %3710 = vmatpush2.bf16.msra.mxu0 0
        %3711 = vmatprep.subr.bf16.mxu0 0
        %3712 = vmatpush2.bf16.msra.mxu0 0
        %3713 = vmatprep.subr.bf16.mxu0 0
        %3714 = vmatpush2.bf16.msra.mxu0 0
        %3715 = vmatprep.subr.bf16.mxu0 0
        %3716 = vmatpush2.bf16.msra.mxu0 0
        %3717 = vmatprep.subr.bf16.mxu0 0
        %3718 = vmatpush2.bf16.msra.mxu0 0
        %3719 = vmatprep.mubr.bf16.mxu0 0
        %3720 = vmatmul.mubr.bf16.gmra.mxu0 %v3685
        %v3721 = vpop.f32.mrf.mxu0
        %v3722 = vadd.f32 0.0, %v3721
        %v3723 = vpop.f32.mrf.mxu0
        %v3724 = vadd.f32 0.0, %v3723
        %v3725 = vpop.f32.mrf.mxu0
        %v3726 = vpop.f32.mrf.mxu0
        %3727 = vdwg.mxu0
        %v3728 = vpack.c.bf16 %v3722, %v3722
        %v3729 = vpack.c.bf16 %v3724, %v3724
        %s3730 = scalar_lea.vmem %s8, 192
        %v3731 = vld [vmem:[%s3730] sm:$0xf]
        %v3732 = vld [vmem:[%s3730 + $0x4] sm:$0xf]
        %v3733 = vld [vmem:[%s3730 + $0x8] sm:$0xf]
        %v3734 = vld [vmem:[%s3730 + $0xc] sm:$0xf]
        %v3735 = vld [vmem:[%s3730 + $0x10] sm:$0xf]
        %v3736 = vld [vmem:[%s3730 + $0x14] sm:$0xf]
        %v3737 = vld [vmem:[%s3730 + $0x18] sm:$0xf]
        %v3738 = vld [vmem:[%s3730 + $0x1c] sm:$0xf]
        %v3739 = vld [vmem:[%s3730 + $0x20] sm:$0xf]
        %v3740 = vld [vmem:[%s3730 + $0x24] sm:$0xf]
        %v3741 = vld [vmem:[%s3730 + $0x28] sm:$0xf]
        %v3742 = vld [vmem:[%s3730 + $0x2c] sm:$0xf]
        %v3743 = vld [vmem:[%s3730 + $0x30] sm:$0xf]
        %v3744 = vld [vmem:[%s3730 + $0x34] sm:$0xf]
        %v3745 = vld [vmem:[%s3730 + $0x38] sm:$0xf]
        %v3746 = vld [vmem:[%s3730 + $0x3c] sm:$0xf]
        %v3747 = vld [vmem:[%s3730 + $0x40] sm:$0xf]
        %v3748 = vld [vmem:[%s3730 + $0x44] sm:$0xf]
        %v3749 = vld [vmem:[%s3730 + $0x48] sm:$0xf]
        %v3750 = vld [vmem:[%s3730 + $0x4c] sm:$0xf]
        %v3751 = vld [vmem:[%s3730 + $0x50] sm:$0xf]
        %v3752 = vld [vmem:[%s3730 + $0x54] sm:$0xf]
        %v3753 = vld [vmem:[%s3730 + $0x58] sm:$0xf]
        %v3754 = vld [vmem:[%s3730 + $0x5c] sm:$0xf]
        %v3779 = vunpack.c.l.b16 %v3731
        %v3780 = vunpack.c.l.b16 %v3732
        %v3781 = vunpack.c.l.b16 %v3733
        %v3782 = vunpack.c.l.b16 %v3734
        %v3783 = vunpack.c.l.b16 %v3735
        %v3784 = vunpack.c.l.b16 %v3736
        %v3785 = vunpack.c.l.b16 %v3737
        %v3786 = vunpack.c.l.b16 %v3738
        %v3787 = vunpack.c.l.b16 %v3739
        %v3788 = vunpack.c.l.b16 %v3740
        %v3789 = vunpack.c.l.b16 %v3741
        %v3790 = vunpack.c.l.b16 %v3742
        %v3791 = vunpack.c.l.b16 %v3743
        %v3792 = vunpack.c.l.b16 %v3744
        %v3793 = vunpack.c.l.b16 %v3745
        %v3794 = vunpack.c.l.b16 %v3746
        %v3795 = vunpack.c.l.b16 %v3747
        %v3796 = vunpack.c.l.b16 %v3748
        %v3797 = vunpack.c.l.b16 %v3749
        %v3798 = vunpack.c.l.b16 %v3750
        %v3799 = vunpack.c.l.b16 %v3751
        %v3800 = vunpack.c.l.b16 %v3752
        %v3801 = vunpack.c.l.b16 %v3753
        %v3802 = vunpack.c.l.b16 %v3754
        %v3803 = vpack.c.b16 %v3780, %v3779
        %v3804 = vpack.c.b16 %v3782, %v3781
        %v3805 = vpack.c.b16 %v3784, %v3783
        %v3806 = vpack.c.b16 %v3786, %v3785
        %v3807 = vpack.c.b16 %v3788, %v3787
        %v3808 = vpack.c.b16 %v3790, %v3789
        %v3809 = vpack.c.b16 %v3792, %v3791
        %v3810 = vpack.c.b16 %v3794, %v3793
        %v3811 = vpack.c.b16 %v3796, %v3795
        %v3812 = vpack.c.b16 %v3798, %v3797
        %v3813 = vpack.c.b16 %v3800, %v3799
        %v3814 = vpack.c.b16 %v3802, %v3801
        %v3828 = vsel %vm3523, %v3729, 0
        %3830 = vmatprep.subr.bf16.mxu0 0
        %3831 = vmatpush1.bf16.msra.mxu0 %v3810
        %3832 = vmatprep.subr.bf16.mxu0 0
        %3833 = vmatpush1.bf16.msra.mxu0 %v3809
        %3834 = vmatprep.subr.bf16.mxu0 0
        %3835 = vmatpush1.bf16.msra.mxu0 %v3808
        %3836 = vmatprep.subr.bf16.mxu0 0
        %3837 = vmatpush1.bf16.msra.mxu0 %v3807
        %3838 = vmatprep.subr.bf16.mxu0 0
        %3839 = vmatpush1.bf16.msra.mxu0 %v3806
        %3840 = vmatprep.subr.bf16.mxu0 0
        %3841 = vmatpush1.bf16.msra.mxu0 %v3805
        %3842 = vmatprep.subr.bf16.mxu0 0
        %3843 = vmatpush1.bf16.msra.mxu0 %v3804
        %3844 = vmatprep.subr.bf16.mxu0 0
        %3845 = vmatpush1.bf16.msra.mxu0 %v3803
        %3846 = vmatprep.subr.bf16.mxu0 0
        %3847 = vmatpush2.bf16.msra.mxu0 0
        %3848 = vmatprep.subr.bf16.mxu0 0
        %3849 = vmatpush2.bf16.msra.mxu0 0
        %3850 = vmatprep.subr.bf16.mxu0 0
        %3851 = vmatpush2.bf16.msra.mxu0 0
        %3852 = vmatprep.subr.bf16.mxu0 0
        %3853 = vmatpush2.bf16.msra.mxu0 0
        %3854 = vmatprep.subr.bf16.mxu0 0
        %3855 = vmatpush2.bf16.msra.mxu0 %v3814
        %3856 = vmatprep.subr.bf16.mxu0 0
        %3857 = vmatpush2.bf16.msra.mxu0 %v3813
        %3858 = vmatprep.subr.bf16.mxu0 0
        %3859 = vmatpush2.bf16.msra.mxu0 %v3812
        %3860 = vmatprep.subr.bf16.mxu0 0
        %3861 = vmatpush2.bf16.msra.mxu0 %v3811
        %3862 = vmatprep.mubr.bf16.mxu0 %v3828
        %3863 = vmatmul.mubr.bf16.gmra.mxu0 %v3728
        %v3864 = vpop.f32.mrf.mxu0
        %v3865 = vadd.f32 0.0, %v3864
        %v3866 = vpop.f32.mrf.mxu0
        %v3867 = vpop.f32.mrf.mxu0
        %v3868 = vpop.f32.mrf.mxu0
        %3869 = vdwg.mxu0
        %v3870 = vadd.f32 %v3677, %v3865
        %v3871 = vld [vmem:[%s9] sm:$0x1]
        %v3872 = vadd.f32 %v3870, %v3871
        %v3873 = vmax.f32 %v3872, 0.0
        %v3874 = vpack.c.bf16 %v3873, %v3873
        %v3875 = vld [vmem:[%s10] sm:$0xff]
        %v3876 = vld [vmem:[%s10 + $0x8] sm:$0xff]
        %v3877 = vld [vmem:[%s10 + $0x10] sm:$0xff]
        %v3878 = vld [vmem:[%s10 + $0x18] sm:$0xff]
        %v3879 = vld [vmem:[%s10 + $0x20] sm:$0xff]
        %v3880 = vld [vmem:[%s10 + $0x28] sm:$0xff]
        %v3881 = vld [vmem:[%s10 + $0x30] sm:$0xff]
        %v3882 = vld [vmem:[%s10 + $0x38] sm:$0xff]
        %v3883 = vld [vmem:[%s10 + $0x40] sm:$0xff]
        %v3884 = vld [vmem:[%s10 + $0x48] sm:$0xff]
        %v3885 = vld [vmem:[%s10 + $0x50] sm:$0xff]
        %v3886 = vld [vmem:[%s10 + $0x58] sm:$0xff]
        %v3887 = vld [vmem:[%s10 + $0x60] sm:$0xff]
        %v3888 = vld [vmem:[%s10 + $0x68] sm:$0xff]
        %v3889 = vld [vmem:[%s10 + $0x70] sm:$0xff]
        %v3890 = vld [vmem:[%s10 + $0x78] sm:$0xff]
        %v3891 = vld [vmem:[%s11] sm:$0xf]
        %v3908 = vunpack.c.l.b16 %v3875
        %v3909 = vunpack.c.h.b16 %v3875
        %v3910 = vunpack.c.l.b16 %v3876
        %v3911 = vunpack.c.h.b16 %v3876
        %v3912 = vunpack.c.l.b16 %v3877
        %v3913 = vunpack.c.h.b16 %v3877
        %v3914 = vunpack.c.l.b16 %v3878
        %v3915 = vunpack.c.h.b16 %v3878
        %v3916 = vunpack.c.l.b16 %v3879
        %v3917 = vunpack.c.h.b16 %v3879
        %v3918 = vunpack.c.l.b16 %v3880
        %v3919 = vunpack.c.h.b16 %v3880
        %v3920 = vunpack.c.l.b16 %v3881
        %v3921 = vunpack.c.h.b16 %v3881
        %v3922 = vunpack.c.l.b16 %v3882
        %v3923 = vunpack.c.h.b16 %v3882
        %v3924 = vunpack.c.l.b16 %v3883
        %v3925 = vunpack.c.h.b16 %v3883
        %v3926 = vunpack.c.l.b16 %v3884
        %v3927 = vunpack.c.h.b16 %v3884
        %v3928 = vunpack.c.l.b16 %v3885
        %v3929 = vunpack.c.h.b16 %v3885
        %v3930 = vunpack.c.l.b16 %v3886
        %v3931 = vunpack.c.h.b16 %v3886
        %v3932 = vunpack.c.l.b16 %v3887
        %v3933 = vunpack.c.h.b16 %v3887
        %v3934 = vunpack.c.l.b16 %v3888
        %v3935 = vunpack.c.h.b16 %v3888
        %v3936 = vunpack.c.l.b16 %v3889
        %v3937 = vunpack.c.h.b16 %v3889
        %v3938 = vunpack.c.l.b16 %v3890
        %v3939 = vunpack.c.h.b16 %v3890
        %v3940 = vpack.c.b16 %v3912, %v3908
        %v3941 = vpack.c.b16 %v3913, %v3909
        %v3942 = vpack.c.b16 %v3914, %v3910
        %v3943 = vpack.c.b16 %v3915, %v3911
        %v3944 = vpack.c.b16 %v3920, %v3916
        %v3945 = vpack.c.b16 %v3921, %v3917
        %v3946 = vpack.c.b16 %v3922, %v3918
        %v3947 = vpack.c.b16 %v3923, %v3919
        %v3948 = vpack.c.b16 %v3928, %v3924
        %v3949 = vpack.c.b16 %v3929, %v3925
        %v3950 = vpack.c.b16 %v3930, %v3926
        %v3951 = vpack.c.b16 %v3931, %v3927
        %v3952 = vpack.c.b16 %v3936, %v3932
        %v3953 = vpack.c.b16 %v3937, %v3933
        %v3954 = vpack.c.b16 %v3938, %v3934
        %v3955 = vpack.c.b16 %v3939, %v3935
        %v3973 = vlaneseq
        %v3974 = vshrl.u32 %v3973, 7
        %v3975 = vsub.s32 0, %v3974
        %v3976 = vrot.slane %v3891, %v3975
        %v3977 = vlaneseq
        %v3978 = vshrl.u32 %v3977, 7
        %v3979 = vsub.s32 1, %v3978
        %v3980 = vrot.slane %v3891, %v3979
        %v3981 = vlaneseq
        %v3982 = vshrl.u32 %v3981, 7
        %v3983 = vsub.s32 2, %v3982
        %v3984 = vrot.slane %v3891, %v3983
        %v3985 = vlaneseq
        %v3986 = vshrl.u32 %v3985, 7
        %v3987 = vsub.s32 3, %v3986
        %v3988 = vrot.slane %v3891, %v3987
        %v3994 = vsel %vm3523, %v3874, 0
        %3996 = vmatprep.subr.bf16.mxu0 0
        %3997 = vmatpush1.bf16.msra.mxu0 0
        %3998 = vmatprep.subr.bf16.mxu0 0
        %3999 = vmatpush1.bf16.msra.mxu0 0
        %4000 = vmatprep.subr.bf16.mxu0 0
        %4001 = vmatpush1.bf16.msra.mxu0 0
        %4002 = vmatprep.subr.bf16.mxu0 0
        %4003 = vmatpush1.bf16.msra.mxu0 0
        %4004 = vmatprep.subr.bf16.mxu0 %v3953
        %4005 = vmatpush1.bf16.msra.mxu0 %v3952
        %4006 = vmatprep.subr.bf16.mxu0 %v3949
        %4007 = vmatpush1.bf16.msra.mxu0 %v3948
        %4008 = vmatprep.subr.bf16.mxu0 %v3945
        %4009 = vmatpush1.bf16.msra.mxu0 %v3944
        %4010 = vmatprep.subr.bf16.mxu0 %v3941
        %4011 = vmatpush1.bf16.msra.mxu0 %v3940
        %4012 = vmatprep.subr.bf16.mxu0 0
        %4013 = vmatpush2.bf16.msra.mxu0 0
        %4014 = vmatprep.subr.bf16.mxu0 0
        %4015 = vmatpush2.bf16.msra.mxu0 0
        %4016 = vmatprep.subr.bf16.mxu0 0
        %4017 = vmatpush2.bf16.msra.mxu0 0
        %4018 = vmatprep.subr.bf16.mxu0 0
        %4019 = vmatpush2.bf16.msra.mxu0 0
        %4020 = vmatprep.subr.bf16.mxu0 0
        %4021 = vmatpush2.bf16.msra.mxu0 0
        %4022 = vmatprep.subr.bf16.mxu0 0
        %4023 = vmatpush2.bf16.msra.mxu0 0
        %4024 = vmatprep.subr.bf16.mxu0 0
        %4025 = vmatpush2.bf16.msra.mxu0 0
        %4026 = vmatprep.subr.bf16.mxu0 0
        %4027 = vmatpush2.bf16.msra.mxu0 0
        %4028 = vmatprep.mubr.bf16.mxu0 0
        %4029 = vmatmul.mubr.bf16.gmra.mxu0 %v3994
        %v4030 = vpop.f32.mrf.mxu0
        %v4031 = vadd.f32 %v3976, %v4030
        %v4032 = vpop.f32.mrf.mxu0
        %v4033 = vadd.f32 %v3980, %v4032
        %v4034 = vpop.f32.mrf.mxu0
        %v4035 = vpop.f32.mrf.mxu0
        %4036 = vdwg.mxu0
        %4037 = vmatprep.subr.bf16.mxu0 0
        %4038 = vmatpush1.bf16.msra.mxu0 0
        %4039 = vmatprep.subr.bf16.mxu0 0
        %4040 = vmatpush1.bf16.msra.mxu0 0
        %4041 = vmatprep.subr.bf16.mxu0 0
        %4042 = vmatpush1.bf16.msra.mxu0 0
        %4043 = vmatprep.subr.bf16.mxu0 0
        %4044 = vmatpush1.bf16.msra.mxu0 0
        %4045 = vmatprep.subr.bf16.mxu0 %v3955
        %4046 = vmatpush1.bf16.msra.mxu0 %v3954
        %4047 = vmatprep.subr.bf16.mxu0 %v3951
        %4048 = vmatpush1.bf16.msra.mxu0 %v3950
        %4049 = vmatprep.subr.bf16.mxu0 %v3947
        %4050 = vmatpush1.bf16.msra.mxu0 %v3946
        %4051 = vmatprep.subr.bf16.mxu0 %v3943
        %4052 = vmatpush1.bf16.msra.mxu0 %v3942
        %4053 = vmatprep.subr.bf16.mxu0 0
        %4054 = vmatpush2.bf16.msra.mxu0 0
        %4055 = vmatprep.subr.bf16.mxu0 0
        %4056 = vmatpush2.bf16.msra.mxu0 0
        %4057 = vmatprep.subr.bf16.mxu0 0
        %4058 = vmatpush2.bf16.msra.mxu0 0
        %4059 = vmatprep.subr.bf16.mxu0 0
        %4060 = vmatpush2.bf16.msra.mxu0 0
        %4061 = vmatprep.subr.bf16.mxu0 0
        %4062 = vmatpush2.bf16.msra.mxu0 0
        %4063 = vmatprep.subr.bf16.mxu0 0
        %4064 = vmatpush2.bf16.msra.mxu0 0
        %4065 = vmatprep.subr.bf16.mxu0 0
        %4066 = vmatpush2.bf16.msra.mxu0 0
        %4067 = vmatprep.subr.bf16.mxu0 0
        %4068 = vmatpush2.bf16.msra.mxu0 0
        %4069 = vmatprep.mubr.bf16.mxu0 0
        %4070 = vmatmul.mubr.bf16.gmra.mxu0 %v3994
        %v4071 = vpop.f32.mrf.mxu0
        %v4072 = vadd.f32 %v3984, %v4071
        %v4073 = vpop.f32.mrf.mxu0
        %v4074 = vadd.f32 %v3988, %v4073
        %v4075 = vpop.f32.mrf.mxu0
        %v4076 = vpop.f32.mrf.mxu0
        %4077 = vdwg.mxu0
        %v4078 = vmax.f32 %v4031, 0.0
        %v4079 = vmax.f32 %v4033, 0.0
        %v4080 = vmax.f32 %v4072, 0.0
        %v4081 = vmax.f32 %v4074, 0.0
        %v4082 = vpack.c.bf16 %v4078, %v4078
        %v4083 = vpack.c.bf16 %v4079, %v4079
        %v4084 = vpack.c.bf16 %v4080, %v4080
        %v4085 = vpack.c.bf16 %v4081, %v4081
        %v4086 = vld [vmem:[%s12] sm:$0xf]
        %v4087 = vld [vmem:[%s12 + $0x4] sm:$0xf]
        %v4088 = vld [vmem:[%s12 + $0x8] sm:$0xf]
        %v4089 = vld [vmem:[%s12 + $0xc] sm:$0xf]
        %v4090 = vld [vmem:[%s12 + $0x10] sm:$0xf]
        %v4091 = vld [vmem:[%s12 + $0x14] sm:$0xf]
        %v4092 = vld [vmem:[%s12 + $0x18] sm:$0xf]
        %v4093 = vld [vmem:[%s12 + $0x1c] sm:$0xf]
        %v4094 = vld [vmem:[%s12 + $0x20] sm:$0xf]
        %v4095 = vld [vmem:[%s12 + $0x24] sm:$0xf]
        %v4096 = vld [vmem:[%s12 + $0x28] sm:$0xf]
        %v4097 = vld [vmem:[%s12 + $0x2c] sm:$0xf]
        %v4098 = vld [vmem:[%s12 + $0x30] sm:$0xf]
        %v4099 = vld [vmem:[%s12 + $0x34] sm:$0xf]
        %v4100 = vld [vmem:[%s12 + $0x38] sm:$0xf]
        %v4101 = vld [vmem:[%s12 + $0x3c] sm:$0xf]
        %v4102 = vld [vmem:[%s12 + $0x40] sm:$0xf]
        %v4103 = vld [vmem:[%s12 + $0x44] sm:$0xf]
        %v4104 = vld [vmem:[%s12 + $0x48] sm:$0xf]
        %v4105 = vld [vmem:[%s12 + $0x4c] sm:$0xf]
        %v4106 = vld [vmem:[%s12 + $0x50] sm:$0xf]
        %v4107 = vld [vmem:[%s12 + $0x54] sm:$0xf]
        %v4108 = vld [vmem:[%s12 + $0x58] sm:$0xf]
        %v4109 = vld [vmem:[%s12 + $0x5c] sm:$0xf]
        %v4110 = vld [vmem:[%s12 + $0x60] sm:$0xf]
        %v4111 = vld [vmem:[%s12 + $0x64] sm:$0xf]
        %v4112 = vld [vmem:[%s12 + $0x68] sm:$0xf]
        %v4113 = vld [vmem:[%s12 + $0x6c] sm:$0xf]
        %v4114 = vld [vmem:[%s12 + $0x70] sm:$0xf]
        %v4115 = vld [vmem:[%s12 + $0x74] sm:$0xf]
        %v4116 = vld [vmem:[%s12 + $0x78] sm:$0xf]
        %v4117 = vld [vmem:[%s12 + $0x7c] sm:$0xf]
        %v4118 = vld [vmem:[%s12 + $0x80] sm:$0xf]
        %v4119 = vld [vmem:[%s12 + $0x84] sm:$0xf]
        %v4120 = vld [vmem:[%s12 + $0x88] sm:$0xf]
        %v4121 = vld [vmem:[%s12 + $0x8c] sm:$0xf]
        %v4122 = vld [vmem:[%s12 + $0x90] sm:$0xf]
        %v4123 = vld [vmem:[%s12 + $0x94] sm:$0xf]
        %v4124 = vld [vmem:[%s12 + $0x98] sm:$0xf]
        %v4125 = vld [vmem:[%s12 + $0x9c] sm:$0xf]
        %v4126 = vld [vmem:[%s12 + $0xa0] sm:$0xf]
        %v4127 = vld [vmem:[%s12 + $0xa4] sm:$0xf]
        %v4128 = vld [vmem:[%s12 + $0xa8] sm:$0xf]
        %v4129 = vld [vmem:[%s12 + $0xac] sm:$0xf]
        %v4130 = vld [vmem:[%s12 + $0xb0] sm:$0xf]
        %v4131 = vld [vmem:[%s12 + $0xb4] sm:$0xf]
        %v4132 = vld [vmem:[%s12 + $0xb8] sm:$0xf]
        %v4133 = vld [vmem:[%s12 + $0xbc] sm:$0xf]
        %v4134 = vld [vmem:[%s12 + $0xc0] sm:$0xf]
        %v4135 = vld [vmem:[%s12 + $0xc4] sm:$0xf]
        %v4136 = vld [vmem:[%s12 + $0xc8] sm:$0xf]
        %v4137 = vld [vmem:[%s12 + $0xcc] sm:$0xf]
        %v4138 = vld [vmem:[%s12 + $0xd0] sm:$0xf]
        %v4139 = vld [vmem:[%s12 + $0xd4] sm:$0xf]
        %v4140 = vld [vmem:[%s12 + $0xd8] sm:$0xf]
        %v4141 = vld [vmem:[%s12 + $0xdc] sm:$0xf]
        %v4142 = vld [vmem:[%s12 + $0xe0] sm:$0xf]
        %v4143 = vld [vmem:[%s12 + $0xe4] sm:$0xf]
        %v4144 = vld [vmem:[%s12 + $0xe8] sm:$0xf]
        %v4145 = vld [vmem:[%s12 + $0xec] sm:$0xf]
        %v4146 = vld [vmem:[%s12 + $0xf0] sm:$0xf]
        %v4147 = vld [vmem:[%s12 + $0xf4] sm:$0xf]
        %v4148 = vld [vmem:[%s12 + $0xf8] sm:$0xf]
        %v4149 = vld [vmem:[%s12 + $0xfc] sm:$0xf]
        %v4150 = vld [vmem:[%s13] sm:$0x1]
        %v4215 = vunpack.c.l.b16 %v4086
        %v4216 = vunpack.c.l.b16 %v4087
        %v4217 = vunpack.c.l.b16 %v4088
        %v4218 = vunpack.c.l.b16 %v4089
        %v4219 = vunpack.c.l.b16 %v4090
        %v4220 = vunpack.c.l.b16 %v4091
        %v4221 = vunpack.c.l.b16 %v4092
        %v4222 = vunpack.c.l.b16 %v4093
        %v4223 = vunpack.c.l.b16 %v4094
        %v4224 = vunpack.c.l.b16 %v4095
        %v4225 = vunpack.c.l.b16 %v4096
        %v4226 = vunpack.c.l.b16 %v4097
        %v4227 = vunpack.c.l.b16 %v4098
        %v4228 = vunpack.c.l.b16 %v4099
        %v4229 = vunpack.c.l.b16 %v4100
        %v4230 = vunpack.c.l.b16 %v4101
        %v4231 = vunpack.c.l.b16 %v4102
        %v4232 = vunpack.c.l.b16 %v4103
        %v4233 = vunpack.c.l.b16 %v4104
        %v4234 = vunpack.c.l.b16 %v4105
        %v4235 = vunpack.c.l.b16 %v4106
        %v4236 = vunpack.c.l.b16 %v4107
        %v4237 = vunpack.c.l.b16 %v4108
        %v4238 = vunpack.c.l.b16 %v4109
        %v4239 = vunpack.c.l.b16 %v4110
        %v4240 = vunpack.c.l.b16 %v4111
        %v4241 = vunpack.c.l.b16 %v4112
        %v4242 = vunpack.c.l.b16 %v4113
        %v4243 = vunpack.c.l.b16 %v4114
        %v4244 = vunpack.c.l.b16 %v4115
        %v4245 = vunpack.c.l.b16 %v4116
        %v4246 = vunpack.c.l.b16 %v4117
        %v4247 = vunpack.c.l.b16 %v4118
        %v4248 = vunpack.c.l.b16 %v4119
        %v4249 = vunpack.c.l.b16 %v4120
        %v4250 = vunpack.c.l.b16 %v4121
        %v4251 = vunpack.c.l.b16 %v4122
        %v4252 = vunpack.c.l.b16 %v4123
        %v4253 = vunpack.c.l.b16 %v4124
        %v4254 = vunpack.c.l.b16 %v4125
        %v4255 = vunpack.c.l.b16 %v4126
        %v4256 = vunpack.c.l.b16 %v4127
        %v4257 = vunpack.c.l.b16 %v4128
        %v4258 = vunpack.c.l.b16 %v4129
        %v4259 = vunpack.c.l.b16 %v4130
        %v4260 = vunpack.c.l.b16 %v4131
        %v4261 = vunpack.c.l.b16 %v4132
        %v4262 = vunpack.c.l.b16 %v4133
        %v4263 = vunpack.c.l.b16 %v4134
        %v4264 = vunpack.c.l.b16 %v4135
        %v4265 = vunpack.c.l.b16 %v4136
        %v4266 = vunpack.c.l.b16 %v4137
        %v4267 = vunpack.c.l.b16 %v4138
        %v4268 = vunpack.c.l.b16 %v4139
        %v4269 = vunpack.c.l.b16 %v4140
        %v4270 = vunpack.c.l.b16 %v4141
        %v4271 = vunpack.c.l.b16 %v4142
        %v4272 = vunpack.c.l.b16 %v4143
        %v4273 = vunpack.c.l.b16 %v4144
        %v4274 = vunpack.c.l.b16 %v4145
        %v4275 = vunpack.c.l.b16 %v4146
        %v4276 = vunpack.c.l.b16 %v4147
        %v4277 = vunpack.c.l.b16 %v4148
        %v4278 = vunpack.c.l.b16 %v4149
        %v4279 = vpack.c.b16 %v4216, %v4215
        %v4280 = vpack.c.b16 %v4218, %v4217
        %v4281 = vpack.c.b16 %v4220, %v4219
        %v4282 = vpack.c.b16 %v4222, %v4221
        %v4283 = vpack.c.b16 %v4224, %v4223
        %v4284 = vpack.c.b16 %v4226, %v4225
        %v4285 = vpack.c.b16 %v4228, %v4227
        %v4286 = vpack.c.b16 %v4230, %v4229
        %v4287 = vpack.c.b16 %v4232, %v4231
        %v4288 = vpack.c.b16 %v4234, %v4233
        %v4289 = vpack.c.b16 %v4236, %v4235
        %v4290 = vpack.c.b16 %v4238, %v4237
        %v4291 = vpack.c.b16 %v4240, %v4239
        %v4292 = vpack.c.b16 %v4242, %v4241
        %v4293 = vpack.c.b16 %v4244, %v4243
        %v4294 = vpack.c.b16 %v4246, %v4245
        %v4295 = vpack.c.b16 %v4248, %v4247
        %v4296 = vpack.c.b16 %v4250, %v4249
        %v4297 = vpack.c.b16 %v4252, %v4251
        %v4298 = vpack.c.b16 %v4254, %v4253
        %v4299 = vpack.c.b16 %v4256, %v4255
        %v4300 = vpack.c.b16 %v4258, %v4257
        %v4301 = vpack.c.b16 %v4260, %v4259
        %v4302 = vpack.c.b16 %v4262, %v4261
        %v4303 = vpack.c.b16 %v4264, %v4263
        %v4304 = vpack.c.b16 %v4266, %v4265
        %v4305 = vpack.c.b16 %v4268, %v4267
        %v4306 = vpack.c.b16 %v4270, %v4269
        %v4307 = vpack.c.b16 %v4272, %v4271
        %v4308 = vpack.c.b16 %v4274, %v4273
        %v4309 = vpack.c.b16 %v4276, %v4275
        %v4310 = vpack.c.b16 %v4278, %v4277
        %4343 = vmatprep.subr.bf16.mxu0 0
        %4344 = vmatpush1.bf16.msra.mxu0 %v4286
        %4345 = vmatprep.subr.bf16.mxu0 0
        %4346 = vmatpush1.bf16.msra.mxu0 %v4285
        %4347 = vmatprep.subr.bf16.mxu0 0
        %4348 = vmatpush1.bf16.msra.mxu0 %v4284
        %4349 = vmatprep.subr.bf16.mxu0 0
        %4350 = vmatpush1.bf16.msra.mxu0 %v4283
        %4351 = vmatprep.subr.bf16.mxu0 0
        %4352 = vmatpush1.bf16.msra.mxu0 %v4282
        %4353 = vmatprep.subr.bf16.mxu0 0
        %4354 = vmatpush1.bf16.msra.mxu0 %v4281
        %4355 = vmatprep.subr.bf16.mxu0 0
        %4356 = vmatpush1.bf16.msra.mxu0 %v4280
        %4357 = vmatprep.subr.bf16.mxu0 0
        %4358 = vmatpush1.bf16.msra.mxu0 %v4279
        %4359 = vmatprep.subr.bf16.mxu0 0
        %4360 = vmatpush2.bf16.msra.mxu0 %v4294
        %4361 = vmatprep.subr.bf16.mxu0 0
        %4362 = vmatpush2.bf16.msra.mxu0 %v4293
        %4363 = vmatprep.subr.bf16.mxu0 0
        %4364 = vmatpush2.bf16.msra.mxu0 %v4292
        %4365 = vmatprep.subr.bf16.mxu0 0
        %4366 = vmatpush2.bf16.msra.mxu0 %v4291
        %4367 = vmatprep.subr.bf16.mxu0 0
        %4368 = vmatpush2.bf16.msra.mxu0 %v4290
        %4369 = vmatprep.subr.bf16.mxu0 0
        %4370 = vmatpush2.bf16.msra.mxu0 %v4289
        %4371 = vmatprep.subr.bf16.mxu0 0
        %4372 = vmatpush2.bf16.msra.mxu0 %v4288
        %4373 = vmatprep.subr.bf16.mxu0 0
        %4374 = vmatpush2.bf16.msra.mxu0 %v4287
        %4375 = vmatprep.mubr.bf16.mxu0 %v4083
        %4376 = vmatmul.mubr.bf16.gmra.mxu0 %v4082
        %v4377 = vpop.f32.mrf.mxu0
        %v4378 = vadd.f32 %v4150, %v4377
        %v4379 = vpop.f32.mrf.mxu0
        %v4380 = vpop.f32.mrf.mxu0
        %v4381 = vpop.f32.mrf.mxu0
        %4382 = vdwg.mxu0
        %4383 = vmatprep.subr.bf16.mxu0 0
        %4384 = vmatpush1.bf16.msra.mxu0 %v4302
        %4385 = vmatprep.subr.bf16.mxu0 0
        %4386 = vmatpush1.bf16.msra.mxu0 %v4301
        %4387 = vmatprep.subr.bf16.mxu0 0
        %4388 = vmatpush1.bf16.msra.mxu0 %v4300
        %4389 = vmatprep.subr.bf16.mxu0 0
        %4390 = vmatpush1.bf16.msra.mxu0 %v4299
        %4391 = vmatprep.subr.bf16.mxu0 0
        %4392 = vmatpush1.bf16.msra.mxu0 %v4298
        %4393 = vmatprep.subr.bf16.mxu0 0
        %4394 = vmatpush1.bf16.msra.mxu0 %v4297
        %4395 = vmatprep.subr.bf16.mxu0 0
        %4396 = vmatpush1.bf16.msra.mxu0 %v4296
        %4397 = vmatprep.subr.bf16.mxu0 0
        %4398 = vmatpush1.bf16.msra.mxu0 %v4295
        %4399 = vmatprep.subr.bf16.mxu0 0
        %4400 = vmatpush2.bf16.msra.mxu0 %v4310
        %4401 = vmatprep.subr.bf16.mxu0 0
        %4402 = vmatpush2.bf16.msra.mxu0 %v4309
        %4403 = vmatprep.subr.bf16.mxu0 0
        %4404 = vmatpush2.bf16.msra.mxu0 %v4308
        %4405 = vmatprep.subr.bf16.mxu0 0
        %4406 = vmatpush2.bf16.msra.mxu0 %v4307
        %4407 = vmatprep.subr.bf16.mxu0 0
        %4408 = vmatpush2.bf16.msra.mxu0 %v4306
        %4409 = vmatprep.subr.bf16.mxu0 0
        %4410 = vmatpush2.bf16.msra.mxu0 %v4305
        %4411 = vmatprep.subr.bf16.mxu0 0
        %4412 = vmatpush2.bf16.msra.mxu0 %v4304
        %4413 = vmatprep.subr.bf16.mxu0 0
        %4414 = vmatpush2.bf16.msra.mxu0 %v4303
        %4415 = vmatprep.mubr.bf16.mxu0 %v4085
        %4416 = vmatmul.mubr.bf16.gmra.mxu0 %v4084
        %v4417 = vpop.f32.mrf.mxu0
        %v4418 = vadd.f32 %v4378, %v4417
        %v4419 = vpop.f32.mrf.mxu0
        %v4420 = vpop.f32.mrf.mxu0
        %v4421 = vpop.f32.mrf.mxu0
        %4422 = vdwg.mxu0
        %vm4423 = vcmask 40960
        %4424 = vst.msk [vmem:[%s459] sm:$0x1] %vm4423, %v4418
        %s4425 = sand.u32 %s335, 1
        %s4426 = scalar_lea.sflag [#allocation3], %s4425
        %s4427 = sand.u32 %s335, 1
        %s4428 = scalar_lea.vmem [#allocation2], %s4427
        // Predicated region
        $region77: #{cnn_forward.1} parent=75 // pred_check
          %p4429 = pneg %p345
        $region78: #{cnn_forward.1} parent=75 // pred_check_branch
          %4431 = sbr.rel (%p4429) target = $region80
        $region79: #{cnn_forward.1} parent=75 // pred_region
          %s4433 = ssub.s32 16, 16
          %4434 = vsyncadd %s4426, %s4433
          %s4435 = smul.addr %s28, 16
          %s4436 = scalar_lea.hbm %s14, %s4435
          %s4438 = sshll.u32 %s4428, 4
          %s4439 = int_to_ptr.vmem [resolvable:$true] %s4438
          %4441 = dma.vmem_to_hbm [thread:$0]  %s4439, 16, %s4436, %s4426
        $region80: #{cnn_forward.1} parent=75 // pred_fallthru
          _
      $region76: #{cnn_forward.1} parent=5 // pred_fallthru
        _
      %p4442 = scmp.le.s32.totalorder 2, %s23
      // Predicated region
      $region81: #{cnn_forward.1} parent=5 // pred_check
        %p4443 = pneg %p4442
      $region82: #{cnn_forward.1} parent=5 // pred_check_branch
        %4445 = sbr.rel (%p4443) target = $region84
      $region83: #{cnn_forward.1} parent=5 // pred_region
        %s4446 = ssub.s32 %s23, 2
        // Predicated region
        $region85: #{cnn_forward.1} parent=83 // pred_check
          %p4447 = pneg %p351
        $region86: #{cnn_forward.1} parent=83 // pred_check_branch
          %4449 = sbr.rel (%p4447) target = $region88
        $region87: #{cnn_forward.1} parent=83 // pred_region
          %s4450 = sand.u32 %s336, 1
          %s4451 = scalar_lea.sflag [#allocation3], %s4450
          %s4452 = sand.u32 %s336, 1
          %s4453 = scalar_lea.vmem [#allocation2], %s4452
          %4454 = dma.done %s4451, 16
        $region88: #{cnn_forward.1} parent=83 // pred_fallthru
          _
      $region84: #{cnn_forward.1} parent=5 // pred_fallthru
        _
    $region6: #{cnn_forward.1} parent=1 // loop_footer
      %s27 = sadd.s32 1, %s23
    $region7: #{cnn_forward.1} parent=1 // loop_footer_branch
      %22 = sbr.rel target = $region3
    $region8: #{cnn_forward.1} parent=1 // loop_exit
      _
    %4455 = vsyncpa [#allocation3], 1
    %s4456 = scalar_lea.sflag [#allocation3], 1
    %4457 = vsyncpa %s4456, 1

</llo_original>
